<compile_context>
chip_gen: v6e
topology: v6e:2x2x1
jax: 0.10.0
libtpu: 0.0.40
codegen_flags: <defaults>
</compile_context>

<pallas_src>
import functools
import math

import jax
import jax.numpy as jnp
import numpy as np
from jax.experimental import pallas as pl
from jax.experimental.pallas import tpu as pltpu

# ------------------------- configuration (small) ---------------------------
B = 2
IN_CHANNELS = 1
T, H, W = 4, 16, 16
FEATURES = (8, 16)
SPATIAL_STRIDES = (2, 2)
SPATIAL_KERNEL = 3
EXPANSION_RATIO = 3
SE_REDUCE_RATIO = 4   # keeps rd_channels > 0 at these small widths


def _batch_fold_factor():
    """Batch elements folded into the matmul M dim of one grid step.

    2-TC chips (v4 / v5p / v7x): keep grid=(B,) "parallel" so each TensorCore
    gets one batch element.  Single-TC chips (v5e / v6e): fold the batch into
    rows (grid=(1,)) to double MXU fill and drop one pipeline step.
    """
    try:
        kind = jax.devices()[0].device_kind.lower()
    except Exception:
        return 1
    two_tc = ('v4' in kind) or ('v5p' in kind) or ('v7' in kind)
    return 1 if two_tc else B


# ----------------------------- Pallas kernel --------------------------------
def _block_compute(x, refs, m):
    """One InvertedResidual3d block (plus stem for block 0) on 2-D slabs."""
    f32 = jnp.float32
    if m['has_stem']:
        (mstem_ref, pe_ref, wpw_ref, s_ref, mcolv_ref, gmean_ref,
         sew_ref, vec_ref, wpwl_ref, msc_ref) = refs
    else:
        (pe_ref, wpw_ref, s_ref, mcolv_ref, gmean_ref,
         sew_ref, vec_ref, wpwl_ref, msc_ref) = refs

    G, GR, R_out, k = m['G'], m['GR'], m['R_out'], m['k']
    wm, wom, mid, rd_p = m['W_mid'], m['Wo_mid'], m['mid'], m['rd_p']
    out_pad = m['out_pad']

    # stem (block 0 only): folded 1x1x1 conv * BN scale (BN bias folded in PE)
    if m['has_stem']:
        x = jnp.dot(x, mstem_ref[...], preferred_element_type=f32)
    hpe = x + pe_ref[...]                                     # (G*R_in, W*in_c)

    # conv_pw (1x1x1) + folded BN + ReLU   (block-diagonal weight over W)
    y1 = jnp.dot(hpe, wpw_ref[...], preferred_element_type=f32)
    y1 = jnp.maximum(y1 * vec_ref[0:1, 0:wm] + vec_ref[1:2, 0:wm], 0.0)

    # depthwise (1,k,k)/(1,s,s) conv: ONE stacked row-select matmul followed
    # by ONE K-stacked column-mix matmul (the k tap slabs lane-concatenated).
    rows = jnp.dot(s_ref[0:k * GR, :], y1, preferred_element_type=f32)
    rows_l = jnp.concatenate([rows[i * GR:(i + 1) * GR, :] for i in range(k)],
                             axis=1)                          # (GR, k*W*mid)
    acc = jnp.dot(rows_l, mcolv_ref[...], preferred_element_type=f32)
    y2 = jnp.maximum(acc * vec_ref[2:3, 0:wom] + vec_ref[3:4, 0:wom], 0.0)

    # SqueezeExcite3d: per-sample spatial mean -> 2 tiny FCs -> sigmoid gate.
    # The expand FC weight/bias are pre-tiled over Wo, so the gate is already
    # lane-aligned with y2 (no gate re-tile matmul on the critical path).
    sums = [jnp.sum(y2[g * R_out:(g + 1) * R_out, :], axis=0, keepdims=True)
            for g in range(G)]
    csum = sums[0] if G == 1 else jnp.concatenate(sums, axis=0)   # (G, Wo*mid)
    mean = jnp.dot(csum, gmean_ref[...], preferred_element_type=f32)  # (G, mid)
    se = jnp.dot(mean, sew_ref[0:mid, 0:rd_p], preferred_element_type=f32)
    se = jnp.maximum(se + vec_ref[7:8, 0:rd_p], 0.0)              # (G, rd_p)
    gate = jax.nn.sigmoid(
        jnp.dot(se, sew_ref[mid:mid + rd_p, 0:wom],
                preferred_element_type=f32) + vec_ref[8:9, 0:wom])  # (G, Wo*mid)
    if G == 1:
        zin = y2 * gate
    else:
        zin = jnp.concatenate(
            [y2[g * R_out:(g + 1) * R_out, :] * gate[g:g + 1, :]
             for g in range(G)], axis=0)

    # conv_pwl (1x1x1) + folded BN (no act)
    z = jnp.dot(zin, wpwl_ref[...], preferred_element_type=f32)
    z = z * vec_ref[4:5, 0:out_pad] + vec_ref[5:6, 0:out_pad]

    # shortcut: nearest spatial downsample (row select) + channel tile + bn_sc
    sc_rows = jnp.dot(s_ref[k * GR:(k + 1) * GR, :], hpe,
                      preferred_element_type=f32)
    sc = (jnp.dot(sc_rows, msc_ref[...], preferred_element_type=f32)
          + vec_ref[6:7, 0:out_pad])

    # TODO(synk): DropPath is identity here (eval mode / drop_prob=0).
    return z + sc


def _core_kernel(*refs, metas):
    """Whole DepthwiseCore forward for one grid step (G batch rows folded)."""
    x_ref, o_ref = refs[0], refs[-1]
    consts = refs[1:-1]
    h = x_ref[...]
    pos = 0
    for m in metas:
        n = 10 if m['has_stem'] else 9
        h = _block_compute(h, consts[pos:pos + n], m)
        pos += n
    o_ref[...] = h.astype(o_ref.dtype)


def run_core(x2d, consts, meta):
    """Single fused pallas_call over the whole network."""
    grid = meta['grid']
    in_specs = [pl.BlockSpec((meta['rows_in'], meta['lx']), lambda b: (b, 0))]
    for a in consts:
        # Constant operands: full-shape block, same index every grid step so
        # they are fetched once.  Constant VMEM is ~3 MiB total, so default
        # double-buffering is left alone (pl.Buffered(1) not needed here).
        in_specs.append(pl.BlockSpec(a.shape, lambda b: (0, 0)))
    out_spec = pl.BlockSpec((meta['rows_out'], meta['out_pad']),
                            lambda b: (b, 0))

    return pl.pallas_call(
        functools.partial(_core_kernel, metas=meta['blocks']),
        out_shape=jax.ShapeDtypeStruct(
            (grid * meta['rows_out'], meta['out_pad']), jnp.float32),
        grid_spec=pltpu.PrefetchScalarGridSpec(
            num_scalar_prefetch=0, grid=(grid,),
            in_specs=in_specs, out_specs=out_spec),
        compiler_params=pltpu.CompilerParams(
            dimension_semantics=("parallel",)),
    )(x2d, *consts)


# ------------------------ setup / glue (plain JAX) --------------------------
def positional_encoding(C, t, h, w):
    """PositionalEncoding3d buffer: (C, t, h, w), matching the torch code."""
    ch = math.ceil(C / 6) * 2
    if ch % 2:
        ch += 1
    inv_freq = 1.0 / (10000.0 ** (jnp.arange(0, ch, 2, dtype=jnp.float32) / ch))

    def get_emb(pos):
        sin_inp = inv_freq[:, None] * pos[None, :]
        return jnp.concatenate([jnp.sin(sin_inp), jnp.cos(sin_inp)], axis=0)

    emb_x = get_emb(jnp.arange(t, dtype=jnp.float32))[:, :, None, None]
    emb_y = get_emb(jnp.arange(h, dtype=jnp.float32))[:, None, :, None]
    emb_z = get_emb(jnp.arange(w, dtype=jnp.float32))[:, None, None, :]
    emb = jnp.zeros((ch * 3, t, h, w), jnp.float32)
    emb = emb.at[:ch].set(jnp.broadcast_to(emb_x, (ch, t, h, w)))
    emb = emb.at[ch:2 * ch].set(jnp.broadcast_to(emb_y, (ch, t, h, w)))
    emb = emb.at[2 * ch:].set(jnp.broadcast_to(emb_z, (ch, t, h, w)))
    return emb[:C]


def build_params(key):
    features = FEATURES
    nb = len(features)

    def bn(k, c):
        k1, k2 = jax.random.split(k)
        return (1.0 + 0.1 * jax.random.normal(k1, (c,), jnp.float32),
                0.1 * jax.random.normal(k2, (c,), jnp.float32))

    keys = list(jax.random.split(key, 1 + nb))
    params = {}
    f0 = features[0]
    ks = list(jax.random.split(keys[0], 2))
    params['stem_w'] = jax.random.normal(ks[0], (IN_CHANNELS, f0), jnp.float32) / math.sqrt(IN_CHANNELS)
    params['stem_scale'], params['stem_bias'] = bn(ks[1], f0)

    blocks = []
    for i in range(nb):
        in_c = features[i]
        out_c = features[i + 1] if i < nb - 1 else features[nb - 1]
        mid = in_c * EXPANSION_RATIO
        rd = mid // SE_REDUCE_RATIO
        kb = list(jax.random.split(keys[1 + i], 10))
        p = {'out_c': out_c}
        p['pw_w'] = jax.random.normal(kb[0], (in_c, mid), jnp.float32) / math.sqrt(in_c)
        p['bn1_scale'], p['bn1_bias'] = bn(kb[1], mid)
        p['dw_w'] = jax.random.normal(kb[2], (SPATIAL_KERNEL * SPATIAL_KERNEL, mid), jnp.float32) / SPATIAL_KERNEL
        p['bn2_scale'], p['bn2_bias'] = bn(kb[3], mid)
        p['se_wr'] = jax.random.normal(kb[4], (mid, rd), jnp.float32) / math.sqrt(mid)
        p['se_br'] = 0.05 * jax.random.normal(kb[5], (rd,), jnp.float32)
        p['se_we'] = jax.random.normal(kb[6], (rd, mid), jnp.float32) / math.sqrt(rd)
        p['se_be'] = 0.05 * jax.random.normal(kb[7], (mid,), jnp.float32)
        p['pwl_w'] = jax.random.normal(kb[8], (mid, out_c), jnp.float32) / math.sqrt(mid)
        p['bn3_scale'], p['bn3_bias'] = bn(kb[9], out_c)
        p['bnsc_scale'], p['bnsc_bias'] = bn(jax.random.fold_in(keys[1 + i], 99), out_c)
        blocks.append(p)
    params['blocks'] = blocks
    return params


def _nearest_indices(n_in, n_out):
    # torch 'nearest' interpolation: floor(i * in / out)
    return (np.arange(n_out) * n_in) // n_out


def build_plan(params, fold):
    """Precompute the constant operands + static metadata for the fused kernel.

    fold = number of batch elements folded into the M (row) dimension of one
    grid step (B on single-TC chips, 1 on 2-TC chips).
    """
    k = SPATIAL_KERNEL
    pad = k // 2
    G = int(fold)
    assert B % G == 0
    nb = len(params['blocks'])
    cur_H, cur_W = H, W
    eyeG = np.eye(G, dtype=np.float32)

    consts = []
    block_metas = []
    for i, p in enumerate(params['blocks']):
        stride = SPATIAL_STRIDES[i]
        pw_w = np.asarray(p['pw_w'], np.float32)
        dw_w = np.asarray(p['dw_w'], np.float32)
        pwl_w = np.asarray(p['pwl_w'], np.float32)
        in_c, mid = pw_w.shape
        out_c = int(p['out_c'])
        Ho = (cur_H + 2 * pad - k) // stride + 1
        Wo = (cur_W + 2 * pad - k) // stride + 1
        R_in, R_out = T * cur_H, T * Ho
        out_lanes = Wo * out_c
        # Lane-pad only the final block's output so the kernel's store is a
        # full 128-lane vst; earlier blocks must already be lane-dense.
        if i < nb - 1:
            assert out_lanes % 128 == 0
            out_pad = out_lanes
        else:
            out_pad = ((out_lanes + 127) // 128) * 128

        c = {}

        # positional encoding, laid out (T*H, W*C); stem BN bias folded in
        pe = np.asarray(positional_encoding(in_c, T, cur_H, cur_W), np.float32)
        pe_l = pe.transpose(1, 2, 3, 0).reshape(R_in, cur_W * in_c)
        if i == 0:
            stem_eff = (np.asarray(params['stem_w'], np.float32)
                        * np.asarray(params['stem_scale'], np.float32)[None, :])
            c['mstem'] = np.kron(np.eye(cur_W, dtype=np.float32), stem_eff)
            pe_l = pe_l + np.tile(np.asarray(params['stem_bias'], np.float32),
                                  cur_W)[None, :]
        c['pe'] = np.tile(pe_l, (G, 1)).astype(np.float32)

        # conv_pw: block-diagonal (kron) folded weight
        c['wpw'] = np.kron(np.eye(cur_W, dtype=np.float32), pw_w)

        # depthwise row-select matrices (k taps) + nearest-shortcut selector,
        # vertically stacked; kron'd with I_G when the batch is row-folded.
        Sk = np.zeros((k + 1, R_out, R_in), np.float32)
        for kh in range(k):
            for t_ in range(T):
                for ho in range(Ho):
                    r = stride * ho + kh - pad
                    if 0 <= r < cur_H:
                        Sk[kh, t_ * Ho + ho, t_ * cur_H + r] = 1.0
        hi = _nearest_indices(cur_H, Ho)
        for t_ in range(T):
            for ho in range(Ho):
                Sk[k, t_ * Ho + ho, t_ * cur_H + hi[ho]] = 1.0
        c['s'] = np.concatenate([np.kron(eyeG, Sk[kh]) for kh in range(k + 1)],
                                axis=0)

        # depthwise column-mix (per-channel taps), K-stacked over kh.
        # TODO(synk): dense kron encoding grows O((W*mid)^2); slice per-wo or
        # set vmem_limit_bytes before scaling FEATURES/W (v7x VMEM is 64 MiB).
        Mcol = np.zeros((k, cur_W * mid, Wo * mid), np.float32)
        for kh in range(k):
            for wo in range(Wo):
                for kw in range(k):
                    w_in = stride * wo + kw - pad
                    if 0 <= w_in < cur_W:
                        Mcol[kh, w_in * mid:(w_in + 1) * mid,
                             wo * mid:(wo + 1) * mid] += np.diag(dw_w[kh * k + kw])
        c['mcolv'] = Mcol.reshape(k * cur_W * mid, Wo * mid)

        # SE: group-mean matmul; reduce/expand FC weights packed in one slab;
        # the expand weight is pre-tiled over Wo (gate leaves MXU lane-aligned).
        inv_n = 1.0 / float(T * Ho * Wo)
        eye_mid = np.eye(mid, dtype=np.float32)
        c['gmean'] = (np.tile(eye_mid, (Wo, 1)) * inv_n).astype(np.float32)
        se_wr = np.asarray(p['se_wr'], np.float32)
        se_we = np.asarray(p['se_we'], np.float32)
        rd = se_wr.shape[1]
        rd_p = ((rd + 7) // 8) * 8
        sew = np.zeros((mid + rd_p, max(rd_p, Wo * mid)), np.float32)
        sew[0:mid, 0:rd] = se_wr
        sew[mid:mid + rd, 0:Wo * mid] = np.tile(se_we, (1, Wo))
        c['sew'] = sew

        # conv_pwl + shortcut column maps (lane-padded to out_pad)
        wpwl = np.kron(np.eye(Wo, dtype=np.float32), pwl_w)
        wi = _nearest_indices(cur_W, Wo)
        bnsc_scale = np.asarray(p['bnsc_scale'], np.float32)
        blk_sc = np.zeros((in_c, out_c), np.float32)
        blk_sc[np.arange(out_c) % in_c, np.arange(out_c)] = bnsc_scale
        msc = np.zeros((cur_W * in_c, out_lanes), np.float32)
        for wo in range(Wo):
            msc[wi[wo] * in_c:(wi[wo] + 1) * in_c,
                wo * out_c:(wo + 1) * out_c] += blk_sc
        c['wpwl'] = np.pad(wpwl, ((0, 0), (0, out_pad - out_lanes)))
        c['msc'] = np.pad(msc, ((0, 0), (0, out_pad - out_lanes)))

        # all tiny per-channel vectors packed into one slab (one DMA)
        vw = max(cur_W * mid, Wo * mid, out_pad, mid, rd_p)
        vec = np.zeros((9, vw), np.float32)
        vec[0, :cur_W * mid] = np.tile(np.asarray(p['bn1_scale'], np.float32), cur_W)
        vec[1, :cur_W * mid] = np.tile(np.asarray(p['bn1_bias'], np.float32), cur_W)
        vec[2, :Wo * mid] = np.tile(np.asarray(p['bn2_scale'], np.float32), Wo)
        vec[3, :Wo * mid] = np.tile(np.asarray(p['bn2_bias'], np.float32), Wo)
        vec[4, :out_lanes] = np.tile(np.asarray(p['bn3_scale'], np.float32), Wo)
        vec[5, :out_lanes] = np.tile(np.asarray(p['bn3_bias'], np.float32), Wo)
        vec[6, :out_lanes] = np.tile(np.asarray(p['bnsc_bias'], np.float32), Wo)
        vec[7, :rd] = np.asarray(p['se_br'], np.float32)
        vec[8, :Wo * mid] = np.tile(np.asarray(p['se_be'], np.float32), Wo)
        c['vec'] = vec

        names = (['mstem'] if i == 0 else []) + [
            'pe', 'wpw', 's', 'mcolv', 'gmean', 'sew', 'vec', 'wpwl', 'msc']
        consts += [jnp.asarray(c[n], jnp.float32) for n in names]

        block_metas.append(dict(
            has_stem=(i == 0), G=G, k=k, R_in=R_in, R_out=R_out, GR=G * R_out,
            W_mid=cur_W * mid, Wo_mid=Wo * mid, mid=mid, rd_p=rd_p,
            out_pad=out_pad))
        cur_H, cur_W = Ho, Wo

    meta = dict(
        G=G, grid=B // G,
        rows_in=G * block_metas[0]['R_in'], lx=W * IN_CHANNELS,
        rows_out=G * block_metas[-1]['R_out'],
        out_pad=block_metas[-1]['out_pad'],
        Hf=cur_H, Wf=cur_W, Cf=int(params['blocks'][-1]['out_c']),
        blocks=tuple(block_metas))
    return tuple(consts), meta


# ----------------------------- forward (Pallas) -----------------------------
def depthwise_core_forward(x_ncdhw, consts, meta):
    B_, Cin, T_, H_, W_ = x_ncdhw.shape
    # NCDHW -> lane-dense 2-D slab (B*T*H, W*C)
    x = jnp.transpose(x_ncdhw, (0, 2, 3, 4, 1)).astype(jnp.float32)
    x = x.reshape(B_ * T_ * H_, W_ * Cin)
    y = run_core(x, consts, meta)                 # (B*T*Hf, out_pad)
    Hf, Wf, Cf = meta['Hf'], meta['Wf'], meta['Cf']
    y = y[:, :Wf * Cf].reshape(B_, T_, Hf, Wf, Cf)
    return jnp.transpose(y, (0, 4, 1, 2, 3))      # back to NCDHW


# --------------------------- pure-JAX reference -----------------------------
def reference_forward(x_ncdhw, params):
    hp = jax.lax.Precision.HIGHEST
    x = jnp.transpose(x_ncdhw, (0, 2, 3, 4, 1)).astype(jnp.float32)

    def pw(v, w, scale, bias, relu, gate=None):
        if gate is not None:
            v = v * gate
        y = jnp.einsum('bthwc,cd->bthwd', v, w, precision=hp) * scale + bias
        return jnp.maximum(y, 0.0) if relu else y

    x = pw(x, params['stem_w'], params['stem_scale'], params['stem_bias'], False)

    for i, p in enumerate(params['blocks']):
        stride = SPATIAL_STRIDES[i]
        B_, T_, H_, W_, C_ = x.shape
        out_c = p['out_c']
        mid = p['pw_w'].shape[1]
        pe = positional_encoding(C_, T_, H_, W_)
        x = x + jnp.transpose(pe, (1, 2, 3, 0))[None]
        shortcut = x
        y = pw(x, p['pw_w'], p['bn1_scale'], p['bn1_bias'], True)
        yi = y.reshape(B_ * T_, H_, W_, mid)
        wk = p['dw_w'].reshape(SPATIAL_KERNEL, SPATIAL_KERNEL, 1, mid)
        pad = SPATIAL_KERNEL // 2
        yo = jax.lax.conv_general_dilated(
            yi, wk, window_strides=(stride, stride),
            padding=[(pad, pad), (pad, pad)],
            dimension_numbers=('NHWC', 'HWIO', 'NHWC'),
            feature_group_count=mid, precision=hp)
        yo = jnp.maximum(yo * p['bn2_scale'] + p['bn2_bias'], 0.0)
        Ho, Wo = yo.shape[1], yo.shape[2]
        y = yo.reshape(B_, T_, Ho, Wo, mid)
        m = y.mean(axis=(1, 2, 3))
        s = jnp.maximum(jnp.dot(m, p['se_wr'], precision=hp) + p['se_br'], 0.0)
        g = jax.nn.sigmoid(jnp.dot(s, p['se_we'], precision=hp) + p['se_be'])
        z = pw(y, p['pwl_w'], p['bn3_scale'], p['bn3_bias'], False,
               gate=g[:, None, None, None, :])
        sc = shortcut
        if stride > 1:
            Hs = math.ceil(H_ / stride)
            Ws = math.ceil(W_ / stride)
            hi = jnp.arange(Hs) * H_ // Hs
            wi = jnp.arange(Ws) * W_ // Ws
            sc = jnp.take(sc, hi, axis=2)
            sc = jnp.take(sc, wi, axis=3)
        if sc.shape[-1] != out_c:
            reps = math.ceil(out_c / sc.shape[-1])
            sc = jnp.tile(sc, (1, 1, 1, 1, reps))[..., :out_c]
        sc = sc * p['bnsc_scale'] + p['bnsc_bias']
        x = z + sc
    return jnp.transpose(x, (0, 4, 1, 2, 3))


# ---------------------------------- main ------------------------------------
if __name__ == "__main__":
    key = jax.random.PRNGKey(0)
    kx, kp = jax.random.split(key)
    x = jax.random.normal(kx, (B, IN_CHANNELS, T, H, W), jnp.float32)
    params = build_params(kp)

    fold = _batch_fold_factor()              # B on 1-TC chips, 1 on 2-TC chips
    consts, meta = build_plan(params, fold)  # one-time constant precompute

    fwd = jax.jit(functools.partial(depthwise_core_forward, meta=meta))
    out = jax.block_until_ready(fwd(x, consts))

    ref = jax.block_until_ready(reference_forward(x, params))

    assert out.shape == ref.shape == (B, FEATURES[-1], T, H // 4, W // 4)
    np.testing.assert_allclose(np.asarray(out), np.asarray(ref),
                               rtol=2e-3, atol=2e-3)
    print("KERNEL_OK")
</pallas_src>

<mosaic_0001>
module attributes {stable_mosaic.version = 11 : i64} {
  func.func @_core_kernel(%arg0: i32, %arg1: memref<128x16xf32, #tpu.memory_space<vmem>>, %arg2: memref<16x128xf32, #tpu.memory_space<vmem>>, %arg3: memref<128x128xf32, #tpu.memory_space<vmem>>, %arg4: memref<128x384xf32, #tpu.memory_space<vmem>>, %arg5: memref<256x128xf32, #tpu.memory_space<vmem>>, %arg6: memref<1152x192xf32, #tpu.memory_space<vmem>>, %arg7: memref<192x24xf32, #tpu.memory_space<vmem>>, %arg8: memref<32x192xf32, #tpu.memory_space<vmem>>, %arg9: memref<9x384xf32, #tpu.memory_space<vmem>>, %arg10: memref<192x128xf32, #tpu.memory_space<vmem>>, %arg11: memref<128x128xf32, #tpu.memory_space<vmem>>, %arg12: memref<64x128xf32, #tpu.memory_space<vmem>>, %arg13: memref<128x384xf32, #tpu.memory_space<vmem>>, %arg14: memref<128x64xf32, #tpu.memory_space<vmem>>, %arg15: memref<1152x192xf32, #tpu.memory_space<vmem>>, %arg16: memref<192x48xf32, #tpu.memory_space<vmem>>, %arg17: memref<64x192xf32, #tpu.memory_space<vmem>>, %arg18: memref<9x384xf32, #tpu.memory_space<vmem>>, %arg19: memref<192x128xf32, #tpu.memory_space<vmem>>, %arg20: memref<128x128xf32, #tpu.memory_space<vmem>>, %arg21: memref<32x128xf32, #tpu.memory_space<vmem>>) attributes {dimension_semantics = [#tpu.dimension_semantics<parallel>], iteration_bounds = array<i64: 1>, scalar_prefetch = 0 : i64, scratch_operands = 0 : i64, tpu.core_type = #tpu.core_type<tc>, window_params = [{transform_indices = @transform_0, window_bounds = array<i64: 128, 16>}, {pipeline_mode = #tpu.pipeline_mode<synchronous>, transform_indices = @transform_1, window_bounds = array<i64: 16, 128>}, {pipeline_mode = #tpu.pipeline_mode<synchronous>, transform_indices = @transform_2, window_bounds = array<i64: 128, 128>}, {pipeline_mode = #tpu.pipeline_mode<synchronous>, transform_indices = @transform_3, window_bounds = array<i64: 128, 384>}, {pipeline_mode = #tpu.pipeline_mode<synchronous>, transform_indices = @transform_4, window_bounds = array<i64: 256, 128>}, {pipeline_mode = #tpu.pipeline_mode<synchronous>, transform_indices = @transform_5, window_bounds = array<i64: 1152, 192>}, {pipeline_mode = #tpu.pipeline_mode<synchronous>, transform_indices = @transform_6, window_bounds = array<i64: 192, 24>}, {pipeline_mode = #tpu.pipeline_mode<synchronous>, transform_indices = @transform_7, window_bounds = array<i64: 32, 192>}, {pipeline_mode = #tpu.pipeline_mode<synchronous>, transform_indices = @transform_8, window_bounds = array<i64: 9, 384>}, {pipeline_mode = #tpu.pipeline_mode<synchronous>, transform_indices = @transform_9, window_bounds = array<i64: 192, 128>}, {pipeline_mode = #tpu.pipeline_mode<synchronous>, transform_indices = @transform_10, window_bounds = array<i64: 128, 128>}, {pipeline_mode = #tpu.pipeline_mode<synchronous>, transform_indices = @transform_11, window_bounds = array<i64: 64, 128>}, {pipeline_mode = #tpu.pipeline_mode<synchronous>, transform_indices = @transform_12, window_bounds = array<i64: 128, 384>}, {pipeline_mode = #tpu.pipeline_mode<synchronous>, transform_indices = @transform_13, window_bounds = array<i64: 128, 64>}, {pipeline_mode = #tpu.pipeline_mode<synchronous>, transform_indices = @transform_14, window_bounds = array<i64: 1152, 192>}, {pipeline_mode = #tpu.pipeline_mode<synchronous>, transform_indices = @transform_15, window_bounds = array<i64: 192, 48>}, {pipeline_mode = #tpu.pipeline_mode<synchronous>, transform_indices = @transform_16, window_bounds = array<i64: 64, 192>}, {pipeline_mode = #tpu.pipeline_mode<synchronous>, transform_indices = @transform_17, window_bounds = array<i64: 9, 384>}, {pipeline_mode = #tpu.pipeline_mode<synchronous>, transform_indices = @transform_18, window_bounds = array<i64: 192, 128>}, {pipeline_mode = #tpu.pipeline_mode<synchronous>, transform_indices = @transform_19, window_bounds = array<i64: 128, 128>}, {transform_indices = @transform_20, window_bounds = array<i64: 32, 128>}]} {
    %c0 = arith.constant 0 : index
    %c0_0 = arith.constant 0 : index
    %0 = vector.load %arg1[%c0, %c0_0] : memref<128x16xf32, #tpu.memory_space<vmem>>, vector<128x16xf32>
    %c0_1 = arith.constant 0 : index
    %c0_2 = arith.constant 0 : index
    %1 = vector.load %arg2[%c0_1, %c0_2] : memref<16x128xf32, #tpu.memory_space<vmem>>, vector<16x128xf32>
    %cst = arith.constant dense<0.000000e+00> : vector<128x128xf32>
    %2 = tpu.matmul %0, %1, %cst {dimension_numbers = #tpu.dot_dimension_numbers<[1], [0], [0], [1], [0, 0, 1, 1], [], []>} : vector<128x16xf32>, vector<16x128xf32>, vector<128x128xf32> -> vector<128x128xf32>
    %c0_3 = arith.constant 0 : index
    %c0_4 = arith.constant 0 : index
    %3 = vector.load %arg3[%c0_3, %c0_4] : memref<128x128xf32, #tpu.memory_space<vmem>>, vector<128x128xf32>
    %4 = arith.addf %2, %3 : vector<128x128xf32>
    %c0_5 = arith.constant 0 : index
    %c0_6 = arith.constant 0 : index
    %5 = vector.load %arg4[%c0_5, %c0_6] : memref<128x384xf32, #tpu.memory_space<vmem>>, vector<128x384xf32>
    %cst_7 = arith.constant dense<0.000000e+00> : vector<128x384xf32>
    %6 = tpu.matmul %4, %5, %cst_7 {dimension_numbers = #tpu.dot_dimension_numbers<[1], [0], [0], [1], [0, 0, 1, 1], [], []>} : vector<128x128xf32>, vector<128x384xf32>, vector<128x384xf32> -> vector<128x384xf32>
    %c0_8 = arith.constant 0 : index
    %c0_9 = arith.constant 0 : index
    %7 = vector.load %arg9[%c0_8, %c0_9] : memref<9x384xf32, #tpu.memory_space<vmem>>, vector<1x384xf32>
    %8 = vector.broadcast %7 : vector<1x384xf32> to vector<128x384xf32>
    %9 = arith.mulf %6, %8 : vector<128x384xf32>
    %c1 = arith.constant 1 : index
    %c0_10 = arith.constant 0 : index
    %10 = vector.load %arg9[%c1, %c0_10] : memref<9x384xf32, #tpu.memory_space<vmem>>, vector<1x384xf32>
    %11 = vector.broadcast %10 : vector<1x384xf32> to vector<128x384xf32>
    %12 = arith.addf %9, %11 : vector<128x384xf32>
    %cst_11 = arith.constant 0.000000e+00 : f32
    %13 = vector.broadcast %cst_11 : f32 to vector<128x384xf32>
    %14 = arith.maximumf %12, %13 : vector<128x384xf32>
    %c0_12 = arith.constant 0 : index
    %c0_13 = arith.constant 0 : index
    %15 = vector.load %arg5[%c0_12, %c0_13] : memref<256x128xf32, #tpu.memory_space<vmem>>, vector<192x128xf32>
    %cst_14 = arith.constant dense<0.000000e+00> : vector<192x384xf32>
    %16 = tpu.matmul %15, %14, %cst_14 {dimension_numbers = #tpu.dot_dimension_numbers<[1], [0], [0], [1], [0, 0, 1, 1], [], []>} : vector<192x128xf32>, vector<128x384xf32>, vector<192x384xf32> -> vector<192x384xf32>
    %17 = vector.extract_strided_slice %16 {offsets = [0, 0], sizes = [64, 384], strides = [1, 1]} : vector<192x384xf32> to vector<64x384xf32>
    %18 = vector.extract_strided_slice %16 {offsets = [64, 0], sizes = [64, 384], strides = [1, 1]} : vector<192x384xf32> to vector<64x384xf32>
    %19 = vector.extract_strided_slice %16 {offsets = [128, 0], sizes = [64, 384], strides = [1, 1]} : vector<192x384xf32> to vector<64x384xf32>
    %20 = tpu.concatenate %17, %18, %19 in 1 : vector<64x384xf32>, vector<64x384xf32>, vector<64x384xf32> -> vector<64x1152xf32>
    %c0_15 = arith.constant 0 : index
    %c0_16 = arith.constant 0 : index
    %21 = vector.load %arg6[%c0_15, %c0_16] : memref<1152x192xf32, #tpu.memory_space<vmem>>, vector<1152x192xf32>
    %cst_17 = arith.constant dense<0.000000e+00> : vector<64x192xf32>
    %22 = tpu.matmul %20, %21, %cst_17 {dimension_numbers = #tpu.dot_dimension_numbers<[1], [0], [0], [1], [0, 0, 1, 1], [], []>} : vector<64x1152xf32>, vector<1152x192xf32>, vector<64x192xf32> -> vector<64x192xf32>
    %c2 = arith.constant 2 : index
    %c0_18 = arith.constant 0 : index
    %23 = vector.load %arg9[%c2, %c0_18] : memref<9x384xf32, #tpu.memory_space<vmem>>, vector<1x192xf32>
    %24 = vector.broadcast %23 : vector<1x192xf32> to vector<64x192xf32>
    %25 = arith.mulf %22, %24 : vector<64x192xf32>
    %c3 = arith.constant 3 : index
    %c0_19 = arith.constant 0 : index
    %26 = vector.load %arg9[%c3, %c0_19] : memref<9x384xf32, #tpu.memory_space<vmem>>, vector<1x192xf32>
    %27 = vector.broadcast %26 : vector<1x192xf32> to vector<64x192xf32>
    %28 = arith.addf %25, %27 : vector<64x192xf32>
    %cst_20 = arith.constant 0.000000e+00 : f32
    %29 = vector.broadcast %cst_20 : f32 to vector<64x192xf32>
    %30 = arith.maximumf %28, %29 : vector<64x192xf32>
    %31 = vector.extract_strided_slice %30 {offsets = [0, 0], sizes = [32, 192], strides = [1, 1]} : vector<64x192xf32> to vector<32x192xf32>
    %cst_21 = arith.constant dense<0.000000e+00> : vector<192xf32>
    %32 = vector.multi_reduction <add>, %31, %cst_21 [0] : vector<32x192xf32> to vector<192xf32>
    %33 = vector.shape_cast %32 : vector<192xf32> to vector<1x192xf32>
    %34 = vector.extract_strided_slice %30 {offsets = [32, 0], sizes = [32, 192], strides = [1, 1]} : vector<64x192xf32> to vector<32x192xf32>
    %cst_22 = arith.constant dense<0.000000e+00> : vector<192xf32>
    %35 = vector.multi_reduction <add>, %34, %cst_22 [0] : vector<32x192xf32> to vector<192xf32>
    %36 = vector.shape_cast %35 : vector<192xf32> to vector<1x192xf32>
    %37 = tpu.concatenate %33, %36 in 0 : vector<1x192xf32>, vector<1x192xf32> -> vector<2x192xf32>
    %c0_23 = arith.constant 0 : index
    %c0_24 = arith.constant 0 : index
    %38 = vector.load %arg7[%c0_23, %c0_24] : memref<192x24xf32, #tpu.memory_space<vmem>>, vector<192x24xf32>
    %cst_25 = arith.constant dense<0.000000e+00> : vector<2x24xf32>
    %39 = tpu.matmul %37, %38, %cst_25 {dimension_numbers = #tpu.dot_dimension_numbers<[1], [0], [0], [1], [0, 0, 1, 1], [], []>} : vector<2x192xf32>, vector<192x24xf32>, vector<2x24xf32> -> vector<2x24xf32>
    %c0_26 = arith.constant 0 : index
    %c0_27 = arith.constant 0 : index
    %40 = vector.load %arg8[%c0_26, %c0_27] : memref<32x192xf32, #tpu.memory_space<vmem>>, vector<24x8xf32>
    %cst_28 = arith.constant dense<0.000000e+00> : vector<2x8xf32>
    %41 = tpu.matmul %39, %40, %cst_28 {dimension_numbers = #tpu.dot_dimension_numbers<[1], [0], [0], [1], [0, 0, 1, 1], [], []>} : vector<2x24xf32>, vector<24x8xf32>, vector<2x8xf32> -> vector<2x8xf32>
    %c7 = arith.constant 7 : index
    %c0_29 = arith.constant 0 : index
    %42 = vector.load %arg9[%c7, %c0_29] : memref<9x384xf32, #tpu.memory_space<vmem>>, vector<1x8xf32>
    %43 = vector.broadcast %42 : vector<1x8xf32> to vector<2x8xf32>
    %44 = arith.addf %41, %43 : vector<2x8xf32>
    %cst_30 = arith.constant 0.000000e+00 : f32
    %45 = vector.broadcast %cst_30 : f32 to vector<2x8xf32>
    %46 = arith.maximumf %44, %45 : vector<2x8xf32>
    %c24 = arith.constant 24 : index
    %c0_31 = arith.constant 0 : index
    %47 = vector.load %arg8[%c24, %c0_31] : memref<32x192xf32, #tpu.memory_space<vmem>>, vector<8x192xf32>
    %cst_32 = arith.constant dense<0.000000e+00> : vector<2x192xf32>
    %48 = tpu.matmul %46, %47, %cst_32 {dimension_numbers = #tpu.dot_dimension_numbers<[1], [0], [0], [1], [0, 0, 1, 1], [], []>} : vector<2x8xf32>, vector<8x192xf32>, vector<2x192xf32> -> vector<2x192xf32>
    %c8 = arith.constant 8 : index
    %c0_33 = arith.constant 0 : index
    %49 = vector.load %arg9[%c8, %c0_33] : memref<9x384xf32, #tpu.memory_space<vmem>>, vector<1x192xf32>
    %50 = vector.broadcast %49 : vector<1x192xf32> to vector<2x192xf32>
    %51 = arith.addf %48, %50 : vector<2x192xf32>
    %52 = arith.negf %51 : vector<2x192xf32>
    %53 = math.exp %52 : vector<2x192xf32>
    %cst_34 = arith.constant 1.000000e+00 : f32
    %54 = vector.broadcast %cst_34 : f32 to vector<2x192xf32>
    %55 = arith.addf %54, %53 : vector<2x192xf32>
    %56 = arith.divf %54, %55 : vector<2x192xf32>
    %57 = vector.extract_strided_slice %30 {offsets = [0, 0], sizes = [32, 192], strides = [1, 1]} : vector<64x192xf32> to vector<32x192xf32>
    %58 = vector.extract_strided_slice %56 {offsets = [0, 0], sizes = [1, 192], strides = [1, 1]} : vector<2x192xf32> to vector<1x192xf32>
    %59 = vector.broadcast %58 : vector<1x192xf32> to vector<32x192xf32>
    %60 = arith.mulf %57, %59 : vector<32x192xf32>
    %61 = vector.extract_strided_slice %30 {offsets = [32, 0], sizes = [32, 192], strides = [1, 1]} : vector<64x192xf32> to vector<32x192xf32>
    %62 = vector.extract_strided_slice %56 {offsets = [1, 0], sizes = [1, 192], strides = [1, 1]} : vector<2x192xf32> to vector<1x192xf32>
    %63 = vector.broadcast %62 : vector<1x192xf32> to vector<32x192xf32>
    %64 = arith.mulf %61, %63 : vector<32x192xf32>
    %65 = tpu.concatenate %60, %64 in 0 : vector<32x192xf32>, vector<32x192xf32> -> vector<64x192xf32>
    %c0_35 = arith.constant 0 : index
    %c0_36 = arith.constant 0 : index
    %66 = vector.load %arg10[%c0_35, %c0_36] : memref<192x128xf32, #tpu.memory_space<vmem>>, vector<192x128xf32>
    %cst_37 = arith.constant dense<0.000000e+00> : vector<64x128xf32>
    %67 = tpu.matmul %65, %66, %cst_37 {dimension_numbers = #tpu.dot_dimension_numbers<[1], [0], [0], [1], [0, 0, 1, 1], [], []>} : vector<64x192xf32>, vector<192x128xf32>, vector<64x128xf32> -> vector<64x128xf32>
    %c4 = arith.constant 4 : index
    %c0_38 = arith.constant 0 : index
    %68 = vector.load %arg9[%c4, %c0_38] : memref<9x384xf32, #tpu.memory_space<vmem>>, vector<1x128xf32>
    %69 = vector.broadcast %68 : vector<1x128xf32> to vector<64x128xf32>
    %70 = arith.mulf %67, %69 : vector<64x128xf32>
    %c5 = arith.constant 5 : index
    %c0_39 = arith.constant 0 : index
    %71 = vector.load %arg9[%c5, %c0_39] : memref<9x384xf32, #tpu.memory_space<vmem>>, vector<1x128xf32>
    %72 = vector.broadcast %71 : vector<1x128xf32> to vector<64x128xf32>
    %73 = arith.addf %70, %72 : vector<64x128xf32>
    %c192 = arith.constant 192 : index
    %c0_40 = arith.constant 0 : index
    %74 = vector.load %arg5[%c192, %c0_40] : memref<256x128xf32, #tpu.memory_space<vmem>>, vector<64x128xf32>
    %cst_41 = arith.constant dense<0.000000e+00> : vector<64x128xf32>
    %75 = tpu.matmul %74, %4, %cst_41 {dimension_numbers = #tpu.dot_dimension_numbers<[1], [0], [0], [1], [0, 0, 1, 1], [], []>} : vector<64x128xf32>, vector<128x128xf32>, vector<64x128xf32> -> vector<64x128xf32>
    %c0_42 = arith.constant 0 : index
    %c0_43 = arith.constant 0 : index
    %76 = vector.load %arg11[%c0_42, %c0_43] : memref<128x128xf32, #tpu.memory_space<vmem>>, vector<128x128xf32>
    %cst_44 = arith.constant dense<0.000000e+00> : vector<64x128xf32>
    %77 = tpu.matmul %75, %76, %cst_44 {dimension_numbers = #tpu.dot_dimension_numbers<[1], [0], [0], [1], [0, 0, 1, 1], [], []>} : vector<64x128xf32>, vector<128x128xf32>, vector<64x128xf32> -> vector<64x128xf32>
    %c6 = arith.constant 6 : index
    %c0_45 = arith.constant 0 : index
    %78 = vector.load %arg9[%c6, %c0_45] : memref<9x384xf32, #tpu.memory_space<vmem>>, vector<1x128xf32>
    %79 = vector.broadcast %78 : vector<1x128xf32> to vector<64x128xf32>
    %80 = arith.addf %77, %79 : vector<64x128xf32>
    %81 = arith.addf %73, %80 : vector<64x128xf32>
    %c0_46 = arith.constant 0 : index
    %c0_47 = arith.constant 0 : index
    %82 = vector.load %arg12[%c0_46, %c0_47] : memref<64x128xf32, #tpu.memory_space<vmem>>, vector<64x128xf32>
    %83 = arith.addf %81, %82 : vector<64x128xf32>
    %c0_48 = arith.constant 0 : index
    %c0_49 = arith.constant 0 : index
    %84 = vector.load %arg13[%c0_48, %c0_49] : memref<128x384xf32, #tpu.memory_space<vmem>>, vector<128x384xf32>
    %cst_50 = arith.constant dense<0.000000e+00> : vector<64x384xf32>
    %85 = tpu.matmul %83, %84, %cst_50 {dimension_numbers = #tpu.dot_dimension_numbers<[1], [0], [0], [1], [0, 0, 1, 1], [], []>} : vector<64x128xf32>, vector<128x384xf32>, vector<64x384xf32> -> vector<64x384xf32>
    %c0_51 = arith.constant 0 : index
    %c0_52 = arith.constant 0 : index
    %86 = vector.load %arg18[%c0_51, %c0_52] : memref<9x384xf32, #tpu.memory_space<vmem>>, vector<1x384xf32>
    %87 = vector.broadcast %86 : vector<1x384xf32> to vector<64x384xf32>
    %88 = arith.mulf %85, %87 : vector<64x384xf32>
    %c1_53 = arith.constant 1 : index
    %c0_54 = arith.constant 0 : index
    %89 = vector.load %arg18[%c1_53, %c0_54] : memref<9x384xf32, #tpu.memory_space<vmem>>, vector<1x384xf32>
    %90 = vector.broadcast %89 : vector<1x384xf32> to vector<64x384xf32>
    %91 = arith.addf %88, %90 : vector<64x384xf32>
    %cst_55 = arith.constant 0.000000e+00 : f32
    %92 = vector.broadcast %cst_55 : f32 to vector<64x384xf32>
    %93 = arith.maximumf %91, %92 : vector<64x384xf32>
    %c0_56 = arith.constant 0 : index
    %c0_57 = arith.constant 0 : index
    %94 = vector.load %arg14[%c0_56, %c0_57] : memref<128x64xf32, #tpu.memory_space<vmem>>, vector<96x64xf32>
    %cst_58 = arith.constant dense<0.000000e+00> : vector<96x384xf32>
    %95 = tpu.matmul %94, %93, %cst_58 {dimension_numbers = #tpu.dot_dimension_numbers<[1], [0], [0], [1], [0, 0, 1, 1], [], []>} : vector<96x64xf32>, vector<64x384xf32>, vector<96x384xf32> -> vector<96x384xf32>
    %96 = vector.extract_strided_slice %95 {offsets = [0, 0], sizes = [32, 384], strides = [1, 1]} : vector<96x384xf32> to vector<32x384xf32>
    %97 = vector.extract_strided_slice %95 {offsets = [32, 0], sizes = [32, 384], strides = [1, 1]} : vector<96x384xf32> to vector<32x384xf32>
    %98 = vector.extract_strided_slice %95 {offsets = [64, 0], sizes = [32, 384], strides = [1, 1]} : vector<96x384xf32> to vector<32x384xf32>
    %99 = tpu.concatenate %96, %97, %98 in 1 : vector<32x384xf32>, vector<32x384xf32>, vector<32x384xf32> -> vector<32x1152xf32>
    %c0_59 = arith.constant 0 : index
    %c0_60 = arith.constant 0 : index
    %100 = vector.load %arg15[%c0_59, %c0_60] : memref<1152x192xf32, #tpu.memory_space<vmem>>, vector<1152x192xf32>
    %cst_61 = arith.constant dense<0.000000e+00> : vector<32x192xf32>
    %101 = tpu.matmul %99, %100, %cst_61 {dimension_numbers = #tpu.dot_dimension_numbers<[1], [0], [0], [1], [0, 0, 1, 1], [], []>} : vector<32x1152xf32>, vector<1152x192xf32>, vector<32x192xf32> -> vector<32x192xf32>
    %c2_62 = arith.constant 2 : index
    %c0_63 = arith.constant 0 : index
    %102 = vector.load %arg18[%c2_62, %c0_63] : memref<9x384xf32, #tpu.memory_space<vmem>>, vector<1x192xf32>
    %103 = vector.broadcast %102 : vector<1x192xf32> to vector<32x192xf32>
    %104 = arith.mulf %101, %103 : vector<32x192xf32>
    %c3_64 = arith.constant 3 : index
    %c0_65 = arith.constant 0 : index
    %105 = vector.load %arg18[%c3_64, %c0_65] : memref<9x384xf32, #tpu.memory_space<vmem>>, vector<1x192xf32>
    %106 = vector.broadcast %105 : vector<1x192xf32> to vector<32x192xf32>
    %107 = arith.addf %104, %106 : vector<32x192xf32>
    %cst_66 = arith.constant 0.000000e+00 : f32
    %108 = vector.broadcast %cst_66 : f32 to vector<32x192xf32>
    %109 = arith.maximumf %107, %108 : vector<32x192xf32>
    %110 = vector.extract_strided_slice %109 {offsets = [0, 0], sizes = [16, 192], strides = [1, 1]} : vector<32x192xf32> to vector<16x192xf32>
    %cst_67 = arith.constant dense<0.000000e+00> : vector<192xf32>
    %111 = vector.multi_reduction <add>, %110, %cst_67 [0] : vector<16x192xf32> to vector<192xf32>
    %112 = vector.shape_cast %111 : vector<192xf32> to vector<1x192xf32>
    %113 = vector.extract_strided_slice %109 {offsets = [16, 0], sizes = [16, 192], strides = [1, 1]} : vector<32x192xf32> to vector<16x192xf32>
    %cst_68 = arith.constant dense<0.000000e+00> : vector<192xf32>
    %114 = vector.multi_reduction <add>, %113, %cst_68 [0] : vector<16x192xf32> to vector<192xf32>
    %115 = vector.shape_cast %114 : vector<192xf32> to vector<1x192xf32>
    %116 = tpu.concatenate %112, %115 in 0 : vector<1x192xf32>, vector<1x192xf32> -> vector<2x192xf32>
    %c0_69 = arith.constant 0 : index
    %c0_70 = arith.constant 0 : index
    %117 = vector.load %arg16[%c0_69, %c0_70] : memref<192x48xf32, #tpu.memory_space<vmem>>, vector<192x48xf32>
    %cst_71 = arith.constant dense<0.000000e+00> : vector<2x48xf32>
    %118 = tpu.matmul %116, %117, %cst_71 {dimension_numbers = #tpu.dot_dimension_numbers<[1], [0], [0], [1], [0, 0, 1, 1], [], []>} : vector<2x192xf32>, vector<192x48xf32>, vector<2x48xf32> -> vector<2x48xf32>
    %c0_72 = arith.constant 0 : index
    %c0_73 = arith.constant 0 : index
    %119 = vector.load %arg17[%c0_72, %c0_73] : memref<64x192xf32, #tpu.memory_space<vmem>>, vector<48x16xf32>
    %cst_74 = arith.constant dense<0.000000e+00> : vector<2x16xf32>
    %120 = tpu.matmul %118, %119, %cst_74 {dimension_numbers = #tpu.dot_dimension_numbers<[1], [0], [0], [1], [0, 0, 1, 1], [], []>} : vector<2x48xf32>, vector<48x16xf32>, vector<2x16xf32> -> vector<2x16xf32>
    %c7_75 = arith.constant 7 : index
    %c0_76 = arith.constant 0 : index
    %121 = vector.load %arg18[%c7_75, %c0_76] : memref<9x384xf32, #tpu.memory_space<vmem>>, vector<1x16xf32>
    %122 = vector.broadcast %121 : vector<1x16xf32> to vector<2x16xf32>
    %123 = arith.addf %120, %122 : vector<2x16xf32>
    %cst_77 = arith.constant 0.000000e+00 : f32
    %124 = vector.broadcast %cst_77 : f32 to vector<2x16xf32>
    %125 = arith.maximumf %123, %124 : vector<2x16xf32>
    %c48 = arith.constant 48 : index
    %c0_78 = arith.constant 0 : index
    %126 = vector.load %arg17[%c48, %c0_78] : memref<64x192xf32, #tpu.memory_space<vmem>>, vector<16x192xf32>
    %cst_79 = arith.constant dense<0.000000e+00> : vector<2x192xf32>
    %127 = tpu.matmul %125, %126, %cst_79 {dimension_numbers = #tpu.dot_dimension_numbers<[1], [0], [0], [1], [0, 0, 1, 1], [], []>} : vector<2x16xf32>, vector<16x192xf32>, vector<2x192xf32> -> vector<2x192xf32>
    %c8_80 = arith.constant 8 : index
    %c0_81 = arith.constant 0 : index
    %128 = vector.load %arg18[%c8_80, %c0_81] : memref<9x384xf32, #tpu.memory_space<vmem>>, vector<1x192xf32>
    %129 = vector.broadcast %128 : vector<1x192xf32> to vector<2x192xf32>
    %130 = arith.addf %127, %129 : vector<2x192xf32>
    %131 = arith.negf %130 : vector<2x192xf32>
    %132 = math.exp %131 : vector<2x192xf32>
    %cst_82 = arith.constant 1.000000e+00 : f32
    %133 = vector.broadcast %cst_82 : f32 to vector<2x192xf32>
    %134 = arith.addf %133, %132 : vector<2x192xf32>
    %135 = arith.divf %133, %134 : vector<2x192xf32>
    %136 = vector.extract_strided_slice %109 {offsets = [0, 0], sizes = [16, 192], strides = [1, 1]} : vector<32x192xf32> to vector<16x192xf32>
    %137 = vector.extract_strided_slice %135 {offsets = [0, 0], sizes = [1, 192], strides = [1, 1]} : vector<2x192xf32> to vector<1x192xf32>
    %138 = vector.broadcast %137 : vector<1x192xf32> to vector<16x192xf32>
    %139 = arith.mulf %136, %138 : vector<16x192xf32>
    %140 = vector.extract_strided_slice %109 {offsets = [16, 0], sizes = [16, 192], strides = [1, 1]} : vector<32x192xf32> to vector<16x192xf32>
    %141 = vector.extract_strided_slice %135 {offsets = [1, 0], sizes = [1, 192], strides = [1, 1]} : vector<2x192xf32> to vector<1x192xf32>
    %142 = vector.broadcast %141 : vector<1x192xf32> to vector<16x192xf32>
    %143 = arith.mulf %140, %142 : vector<16x192xf32>
    %144 = tpu.concatenate %139, %143 in 0 : vector<16x192xf32>, vector<16x192xf32> -> vector<32x192xf32>
    %c0_83 = arith.constant 0 : index
    %c0_84 = arith.constant 0 : index
    %145 = vector.load %arg19[%c0_83, %c0_84] : memref<192x128xf32, #tpu.memory_space<vmem>>, vector<192x128xf32>
    %cst_85 = arith.constant dense<0.000000e+00> : vector<32x128xf32>
    %146 = tpu.matmul %144, %145, %cst_85 {dimension_numbers = #tpu.dot_dimension_numbers<[1], [0], [0], [1], [0, 0, 1, 1], [], []>} : vector<32x192xf32>, vector<192x128xf32>, vector<32x128xf32> -> vector<32x128xf32>
    %c4_86 = arith.constant 4 : index
    %c0_87 = arith.constant 0 : index
    %147 = vector.load %arg18[%c4_86, %c0_87] : memref<9x384xf32, #tpu.memory_space<vmem>>, vector<1x128xf32>
    %148 = vector.broadcast %147 : vector<1x128xf32> to vector<32x128xf32>
    %149 = arith.mulf %146, %148 : vector<32x128xf32>
    %c5_88 = arith.constant 5 : index
    %c0_89 = arith.constant 0 : index
    %150 = vector.load %arg18[%c5_88, %c0_89] : memref<9x384xf32, #tpu.memory_space<vmem>>, vector<1x128xf32>
    %151 = vector.broadcast %150 : vector<1x128xf32> to vector<32x128xf32>
    %152 = arith.addf %149, %151 : vector<32x128xf32>
    %c96 = arith.constant 96 : index
    %c0_90 = arith.constant 0 : index
    %153 = vector.load %arg14[%c96, %c0_90] : memref<128x64xf32, #tpu.memory_space<vmem>>, vector<32x64xf32>
    %cst_91 = arith.constant dense<0.000000e+00> : vector<32x128xf32>
    %154 = tpu.matmul %153, %83, %cst_91 {dimension_numbers = #tpu.dot_dimension_numbers<[1], [0], [0], [1], [0, 0, 1, 1], [], []>} : vector<32x64xf32>, vector<64x128xf32>, vector<32x128xf32> -> vector<32x128xf32>
    %c0_92 = arith.constant 0 : index
    %c0_93 = arith.constant 0 : index
    %155 = vector.load %arg20[%c0_92, %c0_93] : memref<128x128xf32, #tpu.memory_space<vmem>>, vector<128x128xf32>
    %cst_94 = arith.constant dense<0.000000e+00> : vector<32x128xf32>
    %156 = tpu.matmul %154, %155, %cst_94 {dimension_numbers = #tpu.dot_dimension_numbers<[1], [0], [0], [1], [0, 0, 1, 1], [], []>} : vector<32x128xf32>, vector<128x128xf32>, vector<32x128xf32> -> vector<32x128xf32>
    %c6_95 = arith.constant 6 : index
    %c0_96 = arith.constant 0 : index
    %157 = vector.load %arg18[%c6_95, %c0_96] : memref<9x384xf32, #tpu.memory_space<vmem>>, vector<1x128xf32>
    %158 = vector.broadcast %157 : vector<1x128xf32> to vector<32x128xf32>
    %159 = arith.addf %156, %158 : vector<32x128xf32>
    %160 = arith.addf %152, %159 : vector<32x128xf32>
    %c0_97 = arith.constant 0 : index
    %c0_98 = arith.constant 0 : index
    %161 = vector.load %arg21[%c0_97, %c0_98] : memref<32x128xf32, #tpu.memory_space<vmem>>, vector<32x128xf32>
    tpu.vector_store %arg21[%c0_97, %c0_98], %160 {strides = array<i32>} : memref<32x128xf32, #tpu.memory_space<vmem>>, vector<32x128xf32>,
    return
  }
  func.func @transform_0(%arg0: i32) -> (i32, i32) {
    %c0_i32 = arith.constant 0 : i32
    %c0_i32_0 = arith.constant 0 : i32
    return %arg0, %c0_i32 : i32, i32
  }
  func.func @transform_1(%arg0: i32) -> (i32, i32) {
    %c0_i32 = arith.constant 0 : i32
    %c0_i32_0 = arith.constant 0 : i32
    %c0_i32_1 = arith.constant 0 : i32
    return %c0_i32, %c0_i32_0 : i32, i32
  }
  func.func @transform_2(%arg0: i32) -> (i32, i32) {
    %c0_i32 = arith.constant 0 : i32
    %c0_i32_0 = arith.constant 0 : i32
    %c0_i32_1 = arith.constant 0 : i32
    return %c0_i32, %c0_i32_0 : i32, i32
  }
  func.func @transform_3(%arg0: i32) -> (i32, i32) {
    %c0_i32 = arith.constant 0 : i32
    %c0_i32_0 = arith.constant 0 : i32
    %c0_i32_1 = arith.constant 0 : i32
    return %c0_i32, %c0_i32_0 : i32, i32
  }
  func.func @transform_4(%arg0: i32) -> (i32, i32) {
    %c0_i32 = arith.constant 0 : i32
    %c0_i32_0 = arith.constant 0 : i32
    %c0_i32_1 = arith.constant 0 : i32
    return %c0_i32, %c0_i32_0 : i32, i32
  }
  func.func @transform_5(%arg0: i32) -> (i32, i32) {
    %c0_i32 = arith.constant 0 : i32
    %c0_i32_0 = arith.constant 0 : i32
    %c0_i32_1 = arith.constant 0 : i32
    return %c0_i32, %c0_i32_0 : i32, i32
  }
  func.func @transform_6(%arg0: i32) -> (i32, i32) {
    %c0_i32 = arith.constant 0 : i32
    %c0_i32_0 = arith.constant 0 : i32
    %c0_i32_1 = arith.constant 0 : i32
    return %c0_i32, %c0_i32_0 : i32, i32
  }
  func.func @transform_7(%arg0: i32) -> (i32, i32) {
    %c0_i32 = arith.constant 0 : i32
    %c0_i32_0 = arith.constant 0 : i32
    %c0_i32_1 = arith.constant 0 : i32
    return %c0_i32, %c0_i32_0 : i32, i32
  }
  func.func @transform_8(%arg0: i32) -> (i32, i32) {
    %c0_i32 = arith.constant 0 : i32
    %c0_i32_0 = arith.constant 0 : i32
    %c0_i32_1 = arith.constant 0 : i32
    return %c0_i32, %c0_i32_0 : i32, i32
  }
  func.func @transform_9(%arg0: i32) -> (i32, i32) {
    %c0_i32 = arith.constant 0 : i32
    %c0_i32_0 = arith.constant 0 : i32
    %c0_i32_1 = arith.constant 0 : i32
    return %c0_i32, %c0_i32_0 : i32, i32
  }
  func.func @transform_10(%arg0: i32) -> (i32, i32) {
    %c0_i32 = arith.constant 0 : i32
    %c0_i32_0 = arith.constant 0 : i32
    %c0_i32_1 = arith.constant 0 : i32
    return %c0_i32, %c0_i32_0 : i32, i32
  }
  func.func @transform_11(%arg0: i32) -> (i32, i32) {
    %c0_i32 = arith.constant 0 : i32
    %c0_i32_0 = arith.constant 0 : i32
    %c0_i32_1 = arith.constant 0 : i32
    return %c0_i32, %c0_i32_0 : i32, i32
  }
  func.func @transform_12(%arg0: i32) -> (i32, i32) {
    %c0_i32 = arith.constant 0 : i32
    %c0_i32_0 = arith.constant 0 : i32
    %c0_i32_1 = arith.constant 0 : i32
    return %c0_i32, %c0_i32_0 : i32, i32
  }
  func.func @transform_13(%arg0: i32) -> (i32, i32) {
    %c0_i32 = arith.constant 0 : i32
    %c0_i32_0 = arith.constant 0 : i32
    %c0_i32_1 = arith.constant 0 : i32
    return %c0_i32, %c0_i32_0 : i32, i32
  }
  func.func @transform_14(%arg0: i32) -> (i32, i32) {
    %c0_i32 = arith.constant 0 : i32
    %c0_i32_0 = arith.constant 0 : i32
    %c0_i32_1 = arith.constant 0 : i32
    return %c0_i32, %c0_i32_0 : i32, i32
  }
  func.func @transform_15(%arg0: i32) -> (i32, i32) {
    %c0_i32 = arith.constant 0 : i32
    %c0_i32_0 = arith.constant 0 : i32
    %c0_i32_1 = arith.constant 0 : i32
    return %c0_i32, %c0_i32_0 : i32, i32
  }
  func.func @transform_16(%arg0: i32) -> (i32, i32) {
    %c0_i32 = arith.constant 0 : i32
    %c0_i32_0 = arith.constant 0 : i32
    %c0_i32_1 = arith.constant 0 : i32
    return %c0_i32, %c0_i32_0 : i32, i32
  }
  func.func @transform_17(%arg0: i32) -> (i32, i32) {
    %c0_i32 = arith.constant 0 : i32
    %c0_i32_0 = arith.constant 0 : i32
    %c0_i32_1 = arith.constant 0 : i32
    return %c0_i32, %c0_i32_0 : i32, i32
  }
  func.func @transform_18(%arg0: i32) -> (i32, i32) {
    %c0_i32 = arith.constant 0 : i32
    %c0_i32_0 = arith.constant 0 : i32
    %c0_i32_1 = arith.constant 0 : i32
    return %c0_i32, %c0_i32_0 : i32, i32
  }
  func.func @transform_19(%arg0: i32) -> (i32, i32) {
    %c0_i32 = arith.constant 0 : i32
    %c0_i32_0 = arith.constant 0 : i32
    %c0_i32_1 = arith.constant 0 : i32
    return %c0_i32, %c0_i32_0 : i32, i32
  }
  func.func @transform_20(%arg0: i32) -> (i32, i32) {
    %c0_i32 = arith.constant 0 : i32
    %c0_i32_0 = arith.constant 0 : i32
    return %arg0, %c0_i32 : i32, i32
  }
}

</mosaic_0001>

<llo_original>
// kernel: depthwise_core_forward.1
$region0: #{depthwise_core_forward.1}
  #allocation0 [shape = 'u32[]', space=smem, size = 0x4, offset = 0x4, fixed_abs, tag = 'smem constant byte address 0x4 - core index']
  #allocation1 [shape = 'u32[144,128]{1,0:T(1,128)}', space=vmem, size = 0x12000, scoped, tag = 'internal scratch']
  %s0 = inlined_call_operand.vmem [shape: f32[128,16], index: 0, kind: input, shape index: {}]
  %s1 = inlined_call_operand.vmem [shape: f32[16,128], index: 1, kind: input, shape index: {}]
  %s2 = inlined_call_operand.vmem [shape: f32[128,128], index: 2, kind: input, shape index: {}]
  %s3 = inlined_call_operand.vmem [shape: f32[128,384], index: 3, kind: input, shape index: {}]
  %s4 = inlined_call_operand.vmem [shape: f32[256,128], index: 4, kind: input, shape index: {}]
  %s5 = inlined_call_operand.vmem [shape: f32[1152,192], index: 5, kind: input, shape index: {}]
  %s6 = inlined_call_operand.vmem [shape: f32[192,24], index: 6, kind: input, shape index: {}]
  %s7 = inlined_call_operand.vmem [shape: f32[32,192], index: 7, kind: input, shape index: {}]
  %s8 = inlined_call_operand.vmem [shape: f32[9,384], index: 8, kind: input, shape index: {}]
  %s9 = inlined_call_operand.vmem [shape: f32[192,128], index: 9, kind: input, shape index: {}]
  %s10 = inlined_call_operand.vmem [shape: f32[128,128], index: 10, kind: input, shape index: {}]
  %s11 = inlined_call_operand.vmem [shape: f32[64,128], index: 11, kind: input, shape index: {}]
  %s12 = inlined_call_operand.vmem [shape: f32[128,384], index: 12, kind: input, shape index: {}]
  %s13 = inlined_call_operand.vmem [shape: f32[128,64], index: 13, kind: input, shape index: {}]
  %s14 = inlined_call_operand.vmem [shape: f32[1152,192], index: 14, kind: input, shape index: {}]
  %s15 = inlined_call_operand.vmem [shape: f32[192,48], index: 15, kind: input, shape index: {}]
  %s16 = inlined_call_operand.vmem [shape: f32[64,192], index: 16, kind: input, shape index: {}]
  %s17 = inlined_call_operand.vmem [shape: f32[9,384], index: 17, kind: input, shape index: {}]
  %s18 = inlined_call_operand.vmem [shape: f32[192,128], index: 18, kind: input, shape index: {}]
  %s19 = inlined_call_operand.vmem [shape: f32[128,128], index: 19, kind: input, shape index: {}]
  %s20 = inlined_call_operand.vmem [shape: f32[32,128], index: 20, kind: output, shape index: {}]
  %s21 = sld [smem:[#allocation0]]
  $region90: #{depthwise_core_forward.1} parent=0
    _
  %s23 = ssub.s32 1, %s21
  %s24 = scalar_select 0, %s23, %s21
  // Predicated region
  $region2: #{depthwise_core_forward.1} parent=0 // pred_check
    _
  $region3: #{depthwise_core_forward.1} parent=0 // pred_check_branch
    %26 = sbr.rel (0) target = $region5
  $region4: #{depthwise_core_forward.1} parent=0 // pred_region
    _
  $region5: #{depthwise_core_forward.1} parent=0 // pred_fallthru
    _
  // Predicated region
  $region6: #{depthwise_core_forward.1} parent=0 // pred_check
    _
  $region7: #{depthwise_core_forward.1} parent=0 // pred_check_branch
    %28 = sbr.rel (0) target = $region9
  $region8: #{depthwise_core_forward.1} parent=0 // pred_region
    _
  $region9: #{depthwise_core_forward.1} parent=0 // pred_fallthru
    _
  // Predicated region
  $region10: #{depthwise_core_forward.1} parent=0 // pred_check
    _
  $region11: #{depthwise_core_forward.1} parent=0 // pred_check_branch
    %30 = sbr.rel (0) target = $region13
  $region12: #{depthwise_core_forward.1} parent=0 // pred_region
    _
  $region13: #{depthwise_core_forward.1} parent=0 // pred_fallthru
    _
  // Predicated region
  $region14: #{depthwise_core_forward.1} parent=0 // pred_check
    _
  $region15: #{depthwise_core_forward.1} parent=0 // pred_check_branch
    %32 = sbr.rel (0) target = $region17
  $region16: #{depthwise_core_forward.1} parent=0 // pred_region
    _
  $region17: #{depthwise_core_forward.1} parent=0 // pred_fallthru
    _
  // Predicated region
  $region18: #{depthwise_core_forward.1} parent=0 // pred_check
    _
  $region19: #{depthwise_core_forward.1} parent=0 // pred_check_branch
    %34 = sbr.rel (0) target = $region21
  $region20: #{depthwise_core_forward.1} parent=0 // pred_region
    _
  $region21: #{depthwise_core_forward.1} parent=0 // pred_fallthru
    _
  // Predicated region
  $region22: #{depthwise_core_forward.1} parent=0 // pred_check
    _
  $region23: #{depthwise_core_forward.1} parent=0 // pred_check_branch
    %36 = sbr.rel (0) target = $region25
  $region24: #{depthwise_core_forward.1} parent=0 // pred_region
    _
  $region25: #{depthwise_core_forward.1} parent=0 // pred_fallthru
    _
  // Predicated region
  $region26: #{depthwise_core_forward.1} parent=0 // pred_check
    _
  $region27: #{depthwise_core_forward.1} parent=0 // pred_check_branch
    %38 = sbr.rel (0) target = $region29
  $region28: #{depthwise_core_forward.1} parent=0 // pred_region
    _
  $region29: #{depthwise_core_forward.1} parent=0 // pred_fallthru
    _
  // Predicated region
  $region30: #{depthwise_core_forward.1} parent=0 // pred_check
    _
  $region31: #{depthwise_core_forward.1} parent=0 // pred_check_branch
    %40 = sbr.rel (0) target = $region33
  $region32: #{depthwise_core_forward.1} parent=0 // pred_region
    _
  $region33: #{depthwise_core_forward.1} parent=0 // pred_fallthru
    _
  // Predicated region
  $region34: #{depthwise_core_forward.1} parent=0 // pred_check
    _
  $region35: #{depthwise_core_forward.1} parent=0 // pred_check_branch
    %42 = sbr.rel (0) target = $region37
  $region36: #{depthwise_core_forward.1} parent=0 // pred_region
    _
  $region37: #{depthwise_core_forward.1} parent=0 // pred_fallthru
    _
  // Predicated region
  $region38: #{depthwise_core_forward.1} parent=0 // pred_check
    _
  $region39: #{depthwise_core_forward.1} parent=0 // pred_check_branch
    %44 = sbr.rel (0) target = $region41
  $region40: #{depthwise_core_forward.1} parent=0 // pred_region
    _
  $region41: #{depthwise_core_forward.1} parent=0 // pred_fallthru
    _
  // Predicated region
  $region42: #{depthwise_core_forward.1} parent=0 // pred_check
    _
  $region43: #{depthwise_core_forward.1} parent=0 // pred_check_branch
    %46 = sbr.rel (0) target = $region45
  $region44: #{depthwise_core_forward.1} parent=0 // pred_region
    _
  $region45: #{depthwise_core_forward.1} parent=0 // pred_fallthru
    _
  // Predicated region
  $region46: #{depthwise_core_forward.1} parent=0 // pred_check
    _
  $region47: #{depthwise_core_forward.1} parent=0 // pred_check_branch
    %48 = sbr.rel (0) target = $region49
  $region48: #{depthwise_core_forward.1} parent=0 // pred_region
    _
  $region49: #{depthwise_core_forward.1} parent=0 // pred_fallthru
    _
  // Predicated region
  $region50: #{depthwise_core_forward.1} parent=0 // pred_check
    _
  $region51: #{depthwise_core_forward.1} parent=0 // pred_check_branch
    %50 = sbr.rel (0) target = $region53
  $region52: #{depthwise_core_forward.1} parent=0 // pred_region
    _
  $region53: #{depthwise_core_forward.1} parent=0 // pred_fallthru
    _
  // Predicated region
  $region54: #{depthwise_core_forward.1} parent=0 // pred_check
    _
  $region55: #{depthwise_core_forward.1} parent=0 // pred_check_branch
    %52 = sbr.rel (0) target = $region57
  $region56: #{depthwise_core_forward.1} parent=0 // pred_region
    _
  $region57: #{depthwise_core_forward.1} parent=0 // pred_fallthru
    _
  // Predicated region
  $region58: #{depthwise_core_forward.1} parent=0 // pred_check
    _
  $region59: #{depthwise_core_forward.1} parent=0 // pred_check_branch
    %54 = sbr.rel (0) target = $region61
  $region60: #{depthwise_core_forward.1} parent=0 // pred_region
    _
  $region61: #{depthwise_core_forward.1} parent=0 // pred_fallthru
    _
  // Predicated region
  $region62: #{depthwise_core_forward.1} parent=0 // pred_check
    _
  $region63: #{depthwise_core_forward.1} parent=0 // pred_check_branch
    %56 = sbr.rel (0) target = $region65
  $region64: #{depthwise_core_forward.1} parent=0 // pred_region
    _
  $region65: #{depthwise_core_forward.1} parent=0 // pred_fallthru
    _
  // Predicated region
  $region66: #{depthwise_core_forward.1} parent=0 // pred_check
    _
  $region67: #{depthwise_core_forward.1} parent=0 // pred_check_branch
    %58 = sbr.rel (0) target = $region69
  $region68: #{depthwise_core_forward.1} parent=0 // pred_region
    _
  $region69: #{depthwise_core_forward.1} parent=0 // pred_fallthru
    _
  // Predicated region
  $region70: #{depthwise_core_forward.1} parent=0 // pred_check
    _
  $region71: #{depthwise_core_forward.1} parent=0 // pred_check_branch
    %60 = sbr.rel (0) target = $region73
  $region72: #{depthwise_core_forward.1} parent=0 // pred_region
    _
  $region73: #{depthwise_core_forward.1} parent=0 // pred_fallthru
    _
  // Predicated region
  $region74: #{depthwise_core_forward.1} parent=0 // pred_check
    _
  $region75: #{depthwise_core_forward.1} parent=0 // pred_check_branch
    %62 = sbr.rel (0) target = $region77
  $region76: #{depthwise_core_forward.1} parent=0 // pred_region
    _
  $region77: #{depthwise_core_forward.1} parent=0 // pred_fallthru
    _
  // Predicated region
  $region78: #{depthwise_core_forward.1} parent=0 // pred_check
    _
  $region79: #{depthwise_core_forward.1} parent=0 // pred_check_branch
    %64 = sbr.rel (0) target = $region81
  $region80: #{depthwise_core_forward.1} parent=0 // pred_region
    _
  $region81: #{depthwise_core_forward.1} parent=0 // pred_fallthru
    _
  %v65 = vld [vmem:[%s0] sm:$0xff]
  %v66 = vld [vmem:[%s0 + $0x8] sm:$0xff]
  %v67 = vld [vmem:[%s0 + $0x10] sm:$0xff]
  %v68 = vld [vmem:[%s0 + $0x18] sm:$0xff]
  %v69 = vld [vmem:[%s0 + $0x20] sm:$0xff]
  %v70 = vld [vmem:[%s0 + $0x28] sm:$0xff]
  %v71 = vld [vmem:[%s0 + $0x30] sm:$0xff]
  %v72 = vld [vmem:[%s0 + $0x38] sm:$0xff]
  %v73 = vld [vmem:[%s0 + $0x40] sm:$0xff]
  %v74 = vld [vmem:[%s0 + $0x48] sm:$0xff]
  %v75 = vld [vmem:[%s0 + $0x50] sm:$0xff]
  %v76 = vld [vmem:[%s0 + $0x58] sm:$0xff]
  %v77 = vld [vmem:[%s0 + $0x60] sm:$0xff]
  %v78 = vld [vmem:[%s0 + $0x68] sm:$0xff]
  %v79 = vld [vmem:[%s0 + $0x70] sm:$0xff]
  %v80 = vld [vmem:[%s0 + $0x78] sm:$0xff]
  %v81 = vld [vmem:[%s1] sm:$0xff]
  %v82 = vld [vmem:[%s1 + $0x8] sm:$0xff]
  %v83 = vld [vmem:[%s2] sm:$0xff]
  %v84 = vld [vmem:[%s2 + $0x8] sm:$0xff]
  %v85 = vld [vmem:[%s2 + $0x10] sm:$0xff]
  %v86 = vld [vmem:[%s2 + $0x18] sm:$0xff]
  %v87 = vld [vmem:[%s2 + $0x20] sm:$0xff]
  %v88 = vld [vmem:[%s2 + $0x28] sm:$0xff]
  %v89 = vld [vmem:[%s2 + $0x30] sm:$0xff]
  %v90 = vld [vmem:[%s2 + $0x38] sm:$0xff]
  %v91 = vld [vmem:[%s2 + $0x40] sm:$0xff]
  %v92 = vld [vmem:[%s2 + $0x48] sm:$0xff]
  %v93 = vld [vmem:[%s2 + $0x50] sm:$0xff]
  %v94 = vld [vmem:[%s2 + $0x58] sm:$0xff]
  %v95 = vld [vmem:[%s2 + $0x60] sm:$0xff]
  %v96 = vld [vmem:[%s2 + $0x68] sm:$0xff]
  %v97 = vld [vmem:[%s2 + $0x70] sm:$0xff]
  %v98 = vld [vmem:[%s2 + $0x78] sm:$0xff]
  %vm99 = vcmask 130048
  %v101 = vsel %vm99, %v65, 0
  %v104 = vsel %vm99, %v66, 0
  %v107 = vsel %vm99, %v67, 0
  %v110 = vsel %vm99, %v68, 0
  %v113 = vsel %vm99, %v69, 0
  %v116 = vsel %vm99, %v70, 0
  %v119 = vsel %vm99, %v71, 0
  %v122 = vsel %vm99, %v72, 0
  %v125 = vsel %vm99, %v73, 0
  %v128 = vsel %vm99, %v74, 0
  %v131 = vsel %vm99, %v75, 0
  %v134 = vsel %vm99, %v76, 0
  %v137 = vsel %vm99, %v77, 0
  %v140 = vsel %vm99, %v78, 0
  %v143 = vsel %vm99, %v79, 0
  %v146 = vsel %vm99, %v80, 0
  %148 = vmatprep.subr.mxu0 0.0
  %149 = vmatpush1.msra.mxu0 0.0
  %150 = vmatprep.subr.mxu0 0.0
  %151 = vmatpush1.msra.mxu0 0.0
  %152 = vmatprep.subr.mxu0 0.0
  %153 = vmatpush1.msra.mxu0 0.0
  %154 = vmatprep.subr.mxu0 0.0
  %155 = vmatpush1.msra.mxu0 0.0
  %156 = vmatprep.subr.mxu0 0.0
  %157 = vmatpush1.msra.mxu0 0.0
  %158 = vmatprep.subr.mxu0 0.0
  %159 = vmatpush1.msra.mxu0 0.0
  %160 = vmatprep.subr.mxu0 0.0
  %161 = vmatpush1.msra.mxu0 0.0
  %162 = vmatprep.subr.mxu0 0.0
  %163 = vmatpush1.msra.mxu0 0.0
  %164 = vmatprep.subr.mxu0 0.0
  %165 = vmatpush1.msra.mxu0 0.0
  %166 = vmatprep.subr.mxu0 0.0
  %167 = vmatpush1.msra.mxu0 0.0
  %168 = vmatprep.subr.mxu0 0.0
  %169 = vmatpush1.msra.mxu0 0.0
  %170 = vmatprep.subr.mxu0 0.0
  %171 = vmatpush1.msra.mxu0 0.0
  %172 = vmatprep.subr.mxu0 0.0
  %173 = vmatpush1.msra.mxu0 0.0
  %174 = vmatprep.subr.mxu0 0.0
  %175 = vmatpush1.msra.mxu0 0.0
  %176 = vmatprep.subr.mxu0 0.0
  %177 = vmatpush1.msra.mxu0 %v82
  %178 = vmatprep.subr.mxu0 0.0
  %179 = vmatpush1.msra.mxu0 %v81
  %180 = vmatprep.subr.mxu0 0.0
  %181 = vmatpush2.msra.mxu0 0.0
  %182 = vmatprep.subr.mxu0 0.0
  %183 = vmatpush2.msra.mxu0 0.0
  %184 = vmatprep.subr.mxu0 0.0
  %185 = vmatpush2.msra.mxu0 0.0
  %186 = vmatprep.subr.mxu0 0.0
  %187 = vmatpush2.msra.mxu0 0.0
  %188 = vmatprep.subr.mxu0 0.0
  %189 = vmatpush2.msra.mxu0 0.0
  %190 = vmatprep.subr.mxu0 0.0
  %191 = vmatpush2.msra.mxu0 0.0
  %192 = vmatprep.subr.mxu0 0.0
  %193 = vmatpush2.msra.mxu0 0.0
  %194 = vmatprep.subr.mxu0 0.0
  %195 = vmatpush2.msra.mxu0 0.0
  %196 = vmatprep.subr.mxu0 0.0
  %197 = vmatpush2.msra.mxu0 0.0
  %198 = vmatprep.subr.mxu0 0.0
  %199 = vmatpush2.msra.mxu0 0.0
  %200 = vmatprep.subr.mxu0 0.0
  %201 = vmatpush2.msra.mxu0 0.0
  %202 = vmatprep.subr.mxu0 0.0
  %203 = vmatpush2.msra.mxu0 0.0
  %204 = vmatprep.subr.mxu0 0.0
  %205 = vmatpush2.msra.mxu0 0.0
  %206 = vmatprep.subr.mxu0 0.0
  %207 = vmatpush2.msra.mxu0 0.0
  %208 = vmatprep.subr.mxu0 0.0
  %209 = vmatpush2.msra.mxu0 0.0
  %210 = vmatprep.subr.mxu0 0.0
  %211 = vmatpush2.msra.mxu0 0.0
  %212 = vmatprep.mubr.f32.mxu0 0.0
  %213 = vmatmul.mubr.f32.gmra.mxu0 %v101
  %v214 = vpop.f32.mrf.mxu0
  %v215 = vadd.f32 %v83, %v214
  %v216 = vpop.f32.mrf.mxu0
  %217 = vmatprep.mubr.f32.mxu0 0.0
  %218 = vmatmul.mubr.f32.gmra.mxu0 %v104
  %v219 = vpop.f32.mrf.mxu0
  %v220 = vadd.f32 %v84, %v219
  %v221 = vpop.f32.mrf.mxu0
  %222 = vmatprep.mubr.f32.mxu0 0.0
  %223 = vmatmul.mubr.f32.gmra.mxu0 %v107
  %v224 = vpop.f32.mrf.mxu0
  %v225 = vadd.f32 %v85, %v224
  %v226 = vpop.f32.mrf.mxu0
  %227 = vmatprep.mubr.f32.mxu0 0.0
  %228 = vmatmul.mubr.f32.gmra.mxu0 %v110
  %v229 = vpop.f32.mrf.mxu0
  %v230 = vadd.f32 %v86, %v229
  %v231 = vpop.f32.mrf.mxu0
  %232 = vmatprep.mubr.f32.mxu0 0.0
  %233 = vmatmul.mubr.f32.gmra.mxu0 %v113
  %v234 = vpop.f32.mrf.mxu0
  %v235 = vadd.f32 %v87, %v234
  %v236 = vpop.f32.mrf.mxu0
  %237 = vmatprep.mubr.f32.mxu0 0.0
  %238 = vmatmul.mubr.f32.gmra.mxu0 %v116
  %v239 = vpop.f32.mrf.mxu0
  %v240 = vadd.f32 %v88, %v239
  %v241 = vpop.f32.mrf.mxu0
  %242 = vmatprep.mubr.f32.mxu0 0.0
  %243 = vmatmul.mubr.f32.gmra.mxu0 %v119
  %v244 = vpop.f32.mrf.mxu0
  %v245 = vadd.f32 %v89, %v244
  %v246 = vpop.f32.mrf.mxu0
  %247 = vmatprep.mubr.f32.mxu0 0.0
  %248 = vmatmul.mubr.f32.gmra.mxu0 %v122
  %v249 = vpop.f32.mrf.mxu0
  %v250 = vadd.f32 %v90, %v249
  %v251 = vpop.f32.mrf.mxu0
  %252 = vmatprep.mubr.f32.mxu0 0.0
  %253 = vmatmul.mubr.f32.gmra.mxu0 %v125
  %v254 = vpop.f32.mrf.mxu0
  %v255 = vadd.f32 %v91, %v254
  %v256 = vpop.f32.mrf.mxu0
  %257 = vmatprep.mubr.f32.mxu0 0.0
  %258 = vmatmul.mubr.f32.gmra.mxu0 %v128
  %v259 = vpop.f32.mrf.mxu0
  %v260 = vadd.f32 %v92, %v259
  %v261 = vpop.f32.mrf.mxu0
  %262 = vmatprep.mubr.f32.mxu0 0.0
  %263 = vmatmul.mubr.f32.gmra.mxu0 %v131
  %v264 = vpop.f32.mrf.mxu0
  %v265 = vadd.f32 %v93, %v264
  %v266 = vpop.f32.mrf.mxu0
  %267 = vmatprep.mubr.f32.mxu0 0.0
  %268 = vmatmul.mubr.f32.gmra.mxu0 %v134
  %v269 = vpop.f32.mrf.mxu0
  %v270 = vadd.f32 %v94, %v269
  %v271 = vpop.f32.mrf.mxu0
  %272 = vmatprep.mubr.f32.mxu0 0.0
  %273 = vmatmul.mubr.f32.gmra.mxu0 %v137
  %v274 = vpop.f32.mrf.mxu0
  %v275 = vadd.f32 %v95, %v274
  %v276 = vpop.f32.mrf.mxu0
  %277 = vmatprep.mubr.f32.mxu0 0.0
  %278 = vmatmul.mubr.f32.gmra.mxu0 %v140
  %v279 = vpop.f32.mrf.mxu0
  %v280 = vadd.f32 %v96, %v279
  %v281 = vpop.f32.mrf.mxu0
  %282 = vmatprep.mubr.f32.mxu0 0.0
  %283 = vmatmul.mubr.f32.gmra.mxu0 %v143
  %v284 = vpop.f32.mrf.mxu0
  %v285 = vadd.f32 %v97, %v284
  %v286 = vpop.f32.mrf.mxu0
  %287 = vmatprep.mubr.f32.mxu0 0.0
  %288 = vmatmul.mubr.f32.gmra.mxu0 %v146
  %v289 = vpop.f32.mrf.mxu0
  %v290 = vadd.f32 %v98, %v289
  %v291 = vpop.f32.mrf.mxu0
  %292 = vdwg.mxu0
  %v293 = vld [vmem:[%s3] sm:$0xff]
  %v294 = vld [vmem:[%s3 + $0x8] sm:$0xff]
  %v295 = vld [vmem:[%s3 + $0x10] sm:$0xff]
  %v296 = vld [vmem:[%s3 + $0x18] sm:$0xff]
  %v297 = vld [vmem:[%s3 + $0x20] sm:$0xff]
  %v298 = vld [vmem:[%s3 + $0x28] sm:$0xff]
  %v299 = vld [vmem:[%s3 + $0x30] sm:$0xff]
  %v300 = vld [vmem:[%s3 + $0x38] sm:$0xff]
  %v301 = vld [vmem:[%s3 + $0x40] sm:$0xff]
  %v302 = vld [vmem:[%s3 + $0x48] sm:$0xff]
  %v303 = vld [vmem:[%s3 + $0x50] sm:$0xff]
  %v304 = vld [vmem:[%s3 + $0x58] sm:$0xff]
  %v305 = vld [vmem:[%s3 + $0x60] sm:$0xff]
  %v306 = vld [vmem:[%s3 + $0x68] sm:$0xff]
  %v307 = vld [vmem:[%s3 + $0x70] sm:$0xff]
  %v308 = vld [vmem:[%s3 + $0x78] sm:$0xff]
  %v309 = vld [vmem:[%s3 + $0x80] sm:$0xff]
  %v310 = vld [vmem:[%s3 + $0x88] sm:$0xff]
  %v311 = vld [vmem:[%s3 + $0x90] sm:$0xff]
  %v312 = vld [vmem:[%s3 + $0x98] sm:$0xff]
  %v313 = vld [vmem:[%s3 + $0xa0] sm:$0xff]
  %v314 = vld [vmem:[%s3 + $0xa8] sm:$0xff]
  %v315 = vld [vmem:[%s3 + $0xb0] sm:$0xff]
  %v316 = vld [vmem:[%s3 + $0xb8] sm:$0xff]
  %v317 = vld [vmem:[%s3 + $0xc0] sm:$0xff]
  %v318 = vld [vmem:[%s3 + $0xc8] sm:$0xff]
  %v319 = vld [vmem:[%s3 + $0xd0] sm:$0xff]
  %v320 = vld [vmem:[%s3 + $0xd8] sm:$0xff]
  %v321 = vld [vmem:[%s3 + $0xe0] sm:$0xff]
  %v322 = vld [vmem:[%s3 + $0xe8] sm:$0xff]
  %v323 = vld [vmem:[%s3 + $0xf0] sm:$0xff]
  %v324 = vld [vmem:[%s3 + $0xf8] sm:$0xff]
  %v325 = vld [vmem:[%s3 + $0x100] sm:$0xff]
  %v326 = vld [vmem:[%s3 + $0x108] sm:$0xff]
  %v327 = vld [vmem:[%s3 + $0x110] sm:$0xff]
  %v328 = vld [vmem:[%s3 + $0x118] sm:$0xff]
  %v329 = vld [vmem:[%s3 + $0x120] sm:$0xff]
  %v330 = vld [vmem:[%s3 + $0x128] sm:$0xff]
  %v331 = vld [vmem:[%s3 + $0x130] sm:$0xff]
  %v332 = vld [vmem:[%s3 + $0x138] sm:$0xff]
  %v333 = vld [vmem:[%s3 + $0x140] sm:$0xff]
  %v334 = vld [vmem:[%s3 + $0x148] sm:$0xff]
  %v335 = vld [vmem:[%s3 + $0x150] sm:$0xff]
  %v336 = vld [vmem:[%s3 + $0x158] sm:$0xff]
  %v337 = vld [vmem:[%s3 + $0x160] sm:$0xff]
  %v338 = vld [vmem:[%s3 + $0x168] sm:$0xff]
  %v339 = vld [vmem:[%s3 + $0x170] sm:$0xff]
  %v340 = vld [vmem:[%s3 + $0x178] sm:$0xff]
  %341 = vmatprep.subr.mxu0 %v339
  %342 = vmatpush1.msra.mxu0 %v338
  %343 = vmatprep.subr.mxu0 %v336
  %344 = vmatpush1.msra.mxu0 %v335
  %345 = vmatprep.subr.mxu0 %v333
  %346 = vmatpush1.msra.mxu0 %v332
  %347 = vmatprep.subr.mxu0 %v330
  %348 = vmatpush1.msra.mxu0 %v329
  %349 = vmatprep.subr.mxu0 %v327
  %350 = vmatpush1.msra.mxu0 %v326
  %351 = vmatprep.subr.mxu0 %v324
  %352 = vmatpush1.msra.mxu0 %v323
  %353 = vmatprep.subr.mxu0 %v321
  %354 = vmatpush1.msra.mxu0 %v320
  %355 = vmatprep.subr.mxu0 %v318
  %356 = vmatpush1.msra.mxu0 %v317
  %357 = vmatprep.subr.mxu0 %v315
  %358 = vmatpush1.msra.mxu0 %v314
  %359 = vmatprep.subr.mxu0 %v312
  %360 = vmatpush1.msra.mxu0 %v311
  %361 = vmatprep.subr.mxu0 %v309
  %362 = vmatpush1.msra.mxu0 %v308
  %363 = vmatprep.subr.mxu0 %v306
  %364 = vmatpush1.msra.mxu0 %v305
  %365 = vmatprep.subr.mxu0 %v303
  %366 = vmatpush1.msra.mxu0 %v302
  %367 = vmatprep.subr.mxu0 %v300
  %368 = vmatpush1.msra.mxu0 %v299
  %369 = vmatprep.subr.mxu0 %v297
  %370 = vmatpush1.msra.mxu0 %v296
  %371 = vmatprep.subr.mxu0 %v294
  %372 = vmatpush1.msra.mxu0 %v293
  %373 = vmatprep.subr.mxu0 0.0
  %374 = vmatpush2.msra.mxu0 0.0
  %375 = vmatprep.subr.mxu0 0.0
  %376 = vmatpush2.msra.mxu0 0.0
  %377 = vmatprep.subr.mxu0 0.0
  %378 = vmatpush2.msra.mxu0 0.0
  %379 = vmatprep.subr.mxu0 0.0
  %380 = vmatpush2.msra.mxu0 0.0
  %381 = vmatprep.subr.mxu0 0.0
  %382 = vmatpush2.msra.mxu0 0.0
  %383 = vmatprep.subr.mxu0 0.0
  %384 = vmatpush2.msra.mxu0 0.0
  %385 = vmatprep.subr.mxu0 0.0
  %386 = vmatpush2.msra.mxu0 0.0
  %387 = vmatprep.subr.mxu0 0.0
  %388 = vmatpush2.msra.mxu0 0.0
  %389 = vmatprep.subr.mxu0 0.0
  %390 = vmatpush2.msra.mxu0 0.0
  %391 = vmatprep.subr.mxu0 0.0
  %392 = vmatpush2.msra.mxu0 0.0
  %393 = vmatprep.subr.mxu0 0.0
  %394 = vmatpush2.msra.mxu0 0.0
  %395 = vmatprep.subr.mxu0 0.0
  %396 = vmatpush2.msra.mxu0 0.0
  %397 = vmatprep.subr.mxu0 0.0
  %398 = vmatpush2.msra.mxu0 0.0
  %399 = vmatprep.subr.mxu0 0.0
  %400 = vmatpush2.msra.mxu0 0.0
  %401 = vmatprep.subr.mxu0 0.0
  %402 = vmatpush2.msra.mxu0 0.0
  %403 = vmatprep.subr.mxu0 0.0
  %404 = vmatpush2.msra.mxu0 0.0
  %405 = vmatprep.mubr.f32.mxu0 0.0
  %406 = vmatmul.mubr.f32.gmra.mxu0 %v215
  %v407 = vpop.f32.mrf.mxu0
  %v408 = vadd.f32 0.0, %v407
  %v409 = vpop.f32.mrf.mxu0
  %v410 = vadd.f32 0.0, %v409
  %411 = vmatprep.mubr.f32.mxu0 0.0
  %412 = vmatmul.mubr.f32.gmra.mxu0 %v220
  %v413 = vpop.f32.mrf.mxu0
  %v414 = vadd.f32 0.0, %v413
  %v415 = vpop.f32.mrf.mxu0
  %v416 = vadd.f32 0.0, %v415
  %417 = vmatprep.mubr.f32.mxu0 0.0
  %418 = vmatmul.mubr.f32.gmra.mxu0 %v225
  %v419 = vpop.f32.mrf.mxu0
  %v420 = vadd.f32 0.0, %v419
  %v421 = vpop.f32.mrf.mxu0
  %v422 = vadd.f32 0.0, %v421
  %423 = vmatprep.mubr.f32.mxu0 0.0
  %424 = vmatmul.mubr.f32.gmra.mxu0 %v230
  %v425 = vpop.f32.mrf.mxu0
  %v426 = vadd.f32 0.0, %v425
  %v427 = vpop.f32.mrf.mxu0
  %v428 = vadd.f32 0.0, %v427
  %429 = vmatprep.mubr.f32.mxu0 0.0
  %430 = vmatmul.mubr.f32.gmra.mxu0 %v235
  %v431 = vpop.f32.mrf.mxu0
  %v432 = vadd.f32 0.0, %v431
  %v433 = vpop.f32.mrf.mxu0
  %v434 = vadd.f32 0.0, %v433
  %435 = vmatprep.mubr.f32.mxu0 0.0
  %436 = vmatmul.mubr.f32.gmra.mxu0 %v240
  %v437 = vpop.f32.mrf.mxu0
  %v438 = vadd.f32 0.0, %v437
  %v439 = vpop.f32.mrf.mxu0
  %v440 = vadd.f32 0.0, %v439
  %441 = vmatprep.mubr.f32.mxu0 0.0
  %442 = vmatmul.mubr.f32.gmra.mxu0 %v245
  %v443 = vpop.f32.mrf.mxu0
  %v444 = vadd.f32 0.0, %v443
  %v445 = vpop.f32.mrf.mxu0
  %v446 = vadd.f32 0.0, %v445
  %447 = vmatprep.mubr.f32.mxu0 0.0
  %448 = vmatmul.mubr.f32.gmra.mxu0 %v250
  %v449 = vpop.f32.mrf.mxu0
  %v450 = vadd.f32 0.0, %v449
  %v451 = vpop.f32.mrf.mxu0
  %v452 = vadd.f32 0.0, %v451
  %453 = vmatprep.mubr.f32.mxu0 0.0
  %454 = vmatmul.mubr.f32.gmra.mxu0 %v255
  %v455 = vpop.f32.mrf.mxu0
  %v456 = vadd.f32 0.0, %v455
  %v457 = vpop.f32.mrf.mxu0
  %v458 = vadd.f32 0.0, %v457
  %459 = vmatprep.mubr.f32.mxu0 0.0
  %460 = vmatmul.mubr.f32.gmra.mxu0 %v260
  %v461 = vpop.f32.mrf.mxu0
  %v462 = vadd.f32 0.0, %v461
  %v463 = vpop.f32.mrf.mxu0
  %v464 = vadd.f32 0.0, %v463
  %465 = vmatprep.mubr.f32.mxu0 0.0
  %466 = vmatmul.mubr.f32.gmra.mxu0 %v265
  %v467 = vpop.f32.mrf.mxu0
  %v468 = vadd.f32 0.0, %v467
  %v469 = vpop.f32.mrf.mxu0
  %v470 = vadd.f32 0.0, %v469
  %471 = vmatprep.mubr.f32.mxu0 0.0
  %472 = vmatmul.mubr.f32.gmra.mxu0 %v270
  %v473 = vpop.f32.mrf.mxu0
  %v474 = vadd.f32 0.0, %v473
  %v475 = vpop.f32.mrf.mxu0
  %v476 = vadd.f32 0.0, %v475
  %477 = vmatprep.mubr.f32.mxu0 0.0
  %478 = vmatmul.mubr.f32.gmra.mxu0 %v275
  %v479 = vpop.f32.mrf.mxu0
  %v480 = vadd.f32 0.0, %v479
  %v481 = vpop.f32.mrf.mxu0
  %v482 = vadd.f32 0.0, %v481
  %483 = vmatprep.mubr.f32.mxu0 0.0
  %484 = vmatmul.mubr.f32.gmra.mxu0 %v280
  %v485 = vpop.f32.mrf.mxu0
  %v486 = vadd.f32 0.0, %v485
  %v487 = vpop.f32.mrf.mxu0
  %v488 = vadd.f32 0.0, %v487
  %489 = vmatprep.mubr.f32.mxu0 0.0
  %490 = vmatmul.mubr.f32.gmra.mxu0 %v285
  %v491 = vpop.f32.mrf.mxu0
  %v492 = vadd.f32 0.0, %v491
  %v493 = vpop.f32.mrf.mxu0
  %v494 = vadd.f32 0.0, %v493
  %495 = vmatprep.mubr.f32.mxu0 0.0
  %496 = vmatmul.mubr.f32.gmra.mxu0 %v290
  %v497 = vpop.f32.mrf.mxu0
  %v498 = vadd.f32 0.0, %v497
  %v499 = vpop.f32.mrf.mxu0
  %v500 = vadd.f32 0.0, %v499
  %501 = vdwg.mxu0
  %502 = vmatprep.subr.mxu0 0.0
  %503 = vmatpush1.msra.mxu0 %v340
  %504 = vmatprep.subr.mxu0 0.0
  %505 = vmatpush1.msra.mxu0 %v337
  %506 = vmatprep.subr.mxu0 0.0
  %507 = vmatpush1.msra.mxu0 %v334
  %508 = vmatprep.subr.mxu0 0.0
  %509 = vmatpush1.msra.mxu0 %v331
  %510 = vmatprep.subr.mxu0 0.0
  %511 = vmatpush1.msra.mxu0 %v328
  %512 = vmatprep.subr.mxu0 0.0
  %513 = vmatpush1.msra.mxu0 %v325
  %514 = vmatprep.subr.mxu0 0.0
  %515 = vmatpush1.msra.mxu0 %v322
  %516 = vmatprep.subr.mxu0 0.0
  %517 = vmatpush1.msra.mxu0 %v319
  %518 = vmatprep.subr.mxu0 0.0
  %519 = vmatpush1.msra.mxu0 %v316
  %520 = vmatprep.subr.mxu0 0.0
  %521 = vmatpush1.msra.mxu0 %v313
  %522 = vmatprep.subr.mxu0 0.0
  %523 = vmatpush1.msra.mxu0 %v310
  %524 = vmatprep.subr.mxu0 0.0
  %525 = vmatpush1.msra.mxu0 %v307
  %526 = vmatprep.subr.mxu0 0.0
  %527 = vmatpush1.msra.mxu0 %v304
  %528 = vmatprep.subr.mxu0 0.0
  %529 = vmatpush1.msra.mxu0 %v301
  %530 = vmatprep.subr.mxu0 0.0
  %531 = vmatpush1.msra.mxu0 %v298
  %532 = vmatprep.subr.mxu0 0.0
  %533 = vmatpush1.msra.mxu0 %v295
  %534 = vmatprep.subr.mxu0 0.0
  %535 = vmatpush2.msra.mxu0 0.0
  %536 = vmatprep.subr.mxu0 0.0
  %537 = vmatpush2.msra.mxu0 0.0
  %538 = vmatprep.subr.mxu0 0.0
  %539 = vmatpush2.msra.mxu0 0.0
  %540 = vmatprep.subr.mxu0 0.0
  %541 = vmatpush2.msra.mxu0 0.0
  %542 = vmatprep.subr.mxu0 0.0
  %543 = vmatpush2.msra.mxu0 0.0
  %544 = vmatprep.subr.mxu0 0.0
  %545 = vmatpush2.msra.mxu0 0.0
  %546 = vmatprep.subr.mxu0 0.0
  %547 = vmatpush2.msra.mxu0 0.0
  %548 = vmatprep.subr.mxu0 0.0
  %549 = vmatpush2.msra.mxu0 0.0
  %550 = vmatprep.subr.mxu0 0.0
  %551 = vmatpush2.msra.mxu0 0.0
  %552 = vmatprep.subr.mxu0 0.0
  %553 = vmatpush2.msra.mxu0 0.0
  %554 = vmatprep.subr.mxu0 0.0
  %555 = vmatpush2.msra.mxu0 0.0
  %556 = vmatprep.subr.mxu0 0.0
  %557 = vmatpush2.msra.mxu0 0.0
  %558 = vmatprep.subr.mxu0 0.0
  %559 = vmatpush2.msra.mxu0 0.0
  %560 = vmatprep.subr.mxu0 0.0
  %561 = vmatpush2.msra.mxu0 0.0
  %562 = vmatprep.subr.mxu0 0.0
  %563 = vmatpush2.msra.mxu0 0.0
  %564 = vmatprep.subr.mxu0 0.0
  %565 = vmatpush2.msra.mxu0 0.0
  %566 = vmatprep.mubr.f32.mxu0 0.0
  %567 = vmatmul.mubr.f32.gmra.mxu0 %v215
  %v568 = vpop.f32.mrf.mxu0
  %v569 = vadd.f32 0.0, %v568
  %v570 = vpop.f32.mrf.mxu0
  %571 = vmatprep.mubr.f32.mxu0 0.0
  %572 = vmatmul.mubr.f32.gmra.mxu0 %v220
  %v573 = vpop.f32.mrf.mxu0
  %v574 = vadd.f32 0.0, %v573
  %v575 = vpop.f32.mrf.mxu0
  %576 = vmatprep.mubr.f32.mxu0 0.0
  %577 = vmatmul.mubr.f32.gmra.mxu0 %v225
  %v578 = vpop.f32.mrf.mxu0
  %v579 = vadd.f32 0.0, %v578
  %v580 = vpop.f32.mrf.mxu0
  %581 = vmatprep.mubr.f32.mxu0 0.0
  %582 = vmatmul.mubr.f32.gmra.mxu0 %v230
  %v583 = vpop.f32.mrf.mxu0
  %v584 = vadd.f32 0.0, %v583
  %v585 = vpop.f32.mrf.mxu0
  %586 = vmatprep.mubr.f32.mxu0 0.0
  %587 = vmatmul.mubr.f32.gmra.mxu0 %v235
  %v588 = vpop.f32.mrf.mxu0
  %v589 = vadd.f32 0.0, %v588
  %v590 = vpop.f32.mrf.mxu0
  %591 = vmatprep.mubr.f32.mxu0 0.0
  %592 = vmatmul.mubr.f32.gmra.mxu0 %v240
  %v593 = vpop.f32.mrf.mxu0
  %v594 = vadd.f32 0.0, %v593
  %v595 = vpop.f32.mrf.mxu0
  %596 = vmatprep.mubr.f32.mxu0 0.0
  %597 = vmatmul.mubr.f32.gmra.mxu0 %v245
  %v598 = vpop.f32.mrf.mxu0
  %v599 = vadd.f32 0.0, %v598
  %v600 = vpop.f32.mrf.mxu0
  %601 = vmatprep.mubr.f32.mxu0 0.0
  %602 = vmatmul.mubr.f32.gmra.mxu0 %v250
  %v603 = vpop.f32.mrf.mxu0
  %v604 = vadd.f32 0.0, %v603
  %v605 = vpop.f32.mrf.mxu0
  %606 = vmatprep.mubr.f32.mxu0 0.0
  %607 = vmatmul.mubr.f32.gmra.mxu0 %v255
  %v608 = vpop.f32.mrf.mxu0
  %v609 = vadd.f32 0.0, %v608
  %v610 = vpop.f32.mrf.mxu0
  %611 = vmatprep.mubr.f32.mxu0 0.0
  %612 = vmatmul.mubr.f32.gmra.mxu0 %v260
  %v613 = vpop.f32.mrf.mxu0
  %v614 = vadd.f32 0.0, %v613
  %v615 = vpop.f32.mrf.mxu0
  %616 = vmatprep.mubr.f32.mxu0 0.0
  %617 = vmatmul.mubr.f32.gmra.mxu0 %v265
  %v618 = vpop.f32.mrf.mxu0
  %v619 = vadd.f32 0.0, %v618
  %v620 = vpop.f32.mrf.mxu0
  %621 = vmatprep.mubr.f32.mxu0 0.0
  %622 = vmatmul.mubr.f32.gmra.mxu0 %v270
  %v623 = vpop.f32.mrf.mxu0
  %v624 = vadd.f32 0.0, %v623
  %v625 = vpop.f32.mrf.mxu0
  %626 = vmatprep.mubr.f32.mxu0 0.0
  %627 = vmatmul.mubr.f32.gmra.mxu0 %v275
  %v628 = vpop.f32.mrf.mxu0
  %v629 = vadd.f32 0.0, %v628
  %v630 = vpop.f32.mrf.mxu0
  %631 = vmatprep.mubr.f32.mxu0 0.0
  %632 = vmatmul.mubr.f32.gmra.mxu0 %v280
  %v633 = vpop.f32.mrf.mxu0
  %v634 = vadd.f32 0.0, %v633
  %v635 = vpop.f32.mrf.mxu0
  %636 = vmatprep.mubr.f32.mxu0 0.0
  %637 = vmatmul.mubr.f32.gmra.mxu0 %v285
  %v638 = vpop.f32.mrf.mxu0
  %v639 = vadd.f32 0.0, %v638
  %v640 = vpop.f32.mrf.mxu0
  %641 = vmatprep.mubr.f32.mxu0 0.0
  %642 = vmatmul.mubr.f32.gmra.mxu0 %v290
  %v643 = vpop.f32.mrf.mxu0
  %v644 = vadd.f32 0.0, %v643
  %v645 = vpop.f32.mrf.mxu0
  %646 = vdwg.mxu0
  %v647 = vld [vmem:[%s8] ss:$8 sm:$0x7]
  %v649 = vlaneseq
  %v650 = vshrl.u32 %v649, 7
  %v651 = vsub.s32 0, %v650
  %v652 = vrot.slane %v647, %v651
  %v653 = vlaneseq
  %v654 = vshrl.u32 %v653, 7
  %v655 = vsub.s32 1, %v654
  %v656 = vrot.slane %v647, %v655
  %v657 = vlaneseq
  %v658 = vshrl.u32 %v657, 7
  %v659 = vsub.s32 2, %v658
  %v660 = vrot.slane %v647, %v659
  %v664 = vmul.f32 %v408, %v652
  %v665 = vmul.f32 %v410, %v656
  %v666 = vmul.f32 %v569, %v660
  %v667 = vmul.f32 %v414, %v652
  %v668 = vmul.f32 %v416, %v656
  %v669 = vmul.f32 %v574, %v660
  %v670 = vmul.f32 %v420, %v652
  %v671 = vmul.f32 %v422, %v656
  %v672 = vmul.f32 %v579, %v660
  %v673 = vmul.f32 %v426, %v652
  %v674 = vmul.f32 %v428, %v656
  %v675 = vmul.f32 %v584, %v660
  %v676 = vmul.f32 %v432, %v652
  %v677 = vmul.f32 %v434, %v656
  %v678 = vmul.f32 %v589, %v660
  %v679 = vmul.f32 %v438, %v652
  %v680 = vmul.f32 %v440, %v656
  %v681 = vmul.f32 %v594, %v660
  %v682 = vmul.f32 %v444, %v652
  %v683 = vmul.f32 %v446, %v656
  %v684 = vmul.f32 %v599, %v660
  %v685 = vmul.f32 %v450, %v652
  %v686 = vmul.f32 %v452, %v656
  %v687 = vmul.f32 %v604, %v660
  %v688 = vmul.f32 %v456, %v652
  %v689 = vmul.f32 %v458, %v656
  %v690 = vmul.f32 %v609, %v660
  %v691 = vmul.f32 %v462, %v652
  %v692 = vmul.f32 %v464, %v656
  %v693 = vmul.f32 %v614, %v660
  %v694 = vmul.f32 %v468, %v652
  %v695 = vmul.f32 %v470, %v656
  %v696 = vmul.f32 %v619, %v660
  %v697 = vmul.f32 %v474, %v652
  %v698 = vmul.f32 %v476, %v656
  %v699 = vmul.f32 %v624, %v660
  %v700 = vmul.f32 %v480, %v652
  %v701 = vmul.f32 %v482, %v656
  %v702 = vmul.f32 %v629, %v660
  %v703 = vmul.f32 %v486, %v652
  %v704 = vmul.f32 %v488, %v656
  %v705 = vmul.f32 %v634, %v660
  %v706 = vmul.f32 %v492, %v652
  %v707 = vmul.f32 %v494, %v656
  %v708 = vmul.f32 %v639, %v660
  %v709 = vmul.f32 %v498, %v652
  %v710 = vmul.f32 %v500, %v656
  %v711 = vmul.f32 %v644, %v660
  %s712 = scalar_lea.vmem %s8, 1
  %v713 = vld [vmem:[%s712] ss:$8 sm:$0x7]
  %v715 = vlaneseq
  %v716 = vshrl.u32 %v715, 7
  %v717 = vsub.s32 0, %v716
  %v718 = vrot.slane %v713, %v717
  %v719 = vlaneseq
  %v720 = vshrl.u32 %v719, 7
  %v721 = vsub.s32 1, %v720
  %v722 = vrot.slane %v713, %v721
  %v723 = vlaneseq
  %v724 = vshrl.u32 %v723, 7
  %v725 = vsub.s32 2, %v724
  %v726 = vrot.slane %v713, %v725
  %v730 = vadd.f32 %v664, %v718
  %v731 = vadd.f32 %v665, %v722
  %v732 = vadd.f32 %v666, %v726
  %v733 = vadd.f32 %v667, %v718
  %v734 = vadd.f32 %v668, %v722
  %v735 = vadd.f32 %v669, %v726
  %v736 = vadd.f32 %v670, %v718
  %v737 = vadd.f32 %v671, %v722
  %v738 = vadd.f32 %v672, %v726
  %v739 = vadd.f32 %v673, %v718
  %v740 = vadd.f32 %v674, %v722
  %v741 = vadd.f32 %v675, %v726
  %v742 = vadd.f32 %v676, %v718
  %v743 = vadd.f32 %v677, %v722
  %v744 = vadd.f32 %v678, %v726
  %v745 = vadd.f32 %v679, %v718
  %v746 = vadd.f32 %v680, %v722
  %v747 = vadd.f32 %v681, %v726
  %v748 = vadd.f32 %v682, %v718
  %v749 = vadd.f32 %v683, %v722
  %v750 = vadd.f32 %v684, %v726
  %v751 = vadd.f32 %v685, %v718
  %v752 = vadd.f32 %v686, %v722
  %v753 = vadd.f32 %v687, %v726
  %v754 = vadd.f32 %v688, %v718
  %v755 = vadd.f32 %v689, %v722
  %v756 = vadd.f32 %v690, %v726
  %v757 = vadd.f32 %v691, %v718
  %v758 = vadd.f32 %v692, %v722
  %v759 = vadd.f32 %v693, %v726
  %v760 = vadd.f32 %v694, %v718
  %v761 = vadd.f32 %v695, %v722
  %v762 = vadd.f32 %v696, %v726
  %v763 = vadd.f32 %v697, %v718
  %v764 = vadd.f32 %v698, %v722
  %v765 = vadd.f32 %v699, %v726
  %v766 = vadd.f32 %v700, %v718
  %v767 = vadd.f32 %v701, %v722
  %v768 = vadd.f32 %v702, %v726
  %v769 = vadd.f32 %v703, %v718
  %v770 = vadd.f32 %v704, %v722
  %v771 = vadd.f32 %v705, %v726
  %v772 = vadd.f32 %v706, %v718
  %v773 = vadd.f32 %v707, %v722
  %v774 = vadd.f32 %v708, %v726
  %v775 = vadd.f32 %v709, %v718
  %v776 = vadd.f32 %v710, %v722
  %v777 = vadd.f32 %v711, %v726
  %v778 = vmax.f32 %v730, 0.0
  %v779 = vmax.f32 %v731, 0.0
  %v780 = vmax.f32 %v732, 0.0
  %v781 = vmax.f32 %v733, 0.0
  %v782 = vmax.f32 %v734, 0.0
  %v783 = vmax.f32 %v735, 0.0
  %v784 = vmax.f32 %v736, 0.0
  %v785 = vmax.f32 %v737, 0.0
  %v786 = vmax.f32 %v738, 0.0
  %v787 = vmax.f32 %v739, 0.0
  %v788 = vmax.f32 %v740, 0.0
  %v789 = vmax.f32 %v741, 0.0
  %v790 = vmax.f32 %v742, 0.0
  %v791 = vmax.f32 %v743, 0.0
  %v792 = vmax.f32 %v744, 0.0
  %v793 = vmax.f32 %v745, 0.0
  %v794 = vmax.f32 %v746, 0.0
  %v795 = vmax.f32 %v747, 0.0
  %v796 = vmax.f32 %v748, 0.0
  %v797 = vmax.f32 %v749, 0.0
  %v798 = vmax.f32 %v750, 0.0
  %v799 = vmax.f32 %v751, 0.0
  %v800 = vmax.f32 %v752, 0.0
  %v801 = vmax.f32 %v753, 0.0
  %v802 = vmax.f32 %v754, 0.0
  %v803 = vmax.f32 %v755, 0.0
  %v804 = vmax.f32 %v756, 0.0
  %v805 = vmax.f32 %v757, 0.0
  %v806 = vmax.f32 %v758, 0.0
  %v807 = vmax.f32 %v759, 0.0
  %v808 = vmax.f32 %v760, 0.0
  %v809 = vmax.f32 %v761, 0.0
  %v810 = vmax.f32 %v762, 0.0
  %v811 = vmax.f32 %v763, 0.0
  %v812 = vmax.f32 %v764, 0.0
  %v813 = vmax.f32 %v765, 0.0
  %v814 = vmax.f32 %v766, 0.0
  %v815 = vmax.f32 %v767, 0.0
  %v816 = vmax.f32 %v768, 0.0
  %v817 = vmax.f32 %v769, 0.0
  %v818 = vmax.f32 %v770, 0.0
  %v819 = vmax.f32 %v771, 0.0
  %v820 = vmax.f32 %v772, 0.0
  %v821 = vmax.f32 %v773, 0.0
  %v822 = vmax.f32 %v774, 0.0
  %v823 = vmax.f32 %v775, 0.0
  %v824 = vmax.f32 %v776, 0.0
  %v825 = vmax.f32 %v777, 0.0
  %v826 = vld [vmem:[%s4] sm:$0xff]
  %v827 = vld [vmem:[%s4 + $0x8] sm:$0xff]
  %v828 = vld [vmem:[%s4 + $0x10] sm:$0xff]
  %v829 = vld [vmem:[%s4 + $0x18] sm:$0xff]
  %v830 = vld [vmem:[%s4 + $0x20] sm:$0xff]
  %v831 = vld [vmem:[%s4 + $0x28] sm:$0xff]
  %v832 = vld [vmem:[%s4 + $0x30] sm:$0xff]
  %v833 = vld [vmem:[%s4 + $0x38] sm:$0xff]
  %v834 = vld [vmem:[%s4 + $0x40] sm:$0xff]
  %v835 = vld [vmem:[%s4 + $0x48] sm:$0xff]
  %v836 = vld [vmem:[%s4 + $0x50] sm:$0xff]
  %v837 = vld [vmem:[%s4 + $0x58] sm:$0xff]
  %v838 = vld [vmem:[%s4 + $0x60] sm:$0xff]
  %v839 = vld [vmem:[%s4 + $0x68] sm:$0xff]
  %v840 = vld [vmem:[%s4 + $0x70] sm:$0xff]
  %v841 = vld [vmem:[%s4 + $0x78] sm:$0xff]
  %v842 = vld [vmem:[%s4 + $0x80] sm:$0xff]
  %v843 = vld [vmem:[%s4 + $0x88] sm:$0xff]
  %v844 = vld [vmem:[%s4 + $0x90] sm:$0xff]
  %v845 = vld [vmem:[%s4 + $0x98] sm:$0xff]
  %v846 = vld [vmem:[%s4 + $0xa0] sm:$0xff]
  %v847 = vld [vmem:[%s4 + $0xa8] sm:$0xff]
  %v848 = vld [vmem:[%s4 + $0xb0] sm:$0xff]
  %v849 = vld [vmem:[%s4 + $0xb8] sm:$0xff]
  %850 = vmatprep.subr.mxu0 %v824
  %851 = vmatpush1.msra.mxu0 %v823
  %852 = vmatprep.subr.mxu0 %v821
  %853 = vmatpush1.msra.mxu0 %v820
  %854 = vmatprep.subr.mxu0 %v818
  %855 = vmatpush1.msra.mxu0 %v817
  %856 = vmatprep.subr.mxu0 %v815
  %857 = vmatpush1.msra.mxu0 %v814
  %858 = vmatprep.subr.mxu0 %v812
  %859 = vmatpush1.msra.mxu0 %v811
  %860 = vmatprep.subr.mxu0 %v809
  %861 = vmatpush1.msra.mxu0 %v808
  %862 = vmatprep.subr.mxu0 %v806
  %863 = vmatpush1.msra.mxu0 %v805
  %864 = vmatprep.subr.mxu0 %v803
  %865 = vmatpush1.msra.mxu0 %v802
  %866 = vmatprep.subr.mxu0 %v800
  %867 = vmatpush1.msra.mxu0 %v799
  %868 = vmatprep.subr.mxu0 %v797
  %869 = vmatpush1.msra.mxu0 %v796
  %870 = vmatprep.subr.mxu0 %v794
  %871 = vmatpush1.msra.mxu0 %v793
  %872 = vmatprep.subr.mxu0 %v791
  %873 = vmatpush1.msra.mxu0 %v790
  %874 = vmatprep.subr.mxu0 %v788
  %875 = vmatpush1.msra.mxu0 %v787
  %876 = vmatprep.subr.mxu0 %v785
  %877 = vmatpush1.msra.mxu0 %v784
  %878 = vmatprep.subr.mxu0 %v782
  %879 = vmatpush1.msra.mxu0 %v781
  %880 = vmatprep.subr.mxu0 %v779
  %881 = vmatpush1.msra.mxu0 %v778
  %882 = vmatprep.subr.mxu0 0.0
  %883 = vmatpush2.msra.mxu0 0.0
  %884 = vmatprep.subr.mxu0 0.0
  %885 = vmatpush2.msra.mxu0 0.0
  %886 = vmatprep.subr.mxu0 0.0
  %887 = vmatpush2.msra.mxu0 0.0
  %888 = vmatprep.subr.mxu0 0.0
  %889 = vmatpush2.msra.mxu0 0.0
  %890 = vmatprep.subr.mxu0 0.0
  %891 = vmatpush2.msra.mxu0 0.0
  %892 = vmatprep.subr.mxu0 0.0
  %893 = vmatpush2.msra.mxu0 0.0
  %894 = vmatprep.subr.mxu0 0.0
  %895 = vmatpush2.msra.mxu0 0.0
  %896 = vmatprep.subr.mxu0 0.0
  %897 = vmatpush2.msra.mxu0 0.0
  %898 = vmatprep.subr.mxu0 0.0
  %899 = vmatpush2.msra.mxu0 0.0
  %900 = vmatprep.subr.mxu0 0.0
  %901 = vmatpush2.msra.mxu0 0.0
  %902 = vmatprep.subr.mxu0 0.0
  %903 = vmatpush2.msra.mxu0 0.0
  %904 = vmatprep.subr.mxu0 0.0
  %905 = vmatpush2.msra.mxu0 0.0
  %906 = vmatprep.subr.mxu0 0.0
  %907 = vmatpush2.msra.mxu0 0.0
  %908 = vmatprep.subr.mxu0 0.0
  %909 = vmatpush2.msra.mxu0 0.0
  %910 = vmatprep.subr.mxu0 0.0
  %911 = vmatpush2.msra.mxu0 0.0
  %912 = vmatprep.subr.mxu0 0.0
  %913 = vmatpush2.msra.mxu0 0.0
  %914 = vmatprep.mubr.f32.mxu0 0.0
  %915 = vmatmul.mubr.f32.gmra.mxu0 %v826
  %v916 = vpop.f32.mrf.mxu0
  %v917 = vadd.f32 0.0, %v916
  %v918 = vpop.f32.mrf.mxu0
  %v919 = vadd.f32 0.0, %v918
  %920 = vmatprep.mubr.f32.mxu0 0.0
  %921 = vmatmul.mubr.f32.gmra.mxu0 %v827
  %v922 = vpop.f32.mrf.mxu0
  %v923 = vadd.f32 0.0, %v922
  %v924 = vpop.f32.mrf.mxu0
  %v925 = vadd.f32 0.0, %v924
  %926 = vmatprep.mubr.f32.mxu0 0.0
  %927 = vmatmul.mubr.f32.gmra.mxu0 %v828
  %v928 = vpop.f32.mrf.mxu0
  %v929 = vadd.f32 0.0, %v928
  %v930 = vpop.f32.mrf.mxu0
  %v931 = vadd.f32 0.0, %v930
  %932 = vmatprep.mubr.f32.mxu0 0.0
  %933 = vmatmul.mubr.f32.gmra.mxu0 %v829
  %v934 = vpop.f32.mrf.mxu0
  %v935 = vadd.f32 0.0, %v934
  %v936 = vpop.f32.mrf.mxu0
  %v937 = vadd.f32 0.0, %v936
  %938 = vmatprep.mubr.f32.mxu0 0.0
  %939 = vmatmul.mubr.f32.gmra.mxu0 %v830
  %v940 = vpop.f32.mrf.mxu0
  %v941 = vadd.f32 0.0, %v940
  %v942 = vpop.f32.mrf.mxu0
  %v943 = vadd.f32 0.0, %v942
  %944 = vmatprep.mubr.f32.mxu0 0.0
  %945 = vmatmul.mubr.f32.gmra.mxu0 %v831
  %v946 = vpop.f32.mrf.mxu0
  %v947 = vadd.f32 0.0, %v946
  %v948 = vpop.f32.mrf.mxu0
  %v949 = vadd.f32 0.0, %v948
  %950 = vmatprep.mubr.f32.mxu0 0.0
  %951 = vmatmul.mubr.f32.gmra.mxu0 %v832
  %v952 = vpop.f32.mrf.mxu0
  %v953 = vadd.f32 0.0, %v952
  %v954 = vpop.f32.mrf.mxu0
  %v955 = vadd.f32 0.0, %v954
  %956 = vmatprep.mubr.f32.mxu0 0.0
  %957 = vmatmul.mubr.f32.gmra.mxu0 %v833
  %v958 = vpop.f32.mrf.mxu0
  %v959 = vadd.f32 0.0, %v958
  %v960 = vpop.f32.mrf.mxu0
  %v961 = vadd.f32 0.0, %v960
  %962 = vmatprep.mubr.f32.mxu0 0.0
  %963 = vmatmul.mubr.f32.gmra.mxu0 %v834
  %v964 = vpop.f32.mrf.mxu0
  %v965 = vadd.f32 0.0, %v964
  %v966 = vpop.f32.mrf.mxu0
  %v967 = vadd.f32 0.0, %v966
  %968 = vmatprep.mubr.f32.mxu0 0.0
  %969 = vmatmul.mubr.f32.gmra.mxu0 %v835
  %v970 = vpop.f32.mrf.mxu0
  %v971 = vadd.f32 0.0, %v970
  %v972 = vpop.f32.mrf.mxu0
  %v973 = vadd.f32 0.0, %v972
  %974 = vmatprep.mubr.f32.mxu0 0.0
  %975 = vmatmul.mubr.f32.gmra.mxu0 %v836
  %v976 = vpop.f32.mrf.mxu0
  %v977 = vadd.f32 0.0, %v976
  %v978 = vpop.f32.mrf.mxu0
  %v979 = vadd.f32 0.0, %v978
  %980 = vmatprep.mubr.f32.mxu0 0.0
  %981 = vmatmul.mubr.f32.gmra.mxu0 %v837
  %v982 = vpop.f32.mrf.mxu0
  %v983 = vadd.f32 0.0, %v982
  %v984 = vpop.f32.mrf.mxu0
  %v985 = vadd.f32 0.0, %v984
  %986 = vmatprep.mubr.f32.mxu0 0.0
  %987 = vmatmul.mubr.f32.gmra.mxu0 %v838
  %v988 = vpop.f32.mrf.mxu0
  %v989 = vadd.f32 0.0, %v988
  %v990 = vpop.f32.mrf.mxu0
  %v991 = vadd.f32 0.0, %v990
  %992 = vmatprep.mubr.f32.mxu0 0.0
  %993 = vmatmul.mubr.f32.gmra.mxu0 %v839
  %v994 = vpop.f32.mrf.mxu0
  %v995 = vadd.f32 0.0, %v994
  %v996 = vpop.f32.mrf.mxu0
  %v997 = vadd.f32 0.0, %v996
  %998 = vmatprep.mubr.f32.mxu0 0.0
  %999 = vmatmul.mubr.f32.gmra.mxu0 %v840
  %v1000 = vpop.f32.mrf.mxu0
  %v1001 = vadd.f32 0.0, %v1000
  %v1002 = vpop.f32.mrf.mxu0
  %v1003 = vadd.f32 0.0, %v1002
  %1004 = vmatprep.mubr.f32.mxu0 0.0
  %1005 = vmatmul.mubr.f32.gmra.mxu0 %v841
  %v1006 = vpop.f32.mrf.mxu0
  %v1007 = vadd.f32 0.0, %v1006
  %v1008 = vpop.f32.mrf.mxu0
  %v1009 = vadd.f32 0.0, %v1008
  %1010 = vmatprep.mubr.f32.mxu0 0.0
  %1011 = vmatmul.mubr.f32.gmra.mxu0 %v842
  %v1012 = vpop.f32.mrf.mxu0
  %v1013 = vadd.f32 0.0, %v1012
  %v1014 = vpop.f32.mrf.mxu0
  %v1015 = vadd.f32 0.0, %v1014
  %1016 = vmatprep.mubr.f32.mxu0 0.0
  %1017 = vmatmul.mubr.f32.gmra.mxu0 %v843
  %v1018 = vpop.f32.mrf.mxu0
  %v1019 = vadd.f32 0.0, %v1018
  %v1020 = vpop.f32.mrf.mxu0
  %v1021 = vadd.f32 0.0, %v1020
  %1022 = vmatprep.mubr.f32.mxu0 0.0
  %1023 = vmatmul.mubr.f32.gmra.mxu0 %v844
  %v1024 = vpop.f32.mrf.mxu0
  %v1025 = vadd.f32 0.0, %v1024
  %v1026 = vpop.f32.mrf.mxu0
  %v1027 = vadd.f32 0.0, %v1026
  %1028 = vmatprep.mubr.f32.mxu0 0.0
  %1029 = vmatmul.mubr.f32.gmra.mxu0 %v845
  %v1030 = vpop.f32.mrf.mxu0
  %v1031 = vadd.f32 0.0, %v1030
  %v1032 = vpop.f32.mrf.mxu0
  %v1033 = vadd.f32 0.0, %v1032
  %1034 = vmatprep.mubr.f32.mxu0 0.0
  %1035 = vmatmul.mubr.f32.gmra.mxu0 %v846
  %v1036 = vpop.f32.mrf.mxu0
  %v1037 = vadd.f32 0.0, %v1036
  %v1038 = vpop.f32.mrf.mxu0
  %v1039 = vadd.f32 0.0, %v1038
  %1040 = vmatprep.mubr.f32.mxu0 0.0
  %1041 = vmatmul.mubr.f32.gmra.mxu0 %v847
  %v1042 = vpop.f32.mrf.mxu0
  %v1043 = vadd.f32 0.0, %v1042
  %v1044 = vpop.f32.mrf.mxu0
  %v1045 = vadd.f32 0.0, %v1044
  %1046 = vmatprep.mubr.f32.mxu0 0.0
  %1047 = vmatmul.mubr.f32.gmra.mxu0 %v848
  %v1048 = vpop.f32.mrf.mxu0
  %v1049 = vadd.f32 0.0, %v1048
  %v1050 = vpop.f32.mrf.mxu0
  %v1051 = vadd.f32 0.0, %v1050
  %1052 = vmatprep.mubr.f32.mxu0 0.0
  %1053 = vmatmul.mubr.f32.gmra.mxu0 %v849
  %v1054 = vpop.f32.mrf.mxu0
  %v1055 = vadd.f32 0.0, %v1054
  %v1056 = vpop.f32.mrf.mxu0
  %v1057 = vadd.f32 0.0, %v1056
  %1058 = vdwg.mxu0
  %1059 = vmatprep.subr.mxu0 0.0
  %1060 = vmatpush1.msra.mxu0 %v825
  %1061 = vmatprep.subr.mxu0 0.0
  %1062 = vmatpush1.msra.mxu0 %v822
  %1063 = vmatprep.subr.mxu0 0.0
  %1064 = vmatpush1.msra.mxu0 %v819
  %1065 = vmatprep.subr.mxu0 0.0
  %1066 = vmatpush1.msra.mxu0 %v816
  %1067 = vmatprep.subr.mxu0 0.0
  %1068 = vmatpush1.msra.mxu0 %v813
  %1069 = vmatprep.subr.mxu0 0.0
  %1070 = vmatpush1.msra.mxu0 %v810
  %1071 = vmatprep.subr.mxu0 0.0
  %1072 = vmatpush1.msra.mxu0 %v807
  %1073 = vmatprep.subr.mxu0 0.0
  %1074 = vmatpush1.msra.mxu0 %v804
  %1075 = vmatprep.subr.mxu0 0.0
  %1076 = vmatpush1.msra.mxu0 %v801
  %1077 = vmatprep.subr.mxu0 0.0
  %1078 = vmatpush1.msra.mxu0 %v798
  %1079 = vmatprep.subr.mxu0 0.0
  %1080 = vmatpush1.msra.mxu0 %v795
  %1081 = vmatprep.subr.mxu0 0.0
  %1082 = vmatpush1.msra.mxu0 %v792
  %1083 = vmatprep.subr.mxu0 0.0
  %1084 = vmatpush1.msra.mxu0 %v789
  %1085 = vmatprep.subr.mxu0 0.0
  %1086 = vmatpush1.msra.mxu0 %v786
  %1087 = vmatprep.subr.mxu0 0.0
  %1088 = vmatpush1.msra.mxu0 %v783
  %1089 = vmatprep.subr.mxu0 0.0
  %1090 = vmatpush1.msra.mxu0 %v780
  %1091 = vmatprep.subr.mxu0 0.0
  %1092 = vmatpush2.msra.mxu0 0.0
  %1093 = vmatprep.subr.mxu0 0.0
  %1094 = vmatpush2.msra.mxu0 0.0
  %1095 = vmatprep.subr.mxu0 0.0
  %1096 = vmatpush2.msra.mxu0 0.0
  %1097 = vmatprep.subr.mxu0 0.0
  %1098 = vmatpush2.msra.mxu0 0.0
  %1099 = vmatprep.subr.mxu0 0.0
  %1100 = vmatpush2.msra.mxu0 0.0
  %1101 = vmatprep.subr.mxu0 0.0
  %1102 = vmatpush2.msra.mxu0 0.0
  %1103 = vmatprep.subr.mxu0 0.0
  %1104 = vmatpush2.msra.mxu0 0.0
  %1105 = vmatprep.subr.mxu0 0.0
  %1106 = vmatpush2.msra.mxu0 0.0
  %1107 = vmatprep.subr.mxu0 0.0
  %1108 = vmatpush2.msra.mxu0 0.0
  %1109 = vmatprep.subr.mxu0 0.0
  %1110 = vmatpush2.msra.mxu0 0.0
  %1111 = vmatprep.subr.mxu0 0.0
  %1112 = vmatpush2.msra.mxu0 0.0
  %1113 = vmatprep.subr.mxu0 0.0
  %1114 = vmatpush2.msra.mxu0 0.0
  %1115 = vmatprep.subr.mxu0 0.0
  %1116 = vmatpush2.msra.mxu0 0.0
  %1117 = vmatprep.subr.mxu0 0.0
  %1118 = vmatpush2.msra.mxu0 0.0
  %1119 = vmatprep.subr.mxu0 0.0
  %1120 = vmatpush2.msra.mxu0 0.0
  %1121 = vmatprep.subr.mxu0 0.0
  %1122 = vmatpush2.msra.mxu0 0.0
  %1123 = vmatprep.mubr.f32.mxu0 0.0
  %1124 = vmatmul.mubr.f32.gmra.mxu0 %v826
  %v1125 = vpop.f32.mrf.mxu0
  %v1126 = vadd.f32 0.0, %v1125
  %v1127 = vpop.f32.mrf.mxu0
  %1128 = vmatprep.mubr.f32.mxu0 0.0
  %1129 = vmatmul.mubr.f32.gmra.mxu0 %v827
  %v1130 = vpop.f32.mrf.mxu0
  %v1131 = vadd.f32 0.0, %v1130
  %v1132 = vpop.f32.mrf.mxu0
  %1133 = vmatprep.mubr.f32.mxu0 0.0
  %1134 = vmatmul.mubr.f32.gmra.mxu0 %v828
  %v1135 = vpop.f32.mrf.mxu0
  %v1136 = vadd.f32 0.0, %v1135
  %v1137 = vpop.f32.mrf.mxu0
  %1138 = vmatprep.mubr.f32.mxu0 0.0
  %1139 = vmatmul.mubr.f32.gmra.mxu0 %v829
  %v1140 = vpop.f32.mrf.mxu0
  %v1141 = vadd.f32 0.0, %v1140
  %v1142 = vpop.f32.mrf.mxu0
  %1143 = vmatprep.mubr.f32.mxu0 0.0
  %1144 = vmatmul.mubr.f32.gmra.mxu0 %v830
  %v1145 = vpop.f32.mrf.mxu0
  %v1146 = vadd.f32 0.0, %v1145
  %v1147 = vpop.f32.mrf.mxu0
  %1148 = vmatprep.mubr.f32.mxu0 0.0
  %1149 = vmatmul.mubr.f32.gmra.mxu0 %v831
  %v1150 = vpop.f32.mrf.mxu0
  %v1151 = vadd.f32 0.0, %v1150
  %v1152 = vpop.f32.mrf.mxu0
  %1153 = vmatprep.mubr.f32.mxu0 0.0
  %1154 = vmatmul.mubr.f32.gmra.mxu0 %v832
  %v1155 = vpop.f32.mrf.mxu0
  %v1156 = vadd.f32 0.0, %v1155
  %v1157 = vpop.f32.mrf.mxu0
  %1158 = vmatprep.mubr.f32.mxu0 0.0
  %1159 = vmatmul.mubr.f32.gmra.mxu0 %v833
  %v1160 = vpop.f32.mrf.mxu0
  %v1161 = vadd.f32 0.0, %v1160
  %v1162 = vpop.f32.mrf.mxu0
  %1163 = vmatprep.mubr.f32.mxu0 0.0
  %1164 = vmatmul.mubr.f32.gmra.mxu0 %v834
  %v1165 = vpop.f32.mrf.mxu0
  %v1166 = vadd.f32 0.0, %v1165
  %v1167 = vpop.f32.mrf.mxu0
  %1168 = vmatprep.mubr.f32.mxu0 0.0
  %1169 = vmatmul.mubr.f32.gmra.mxu0 %v835
  %v1170 = vpop.f32.mrf.mxu0
  %v1171 = vadd.f32 0.0, %v1170
  %v1172 = vpop.f32.mrf.mxu0
  %1173 = vmatprep.mubr.f32.mxu0 0.0
  %1174 = vmatmul.mubr.f32.gmra.mxu0 %v836
  %v1175 = vpop.f32.mrf.mxu0
  %v1176 = vadd.f32 0.0, %v1175
  %v1177 = vpop.f32.mrf.mxu0
  %1178 = vmatprep.mubr.f32.mxu0 0.0
  %1179 = vmatmul.mubr.f32.gmra.mxu0 %v837
  %v1180 = vpop.f32.mrf.mxu0
  %v1181 = vadd.f32 0.0, %v1180
  %v1182 = vpop.f32.mrf.mxu0
  %1183 = vmatprep.mubr.f32.mxu0 0.0
  %1184 = vmatmul.mubr.f32.gmra.mxu0 %v838
  %v1185 = vpop.f32.mrf.mxu0
  %v1186 = vadd.f32 0.0, %v1185
  %v1187 = vpop.f32.mrf.mxu0
  %1188 = vmatprep.mubr.f32.mxu0 0.0
  %1189 = vmatmul.mubr.f32.gmra.mxu0 %v839
  %v1190 = vpop.f32.mrf.mxu0
  %v1191 = vadd.f32 0.0, %v1190
  %v1192 = vpop.f32.mrf.mxu0
  %1193 = vmatprep.mubr.f32.mxu0 0.0
  %1194 = vmatmul.mubr.f32.gmra.mxu0 %v840
  %v1195 = vpop.f32.mrf.mxu0
  %v1196 = vadd.f32 0.0, %v1195
  %v1197 = vpop.f32.mrf.mxu0
  %1198 = vmatprep.mubr.f32.mxu0 0.0
  %1199 = vmatmul.mubr.f32.gmra.mxu0 %v841
  %v1200 = vpop.f32.mrf.mxu0
  %v1201 = vadd.f32 0.0, %v1200
  %v1202 = vpop.f32.mrf.mxu0
  %1203 = vmatprep.mubr.f32.mxu0 0.0
  %1204 = vmatmul.mubr.f32.gmra.mxu0 %v842
  %v1205 = vpop.f32.mrf.mxu0
  %v1206 = vadd.f32 0.0, %v1205
  %v1207 = vpop.f32.mrf.mxu0
  %1208 = vmatprep.mubr.f32.mxu0 0.0
  %1209 = vmatmul.mubr.f32.gmra.mxu0 %v843
  %v1210 = vpop.f32.mrf.mxu0
  %v1211 = vadd.f32 0.0, %v1210
  %v1212 = vpop.f32.mrf.mxu0
  %1213 = vmatprep.mubr.f32.mxu0 0.0
  %1214 = vmatmul.mubr.f32.gmra.mxu0 %v844
  %v1215 = vpop.f32.mrf.mxu0
  %v1216 = vadd.f32 0.0, %v1215
  %v1217 = vpop.f32.mrf.mxu0
  %1218 = vmatprep.mubr.f32.mxu0 0.0
  %1219 = vmatmul.mubr.f32.gmra.mxu0 %v845
  %v1220 = vpop.f32.mrf.mxu0
  %v1221 = vadd.f32 0.0, %v1220
  %v1222 = vpop.f32.mrf.mxu0
  %1223 = vmatprep.mubr.f32.mxu0 0.0
  %1224 = vmatmul.mubr.f32.gmra.mxu0 %v846
  %v1225 = vpop.f32.mrf.mxu0
  %v1226 = vadd.f32 0.0, %v1225
  %v1227 = vpop.f32.mrf.mxu0
  %1228 = vmatprep.mubr.f32.mxu0 0.0
  %1229 = vmatmul.mubr.f32.gmra.mxu0 %v847
  %v1230 = vpop.f32.mrf.mxu0
  %v1231 = vadd.f32 0.0, %v1230
  %v1232 = vpop.f32.mrf.mxu0
  %1233 = vmatprep.mubr.f32.mxu0 0.0
  %1234 = vmatmul.mubr.f32.gmra.mxu0 %v848
  %v1235 = vpop.f32.mrf.mxu0
  %v1236 = vadd.f32 0.0, %v1235
  %v1237 = vpop.f32.mrf.mxu0
  %1238 = vmatprep.mubr.f32.mxu0 0.0
  %1239 = vmatmul.mubr.f32.gmra.mxu0 %v849
  %v1240 = vpop.f32.mrf.mxu0
  %v1241 = vadd.f32 0.0, %v1240
  %v1242 = vpop.f32.mrf.mxu0
  %1243 = vdwg.mxu0
  %v1244 = vld [vmem:[%s5] sm:$0xff]
  %v1245 = vld [vmem:[%s5 + $0x8] sm:$0xff]
  %v1246 = vld [vmem:[%s5 + $0x10] sm:$0xff]
  %v1247 = vld [vmem:[%s5 + $0x18] sm:$0xff]
  %v1248 = vld [vmem:[%s5 + $0x20] sm:$0xff]
  %v1249 = vld [vmem:[%s5 + $0x28] sm:$0xff]
  %v1250 = vld [vmem:[%s5 + $0x30] sm:$0xff]
  %v1251 = vld [vmem:[%s5 + $0x38] sm:$0xff]
  %v1252 = vld [vmem:[%s5 + $0x40] sm:$0xff]
  %v1253 = vld [vmem:[%s5 + $0x48] sm:$0xff]
  %v1254 = vld [vmem:[%s5 + $0x50] sm:$0xff]
  %v1255 = vld [vmem:[%s5 + $0x58] sm:$0xff]
  %v1256 = vld [vmem:[%s5 + $0x60] sm:$0xff]
  %v1257 = vld [vmem:[%s5 + $0x68] sm:$0xff]
  %v1258 = vld [vmem:[%s5 + $0x70] sm:$0xff]
  %v1259 = vld [vmem:[%s5 + $0x78] sm:$0xff]
  %v1260 = vld [vmem:[%s5 + $0x80] sm:$0xff]
  %v1261 = vld [vmem:[%s5 + $0x88] sm:$0xff]
  %v1262 = vld [vmem:[%s5 + $0x90] sm:$0xff]
  %v1263 = vld [vmem:[%s5 + $0x98] sm:$0xff]
  %v1264 = vld [vmem:[%s5 + $0xa0] sm:$0xff]
  %v1265 = vld [vmem:[%s5 + $0xa8] sm:$0xff]
  %v1266 = vld [vmem:[%s5 + $0xb0] sm:$0xff]
  %v1267 = vld [vmem:[%s5 + $0xb8] sm:$0xff]
  %v1268 = vld [vmem:[%s5 + $0xc0] sm:$0xff]
  %v1269 = vld [vmem:[%s5 + $0xc8] sm:$0xff]
  %v1270 = vld [vmem:[%s5 + $0xd0] sm:$0xff]
  %v1271 = vld [vmem:[%s5 + $0xd8] sm:$0xff]
  %v1272 = vld [vmem:[%s5 + $0xe0] sm:$0xff]
  %v1273 = vld [vmem:[%s5 + $0xe8] sm:$0xff]
  %v1274 = vld [vmem:[%s5 + $0xf0] sm:$0xff]
  %v1275 = vld [vmem:[%s5 + $0xf8] sm:$0xff]
  %v1276 = vld [vmem:[%s5 + $0x100] sm:$0xff]
  %v1277 = vld [vmem:[%s5 + $0x108] sm:$0xff]
  %v1278 = vld [vmem:[%s5 + $0x110] sm:$0xff]
  %v1279 = vld [vmem:[%s5 + $0x118] sm:$0xff]
  %v1280 = vld [vmem:[%s5 + $0x120] sm:$0xff]
  %v1281 = vld [vmem:[%s5 + $0x128] sm:$0xff]
  %v1282 = vld [vmem:[%s5 + $0x130] sm:$0xff]
  %v1283 = vld [vmem:[%s5 + $0x138] sm:$0xff]
  %v1284 = vld [vmem:[%s5 + $0x140] sm:$0xff]
  %v1285 = vld [vmem:[%s5 + $0x148] sm:$0xff]
  %v1286 = vld [vmem:[%s5 + $0x150] sm:$0xff]
  %v1287 = vld [vmem:[%s5 + $0x158] sm:$0xff]
  %v1288 = vld [vmem:[%s5 + $0x160] sm:$0xff]
  %v1289 = vld [vmem:[%s5 + $0x168] sm:$0xff]
  %v1290 = vld [vmem:[%s5 + $0x170] sm:$0xff]
  %v1291 = vld [vmem:[%s5 + $0x178] sm:$0xff]
  %v1292 = vld [vmem:[%s5 + $0x180] sm:$0xff]
  %v1293 = vld [vmem:[%s5 + $0x188] sm:$0xff]
  %v1294 = vld [vmem:[%s5 + $0x190] sm:$0xff]
  %v1295 = vld [vmem:[%s5 + $0x198] sm:$0xff]
  %v1296 = vld [vmem:[%s5 + $0x1a0] sm:$0xff]
  %v1297 = vld [vmem:[%s5 + $0x1a8] sm:$0xff]
  %v1298 = vld [vmem:[%s5 + $0x1b0] sm:$0xff]
  %v1299 = vld [vmem:[%s5 + $0x1b8] sm:$0xff]
  %v1300 = vld [vmem:[%s5 + $0x1c0] sm:$0xff]
  %v1301 = vld [vmem:[%s5 + $0x1c8] sm:$0xff]
  %v1302 = vld [vmem:[%s5 + $0x1d0] sm:$0xff]
  %v1303 = vld [vmem:[%s5 + $0x1d8] sm:$0xff]
  %v1304 = vld [vmem:[%s5 + $0x1e0] sm:$0xff]
  %v1305 = vld [vmem:[%s5 + $0x1e8] sm:$0xff]
  %v1306 = vld [vmem:[%s5 + $0x1f0] sm:$0xff]
  %v1307 = vld [vmem:[%s5 + $0x1f8] sm:$0xff]
  %v1308 = vld [vmem:[%s5 + $0x200] sm:$0xff]
  %v1309 = vld [vmem:[%s5 + $0x208] sm:$0xff]
  %v1310 = vld [vmem:[%s5 + $0x210] sm:$0xff]
  %v1311 = vld [vmem:[%s5 + $0x218] sm:$0xff]
  %v1312 = vld [vmem:[%s5 + $0x220] sm:$0xff]
  %v1313 = vld [vmem:[%s5 + $0x228] sm:$0xff]
  %v1314 = vld [vmem:[%s5 + $0x230] sm:$0xff]
  %v1315 = vld [vmem:[%s5 + $0x238] sm:$0xff]
  %v1316 = vld [vmem:[%s5 + $0x240] sm:$0xff]
  %v1317 = vld [vmem:[%s5 + $0x248] sm:$0xff]
  %v1318 = vld [vmem:[%s5 + $0x250] sm:$0xff]
  %v1319 = vld [vmem:[%s5 + $0x258] sm:$0xff]
  %v1320 = vld [vmem:[%s5 + $0x260] sm:$0xff]
  %v1321 = vld [vmem:[%s5 + $0x268] sm:$0xff]
  %v1322 = vld [vmem:[%s5 + $0x270] sm:$0xff]
  %v1323 = vld [vmem:[%s5 + $0x278] sm:$0xff]
  %v1324 = vld [vmem:[%s5 + $0x280] sm:$0xff]
  %v1325 = vld [vmem:[%s5 + $0x288] sm:$0xff]
  %v1326 = vld [vmem:[%s5 + $0x290] sm:$0xff]
  %v1327 = vld [vmem:[%s5 + $0x298] sm:$0xff]
  %v1328 = vld [vmem:[%s5 + $0x2a0] sm:$0xff]
  %v1329 = vld [vmem:[%s5 + $0x2a8] sm:$0xff]
  %v1330 = vld [vmem:[%s5 + $0x2b0] sm:$0xff]
  %v1331 = vld [vmem:[%s5 + $0x2b8] sm:$0xff]
  %v1332 = vld [vmem:[%s5 + $0x2c0] sm:$0xff]
  %v1333 = vld [vmem:[%s5 + $0x2c8] sm:$0xff]
  %v1334 = vld [vmem:[%s5 + $0x2d0] sm:$0xff]
  %v1335 = vld [vmem:[%s5 + $0x2d8] sm:$0xff]
  %v1336 = vld [vmem:[%s5 + $0x2e0] sm:$0xff]
  %v1337 = vld [vmem:[%s5 + $0x2e8] sm:$0xff]
  %v1338 = vld [vmem:[%s5 + $0x2f0] sm:$0xff]
  %v1339 = vld [vmem:[%s5 + $0x2f8] sm:$0xff]
  %v1340 = vld [vmem:[%s5 + $0x300] sm:$0xff]
  %v1341 = vld [vmem:[%s5 + $0x308] sm:$0xff]
  %v1342 = vld [vmem:[%s5 + $0x310] sm:$0xff]
  %v1343 = vld [vmem:[%s5 + $0x318] sm:$0xff]
  %v1344 = vld [vmem:[%s5 + $0x320] sm:$0xff]
  %v1345 = vld [vmem:[%s5 + $0x328] sm:$0xff]
  %v1346 = vld [vmem:[%s5 + $0x330] sm:$0xff]
  %v1347 = vld [vmem:[%s5 + $0x338] sm:$0xff]
  %v1348 = vld [vmem:[%s5 + $0x340] sm:$0xff]
  %v1349 = vld [vmem:[%s5 + $0x348] sm:$0xff]
  %v1350 = vld [vmem:[%s5 + $0x350] sm:$0xff]
  %v1351 = vld [vmem:[%s5 + $0x358] sm:$0xff]
  %v1352 = vld [vmem:[%s5 + $0x360] sm:$0xff]
  %v1353 = vld [vmem:[%s5 + $0x368] sm:$0xff]
  %v1354 = vld [vmem:[%s5 + $0x370] sm:$0xff]
  %v1355 = vld [vmem:[%s5 + $0x378] sm:$0xff]
  %v1356 = vld [vmem:[%s5 + $0x380] sm:$0xff]
  %v1357 = vld [vmem:[%s5 + $0x388] sm:$0xff]
  %v1358 = vld [vmem:[%s5 + $0x390] sm:$0xff]
  %v1359 = vld [vmem:[%s5 + $0x398] sm:$0xff]
  %v1360 = vld [vmem:[%s5 + $0x3a0] sm:$0xff]
  %v1361 = vld [vmem:[%s5 + $0x3a8] sm:$0xff]
  %v1362 = vld [vmem:[%s5 + $0x3b0] sm:$0xff]
  %v1363 = vld [vmem:[%s5 + $0x3b8] sm:$0xff]
  %v1364 = vld [vmem:[%s5 + $0x3c0] sm:$0xff]
  %v1365 = vld [vmem:[%s5 + $0x3c8] sm:$0xff]
  %v1366 = vld [vmem:[%s5 + $0x3d0] sm:$0xff]
  %v1367 = vld [vmem:[%s5 + $0x3d8] sm:$0xff]
  %v1368 = vld [vmem:[%s5 + $0x3e0] sm:$0xff]
  %v1369 = vld [vmem:[%s5 + $0x3e8] sm:$0xff]
  %v1370 = vld [vmem:[%s5 + $0x3f0] sm:$0xff]
  %v1371 = vld [vmem:[%s5 + $0x3f8] sm:$0xff]
  %v1372 = vld [vmem:[%s5 + $0x400] sm:$0xff]
  %v1373 = vld [vmem:[%s5 + $0x408] sm:$0xff]
  %v1374 = vld [vmem:[%s5 + $0x410] sm:$0xff]
  %v1375 = vld [vmem:[%s5 + $0x418] sm:$0xff]
  %v1376 = vld [vmem:[%s5 + $0x420] sm:$0xff]
  %v1377 = vld [vmem:[%s5 + $0x428] sm:$0xff]
  %v1378 = vld [vmem:[%s5 + $0x430] sm:$0xff]
  %v1379 = vld [vmem:[%s5 + $0x438] sm:$0xff]
  %v1380 = vld [vmem:[%s5 + $0x440] sm:$0xff]
  %v1381 = vld [vmem:[%s5 + $0x448] sm:$0xff]
  %v1382 = vld [vmem:[%s5 + $0x450] sm:$0xff]
  %v1383 = vld [vmem:[%s5 + $0x458] sm:$0xff]
  %v1384 = vld [vmem:[%s5 + $0x460] sm:$0xff]
  %v1385 = vld [vmem:[%s5 + $0x468] sm:$0xff]
  %v1386 = vld [vmem:[%s5 + $0x470] sm:$0xff]
  %v1387 = vld [vmem:[%s5 + $0x478] sm:$0xff]
  %v1388 = vld [vmem:[%s5 + $0x480] sm:$0xff]
  %v1389 = vld [vmem:[%s5 + $0x488] sm:$0xff]
  %v1390 = vld [vmem:[%s5 + $0x490] sm:$0xff]
  %v1391 = vld [vmem:[%s5 + $0x498] sm:$0xff]
  %v1392 = vld [vmem:[%s5 + $0x4a0] sm:$0xff]
  %v1393 = vld [vmem:[%s5 + $0x4a8] sm:$0xff]
  %v1394 = vld [vmem:[%s5 + $0x4b0] sm:$0xff]
  %v1395 = vld [vmem:[%s5 + $0x4b8] sm:$0xff]
  %v1396 = vld [vmem:[%s5 + $0x4c0] sm:$0xff]
  %v1397 = vld [vmem:[%s5 + $0x4c8] sm:$0xff]
  %v1398 = vld [vmem:[%s5 + $0x4d0] sm:$0xff]
  %v1399 = vld [vmem:[%s5 + $0x4d8] sm:$0xff]
  %v1400 = vld [vmem:[%s5 + $0x4e0] sm:$0xff]
  %v1401 = vld [vmem:[%s5 + $0x4e8] sm:$0xff]
  %v1402 = vld [vmem:[%s5 + $0x4f0] sm:$0xff]
  %v1403 = vld [vmem:[%s5 + $0x4f8] sm:$0xff]
  %v1404 = vld [vmem:[%s5 + $0x500] sm:$0xff]
  %v1405 = vld [vmem:[%s5 + $0x508] sm:$0xff]
  %v1406 = vld [vmem:[%s5 + $0x510] sm:$0xff]
  %v1407 = vld [vmem:[%s5 + $0x518] sm:$0xff]
  %v1408 = vld [vmem:[%s5 + $0x520] sm:$0xff]
  %v1409 = vld [vmem:[%s5 + $0x528] sm:$0xff]
  %v1410 = vld [vmem:[%s5 + $0x530] sm:$0xff]
  %v1411 = vld [vmem:[%s5 + $0x538] sm:$0xff]
  %v1412 = vld [vmem:[%s5 + $0x540] sm:$0xff]
  %v1413 = vld [vmem:[%s5 + $0x548] sm:$0xff]
  %v1414 = vld [vmem:[%s5 + $0x550] sm:$0xff]
  %v1415 = vld [vmem:[%s5 + $0x558] sm:$0xff]
  %v1416 = vld [vmem:[%s5 + $0x560] sm:$0xff]
  %v1417 = vld [vmem:[%s5 + $0x568] sm:$0xff]
  %v1418 = vld [vmem:[%s5 + $0x570] sm:$0xff]
  %v1419 = vld [vmem:[%s5 + $0x578] sm:$0xff]
  %v1420 = vld [vmem:[%s5 + $0x580] sm:$0xff]
  %v1421 = vld [vmem:[%s5 + $0x588] sm:$0xff]
  %v1422 = vld [vmem:[%s5 + $0x590] sm:$0xff]
  %v1423 = vld [vmem:[%s5 + $0x598] sm:$0xff]
  %v1424 = vld [vmem:[%s5 + $0x5a0] sm:$0xff]
  %v1425 = vld [vmem:[%s5 + $0x5a8] sm:$0xff]
  %v1426 = vld [vmem:[%s5 + $0x5b0] sm:$0xff]
  %v1427 = vld [vmem:[%s5 + $0x5b8] sm:$0xff]
  %v1428 = vld [vmem:[%s5 + $0x5c0] sm:$0xff]
  %v1429 = vld [vmem:[%s5 + $0x5c8] sm:$0xff]
  %v1430 = vld [vmem:[%s5 + $0x5d0] sm:$0xff]
  %v1431 = vld [vmem:[%s5 + $0x5d8] sm:$0xff]
  %v1432 = vld [vmem:[%s5 + $0x5e0] sm:$0xff]
  %v1433 = vld [vmem:[%s5 + $0x5e8] sm:$0xff]
  %v1434 = vld [vmem:[%s5 + $0x5f0] sm:$0xff]
  %v1435 = vld [vmem:[%s5 + $0x5f8] sm:$0xff]
  %v1436 = vld [vmem:[%s5 + $0x600] sm:$0xff]
  %v1437 = vld [vmem:[%s5 + $0x608] sm:$0xff]
  %v1438 = vld [vmem:[%s5 + $0x610] sm:$0xff]
  %v1439 = vld [vmem:[%s5 + $0x618] sm:$0xff]
  %v1440 = vld [vmem:[%s5 + $0x620] sm:$0xff]
  %v1441 = vld [vmem:[%s5 + $0x628] sm:$0xff]
  %v1442 = vld [vmem:[%s5 + $0x630] sm:$0xff]
  %v1443 = vld [vmem:[%s5 + $0x638] sm:$0xff]
  %v1444 = vld [vmem:[%s5 + $0x640] sm:$0xff]
  %v1445 = vld [vmem:[%s5 + $0x648] sm:$0xff]
  %v1446 = vld [vmem:[%s5 + $0x650] sm:$0xff]
  %v1447 = vld [vmem:[%s5 + $0x658] sm:$0xff]
  %v1448 = vld [vmem:[%s5 + $0x660] sm:$0xff]
  %v1449 = vld [vmem:[%s5 + $0x668] sm:$0xff]
  %v1450 = vld [vmem:[%s5 + $0x670] sm:$0xff]
  %v1451 = vld [vmem:[%s5 + $0x678] sm:$0xff]
  %v1452 = vld [vmem:[%s5 + $0x680] sm:$0xff]
  %v1453 = vld [vmem:[%s5 + $0x688] sm:$0xff]
  %v1454 = vld [vmem:[%s5 + $0x690] sm:$0xff]
  %v1455 = vld [vmem:[%s5 + $0x698] sm:$0xff]
  %v1456 = vld [vmem:[%s5 + $0x6a0] sm:$0xff]
  %v1457 = vld [vmem:[%s5 + $0x6a8] sm:$0xff]
  %v1458 = vld [vmem:[%s5 + $0x6b0] sm:$0xff]
  %v1459 = vld [vmem:[%s5 + $0x6b8] sm:$0xff]
  %v1460 = vld [vmem:[%s5 + $0x6c0] sm:$0xff]
  %v1461 = vld [vmem:[%s5 + $0x6c8] sm:$0xff]
  %v1462 = vld [vmem:[%s5 + $0x6d0] sm:$0xff]
  %v1463 = vld [vmem:[%s5 + $0x6d8] sm:$0xff]
  %v1464 = vld [vmem:[%s5 + $0x6e0] sm:$0xff]
  %v1465 = vld [vmem:[%s5 + $0x6e8] sm:$0xff]
  %v1466 = vld [vmem:[%s5 + $0x6f0] sm:$0xff]
  %v1467 = vld [vmem:[%s5 + $0x6f8] sm:$0xff]
  %v1468 = vld [vmem:[%s5 + $0x700] sm:$0xff]
  %v1469 = vld [vmem:[%s5 + $0x708] sm:$0xff]
  %v1470 = vld [vmem:[%s5 + $0x710] sm:$0xff]
  %v1471 = vld [vmem:[%s5 + $0x718] sm:$0xff]
  %v1472 = vld [vmem:[%s5 + $0x720] sm:$0xff]
  %v1473 = vld [vmem:[%s5 + $0x728] sm:$0xff]
  %v1474 = vld [vmem:[%s5 + $0x730] sm:$0xff]
  %v1475 = vld [vmem:[%s5 + $0x738] sm:$0xff]
  %v1476 = vld [vmem:[%s5 + $0x740] sm:$0xff]
  %v1477 = vld [vmem:[%s5 + $0x748] sm:$0xff]
  %v1478 = vld [vmem:[%s5 + $0x750] sm:$0xff]
  %v1479 = vld [vmem:[%s5 + $0x758] sm:$0xff]
  %v1480 = vld [vmem:[%s5 + $0x760] sm:$0xff]
  %v1481 = vld [vmem:[%s5 + $0x768] sm:$0xff]
  %v1482 = vld [vmem:[%s5 + $0x770] sm:$0xff]
  %v1483 = vld [vmem:[%s5 + $0x778] sm:$0xff]
  %v1484 = vld [vmem:[%s5 + $0x780] sm:$0xff]
  %v1485 = vld [vmem:[%s5 + $0x788] sm:$0xff]
  %v1486 = vld [vmem:[%s5 + $0x790] sm:$0xff]
  %v1487 = vld [vmem:[%s5 + $0x798] sm:$0xff]
  %v1488 = vld [vmem:[%s5 + $0x7a0] sm:$0xff]
  %v1489 = vld [vmem:[%s5 + $0x7a8] sm:$0xff]
  %v1490 = vld [vmem:[%s5 + $0x7b0] sm:$0xff]
  %v1491 = vld [vmem:[%s5 + $0x7b8] sm:$0xff]
  %v1492 = vld [vmem:[%s5 + $0x7c0] sm:$0xff]
  %v1493 = vld [vmem:[%s5 + $0x7c8] sm:$0xff]
  %v1494 = vld [vmem:[%s5 + $0x7d0] sm:$0xff]
  %v1495 = vld [vmem:[%s5 + $0x7d8] sm:$0xff]
  %v1496 = vld [vmem:[%s5 + $0x7e0] sm:$0xff]
  %v1497 = vld [vmem:[%s5 + $0x7e8] sm:$0xff]
  %v1498 = vld [vmem:[%s5 + $0x7f0] sm:$0xff]
  %v1499 = vld [vmem:[%s5 + $0x7f8] sm:$0xff]
  %v1500 = vld [vmem:[%s5 + $0x800] sm:$0xff]
  %v1501 = vld [vmem:[%s5 + $0x808] sm:$0xff]
  %v1502 = vld [vmem:[%s5 + $0x810] sm:$0xff]
  %v1503 = vld [vmem:[%s5 + $0x818] sm:$0xff]
  %v1504 = vld [vmem:[%s5 + $0x820] sm:$0xff]
  %v1505 = vld [vmem:[%s5 + $0x828] sm:$0xff]
  %v1506 = vld [vmem:[%s5 + $0x830] sm:$0xff]
  %v1507 = vld [vmem:[%s5 + $0x838] sm:$0xff]
  %v1508 = vld [vmem:[%s5 + $0x840] sm:$0xff]
  %v1509 = vld [vmem:[%s5 + $0x848] sm:$0xff]
  %v1510 = vld [vmem:[%s5 + $0x850] sm:$0xff]
  %v1511 = vld [vmem:[%s5 + $0x858] sm:$0xff]
  %v1512 = vld [vmem:[%s5 + $0x860] sm:$0xff]
  %v1513 = vld [vmem:[%s5 + $0x868] sm:$0xff]
  %v1514 = vld [vmem:[%s5 + $0x870] sm:$0xff]
  %v1515 = vld [vmem:[%s5 + $0x878] sm:$0xff]
  %v1516 = vld [vmem:[%s5 + $0x880] sm:$0xff]
  %v1517 = vld [vmem:[%s5 + $0x888] sm:$0xff]
  %v1518 = vld [vmem:[%s5 + $0x890] sm:$0xff]
  %v1519 = vld [vmem:[%s5 + $0x898] sm:$0xff]
  %v1520 = vld [vmem:[%s5 + $0x8a0] sm:$0xff]
  %v1521 = vld [vmem:[%s5 + $0x8a8] sm:$0xff]
  %v1522 = vld [vmem:[%s5 + $0x8b0] sm:$0xff]
  %v1523 = vld [vmem:[%s5 + $0x8b8] sm:$0xff]
  %v1524 = vld [vmem:[%s5 + $0x8c0] sm:$0xff]
  %v1525 = vld [vmem:[%s5 + $0x8c8] sm:$0xff]
  %v1526 = vld [vmem:[%s5 + $0x8d0] sm:$0xff]
  %v1527 = vld [vmem:[%s5 + $0x8d8] sm:$0xff]
  %v1528 = vld [vmem:[%s5 + $0x8e0] sm:$0xff]
  %v1529 = vld [vmem:[%s5 + $0x8e8] sm:$0xff]
  %v1530 = vld [vmem:[%s5 + $0x8f0] sm:$0xff]
  %v1531 = vld [vmem:[%s5 + $0x8f8] sm:$0xff]
  %1532 = vmatprep.subr.mxu0 %v1275
  %1533 = vmatpush1.msra.mxu0 %v1274
  %1534 = vmatprep.subr.mxu0 %v1273
  %1535 = vmatpush1.msra.mxu0 %v1272
  %1536 = vmatprep.subr.mxu0 %v1271
  %1537 = vmatpush1.msra.mxu0 %v1270
  %1538 = vmatprep.subr.mxu0 %v1269
  %1539 = vmatpush1.msra.mxu0 %v1268
  %1540 = vmatprep.subr.mxu0 %v1267
  %1541 = vmatpush1.msra.mxu0 %v1266
  %1542 = vmatprep.subr.mxu0 %v1265
  %1543 = vmatpush1.msra.mxu0 %v1264
  %1544 = vmatprep.subr.mxu0 %v1263
  %1545 = vmatpush1.msra.mxu0 %v1262
  %1546 = vmatprep.subr.mxu0 %v1261
  %1547 = vmatpush1.msra.mxu0 %v1260
  %1548 = vmatprep.subr.mxu0 %v1259
  %1549 = vmatpush1.msra.mxu0 %v1258
  %1550 = vmatprep.subr.mxu0 %v1257
  %1551 = vmatpush1.msra.mxu0 %v1256
  %1552 = vmatprep.subr.mxu0 %v1255
  %1553 = vmatpush1.msra.mxu0 %v1254
  %1554 = vmatprep.subr.mxu0 %v1253
  %1555 = vmatpush1.msra.mxu0 %v1252
  %1556 = vmatprep.subr.mxu0 %v1251
  %1557 = vmatpush1.msra.mxu0 %v1250
  %1558 = vmatprep.subr.mxu0 %v1249
  %1559 = vmatpush1.msra.mxu0 %v1248
  %1560 = vmatprep.subr.mxu0 %v1247
  %1561 = vmatpush1.msra.mxu0 %v1246
  %1562 = vmatprep.subr.mxu0 %v1245
  %1563 = vmatpush1.msra.mxu0 %v1244
  %1564 = vmatprep.subr.mxu0 %v1307
  %1565 = vmatpush2.msra.mxu0 %v1306
  %1566 = vmatprep.subr.mxu0 %v1305
  %1567 = vmatpush2.msra.mxu0 %v1304
  %1568 = vmatprep.subr.mxu0 %v1303
  %1569 = vmatpush2.msra.mxu0 %v1302
  %1570 = vmatprep.subr.mxu0 %v1301
  %1571 = vmatpush2.msra.mxu0 %v1300
  %1572 = vmatprep.subr.mxu0 %v1299
  %1573 = vmatpush2.msra.mxu0 %v1298
  %1574 = vmatprep.subr.mxu0 %v1297
  %1575 = vmatpush2.msra.mxu0 %v1296
  %1576 = vmatprep.subr.mxu0 %v1295
  %1577 = vmatpush2.msra.mxu0 %v1294
  %1578 = vmatprep.subr.mxu0 %v1293
  %1579 = vmatpush2.msra.mxu0 %v1292
  %1580 = vmatprep.subr.mxu0 %v1291
  %1581 = vmatpush2.msra.mxu0 %v1290
  %1582 = vmatprep.subr.mxu0 %v1289
  %1583 = vmatpush2.msra.mxu0 %v1288
  %1584 = vmatprep.subr.mxu0 %v1287
  %1585 = vmatpush2.msra.mxu0 %v1286
  %1586 = vmatprep.subr.mxu0 %v1285
  %1587 = vmatpush2.msra.mxu0 %v1284
  %1588 = vmatprep.subr.mxu0 %v1283
  %1589 = vmatpush2.msra.mxu0 %v1282
  %1590 = vmatprep.subr.mxu0 %v1281
  %1591 = vmatpush2.msra.mxu0 %v1280
  %1592 = vmatprep.subr.mxu0 %v1279
  %1593 = vmatpush2.msra.mxu0 %v1278
  %1594 = vmatprep.subr.mxu0 %v1277
  %1595 = vmatpush2.msra.mxu0 %v1276
  %1596 = vmatprep.mubr.f32.mxu0 %v919
  %1597 = vmatmul.mubr.f32.gmra.mxu0 %v917
  %v1598 = vpop.f32.mrf.mxu0
  %v1599 = vadd.f32 0.0, %v1598
  %v1600 = vpop.f32.mrf.mxu0
  %v1601 = vadd.f32 0.0, %v1600
  %1602 = vmatprep.mubr.f32.mxu0 %v925
  %1603 = vmatmul.mubr.f32.gmra.mxu0 %v923
  %v1604 = vpop.f32.mrf.mxu0
  %v1605 = vadd.f32 0.0, %v1604
  %v1606 = vpop.f32.mrf.mxu0
  %v1607 = vadd.f32 0.0, %v1606
  %1608 = vmatprep.mubr.f32.mxu0 %v931
  %1609 = vmatmul.mubr.f32.gmra.mxu0 %v929
  %v1610 = vpop.f32.mrf.mxu0
  %v1611 = vadd.f32 0.0, %v1610
  %v1612 = vpop.f32.mrf.mxu0
  %v1613 = vadd.f32 0.0, %v1612
  %1614 = vmatprep.mubr.f32.mxu0 %v937
  %1615 = vmatmul.mubr.f32.gmra.mxu0 %v935
  %v1616 = vpop.f32.mrf.mxu0
  %v1617 = vadd.f32 0.0, %v1616
  %v1618 = vpop.f32.mrf.mxu0
  %v1619 = vadd.f32 0.0, %v1618
  %1620 = vmatprep.mubr.f32.mxu0 %v943
  %1621 = vmatmul.mubr.f32.gmra.mxu0 %v941
  %v1622 = vpop.f32.mrf.mxu0
  %v1623 = vadd.f32 0.0, %v1622
  %v1624 = vpop.f32.mrf.mxu0
  %v1625 = vadd.f32 0.0, %v1624
  %1626 = vmatprep.mubr.f32.mxu0 %v949
  %1627 = vmatmul.mubr.f32.gmra.mxu0 %v947
  %v1628 = vpop.f32.mrf.mxu0
  %v1629 = vadd.f32 0.0, %v1628
  %v1630 = vpop.f32.mrf.mxu0
  %v1631 = vadd.f32 0.0, %v1630
  %1632 = vmatprep.mubr.f32.mxu0 %v955
  %1633 = vmatmul.mubr.f32.gmra.mxu0 %v953
  %v1634 = vpop.f32.mrf.mxu0
  %v1635 = vadd.f32 0.0, %v1634
  %v1636 = vpop.f32.mrf.mxu0
  %v1637 = vadd.f32 0.0, %v1636
  %1638 = vmatprep.mubr.f32.mxu0 %v961
  %1639 = vmatmul.mubr.f32.gmra.mxu0 %v959
  %v1640 = vpop.f32.mrf.mxu0
  %v1641 = vadd.f32 0.0, %v1640
  %v1642 = vpop.f32.mrf.mxu0
  %v1643 = vadd.f32 0.0, %v1642
  %1644 = vdwg.mxu0
  %1645 = vmatprep.subr.mxu0 %v1339
  %1646 = vmatpush1.msra.mxu0 %v1338
  %1647 = vmatprep.subr.mxu0 %v1337
  %1648 = vmatpush1.msra.mxu0 %v1336
  %1649 = vmatprep.subr.mxu0 %v1335
  %1650 = vmatpush1.msra.mxu0 %v1334
  %1651 = vmatprep.subr.mxu0 %v1333
  %1652 = vmatpush1.msra.mxu0 %v1332
  %1653 = vmatprep.subr.mxu0 %v1331
  %1654 = vmatpush1.msra.mxu0 %v1330
  %1655 = vmatprep.subr.mxu0 %v1329
  %1656 = vmatpush1.msra.mxu0 %v1328
  %1657 = vmatprep.subr.mxu0 %v1327
  %1658 = vmatpush1.msra.mxu0 %v1326
  %1659 = vmatprep.subr.mxu0 %v1325
  %1660 = vmatpush1.msra.mxu0 %v1324
  %1661 = vmatprep.subr.mxu0 %v1323
  %1662 = vmatpush1.msra.mxu0 %v1322
  %1663 = vmatprep.subr.mxu0 %v1321
  %1664 = vmatpush1.msra.mxu0 %v1320
  %1665 = vmatprep.subr.mxu0 %v1319
  %1666 = vmatpush1.msra.mxu0 %v1318
  %1667 = vmatprep.subr.mxu0 %v1317
  %1668 = vmatpush1.msra.mxu0 %v1316
  %1669 = vmatprep.subr.mxu0 %v1315
  %1670 = vmatpush1.msra.mxu0 %v1314
  %1671 = vmatprep.subr.mxu0 %v1313
  %1672 = vmatpush1.msra.mxu0 %v1312
  %1673 = vmatprep.subr.mxu0 %v1311
  %1674 = vmatpush1.msra.mxu0 %v1310
  %1675 = vmatprep.subr.mxu0 %v1309
  %1676 = vmatpush1.msra.mxu0 %v1308
  %1677 = vmatprep.subr.mxu0 %v1371
  %1678 = vmatpush2.msra.mxu0 %v1370
  %1679 = vmatprep.subr.mxu0 %v1369
  %1680 = vmatpush2.msra.mxu0 %v1368
  %1681 = vmatprep.subr.mxu0 %v1367
  %1682 = vmatpush2.msra.mxu0 %v1366
  %1683 = vmatprep.subr.mxu0 %v1365
  %1684 = vmatpush2.msra.mxu0 %v1364
  %1685 = vmatprep.subr.mxu0 %v1363
  %1686 = vmatpush2.msra.mxu0 %v1362
  %1687 = vmatprep.subr.mxu0 %v1361
  %1688 = vmatpush2.msra.mxu0 %v1360
  %1689 = vmatprep.subr.mxu0 %v1359
  %1690 = vmatpush2.msra.mxu0 %v1358
  %1691 = vmatprep.subr.mxu0 %v1357
  %1692 = vmatpush2.msra.mxu0 %v1356
  %1693 = vmatprep.subr.mxu0 %v1355
  %1694 = vmatpush2.msra.mxu0 %v1354
  %1695 = vmatprep.subr.mxu0 %v1353
  %1696 = vmatpush2.msra.mxu0 %v1352
  %1697 = vmatprep.subr.mxu0 %v1351
  %1698 = vmatpush2.msra.mxu0 %v1350
  %1699 = vmatprep.subr.mxu0 %v1349
  %1700 = vmatpush2.msra.mxu0 %v1348
  %1701 = vmatprep.subr.mxu0 %v1347
  %1702 = vmatpush2.msra.mxu0 %v1346
  %1703 = vmatprep.subr.mxu0 %v1345
  %1704 = vmatpush2.msra.mxu0 %v1344
  %1705 = vmatprep.subr.mxu0 %v1343
  %1706 = vmatpush2.msra.mxu0 %v1342
  %1707 = vmatprep.subr.mxu0 %v1341
  %1708 = vmatpush2.msra.mxu0 %v1340
  %1709 = vmatprep.mubr.f32.mxu0 %v965
  %1710 = vmatmul.mubr.f32.gmra.mxu0 %v1126
  %v1711 = vpop.f32.mrf.mxu0
  %v1712 = vadd.f32 %v1599, %v1711
  %v1713 = vpop.f32.mrf.mxu0
  %v1714 = vadd.f32 %v1601, %v1713
  %1715 = vmatprep.mubr.f32.mxu0 %v971
  %1716 = vmatmul.mubr.f32.gmra.mxu0 %v1131
  %v1717 = vpop.f32.mrf.mxu0
  %v1718 = vadd.f32 %v1605, %v1717
  %v1719 = vpop.f32.mrf.mxu0
  %v1720 = vadd.f32 %v1607, %v1719
  %1721 = vmatprep.mubr.f32.mxu0 %v977
  %1722 = vmatmul.mubr.f32.gmra.mxu0 %v1136
  %v1723 = vpop.f32.mrf.mxu0
  %v1724 = vadd.f32 %v1611, %v1723
  %v1725 = vpop.f32.mrf.mxu0
  %v1726 = vadd.f32 %v1613, %v1725
  %1727 = vmatprep.mubr.f32.mxu0 %v983
  %1728 = vmatmul.mubr.f32.gmra.mxu0 %v1141
  %v1729 = vpop.f32.mrf.mxu0
  %v1730 = vadd.f32 %v1617, %v1729
  %v1731 = vpop.f32.mrf.mxu0
  %v1732 = vadd.f32 %v1619, %v1731
  %1733 = vmatprep.mubr.f32.mxu0 %v989
  %1734 = vmatmul.mubr.f32.gmra.mxu0 %v1146
  %v1735 = vpop.f32.mrf.mxu0
  %v1736 = vadd.f32 %v1623, %v1735
  %v1737 = vpop.f32.mrf.mxu0
  %v1738 = vadd.f32 %v1625, %v1737
  %1739 = vmatprep.mubr.f32.mxu0 %v995
  %1740 = vmatmul.mubr.f32.gmra.mxu0 %v1151
  %v1741 = vpop.f32.mrf.mxu0
  %v1742 = vadd.f32 %v1629, %v1741
  %v1743 = vpop.f32.mrf.mxu0
  %v1744 = vadd.f32 %v1631, %v1743
  %1745 = vmatprep.mubr.f32.mxu0 %v1001
  %1746 = vmatmul.mubr.f32.gmra.mxu0 %v1156
  %v1747 = vpop.f32.mrf.mxu0
  %v1748 = vadd.f32 %v1635, %v1747
  %v1749 = vpop.f32.mrf.mxu0
  %v1750 = vadd.f32 %v1637, %v1749
  %1751 = vmatprep.mubr.f32.mxu0 %v1007
  %1752 = vmatmul.mubr.f32.gmra.mxu0 %v1161
  %v1753 = vpop.f32.mrf.mxu0
  %v1754 = vadd.f32 %v1641, %v1753
  %v1755 = vpop.f32.mrf.mxu0
  %v1756 = vadd.f32 %v1643, %v1755
  %1757 = vdwg.mxu0
  %1758 = vmatprep.subr.mxu0 %v1403
  %1759 = vmatpush1.msra.mxu0 %v1402
  %1760 = vmatprep.subr.mxu0 %v1401
  %1761 = vmatpush1.msra.mxu0 %v1400
  %1762 = vmatprep.subr.mxu0 %v1399
  %1763 = vmatpush1.msra.mxu0 %v1398
  %1764 = vmatprep.subr.mxu0 %v1397
  %1765 = vmatpush1.msra.mxu0 %v1396
  %1766 = vmatprep.subr.mxu0 %v1395
  %1767 = vmatpush1.msra.mxu0 %v1394
  %1768 = vmatprep.subr.mxu0 %v1393
  %1769 = vmatpush1.msra.mxu0 %v1392
  %1770 = vmatprep.subr.mxu0 %v1391
  %1771 = vmatpush1.msra.mxu0 %v1390
  %1772 = vmatprep.subr.mxu0 %v1389
  %1773 = vmatpush1.msra.mxu0 %v1388
  %1774 = vmatprep.subr.mxu0 %v1387
  %1775 = vmatpush1.msra.mxu0 %v1386
  %1776 = vmatprep.subr.mxu0 %v1385
  %1777 = vmatpush1.msra.mxu0 %v1384
  %1778 = vmatprep.subr.mxu0 %v1383
  %1779 = vmatpush1.msra.mxu0 %v1382
  %1780 = vmatprep.subr.mxu0 %v1381
  %1781 = vmatpush1.msra.mxu0 %v1380
  %1782 = vmatprep.subr.mxu0 %v1379
  %1783 = vmatpush1.msra.mxu0 %v1378
  %1784 = vmatprep.subr.mxu0 %v1377
  %1785 = vmatpush1.msra.mxu0 %v1376
  %1786 = vmatprep.subr.mxu0 %v1375
  %1787 = vmatpush1.msra.mxu0 %v1374
  %1788 = vmatprep.subr.mxu0 %v1373
  %1789 = vmatpush1.msra.mxu0 %v1372
  %1790 = vmatprep.subr.mxu0 %v1435
  %1791 = vmatpush2.msra.mxu0 %v1434
  %1792 = vmatprep.subr.mxu0 %v1433
  %1793 = vmatpush2.msra.mxu0 %v1432
  %1794 = vmatprep.subr.mxu0 %v1431
  %1795 = vmatpush2.msra.mxu0 %v1430
  %1796 = vmatprep.subr.mxu0 %v1429
  %1797 = vmatpush2.msra.mxu0 %v1428
  %1798 = vmatprep.subr.mxu0 %v1427
  %1799 = vmatpush2.msra.mxu0 %v1426
  %1800 = vmatprep.subr.mxu0 %v1425
  %1801 = vmatpush2.msra.mxu0 %v1424
  %1802 = vmatprep.subr.mxu0 %v1423
  %1803 = vmatpush2.msra.mxu0 %v1422
  %1804 = vmatprep.subr.mxu0 %v1421
  %1805 = vmatpush2.msra.mxu0 %v1420
  %1806 = vmatprep.subr.mxu0 %v1419
  %1807 = vmatpush2.msra.mxu0 %v1418
  %1808 = vmatprep.subr.mxu0 %v1417
  %1809 = vmatpush2.msra.mxu0 %v1416
  %1810 = vmatprep.subr.mxu0 %v1415
  %1811 = vmatpush2.msra.mxu0 %v1414
  %1812 = vmatprep.subr.mxu0 %v1413
  %1813 = vmatpush2.msra.mxu0 %v1412
  %1814 = vmatprep.subr.mxu0 %v1411
  %1815 = vmatpush2.msra.mxu0 %v1410
  %1816 = vmatprep.subr.mxu0 %v1409
  %1817 = vmatpush2.msra.mxu0 %v1408
  %1818 = vmatprep.subr.mxu0 %v1407
  %1819 = vmatpush2.msra.mxu0 %v1406
  %1820 = vmatprep.subr.mxu0 %v1405
  %1821 = vmatpush2.msra.mxu0 %v1404
  %1822 = vmatprep.mubr.f32.mxu0 %v1166
  %1823 = vmatmul.mubr.f32.gmra.mxu0 %v967
  %v1824 = vpop.f32.mrf.mxu0
  %v1825 = vadd.f32 %v1712, %v1824
  %v1826 = vpop.f32.mrf.mxu0
  %v1827 = vadd.f32 %v1714, %v1826
  %1828 = vmatprep.mubr.f32.mxu0 %v1171
  %1829 = vmatmul.mubr.f32.gmra.mxu0 %v973
  %v1830 = vpop.f32.mrf.mxu0
  %v1831 = vadd.f32 %v1718, %v1830
  %v1832 = vpop.f32.mrf.mxu0
  %v1833 = vadd.f32 %v1720, %v1832
  %1834 = vmatprep.mubr.f32.mxu0 %v1176
  %1835 = vmatmul.mubr.f32.gmra.mxu0 %v979
  %v1836 = vpop.f32.mrf.mxu0
  %v1837 = vadd.f32 %v1724, %v1836
  %v1838 = vpop.f32.mrf.mxu0
  %v1839 = vadd.f32 %v1726, %v1838
  %1840 = vmatprep.mubr.f32.mxu0 %v1181
  %1841 = vmatmul.mubr.f32.gmra.mxu0 %v985
  %v1842 = vpop.f32.mrf.mxu0
  %v1843 = vadd.f32 %v1730, %v1842
  %v1844 = vpop.f32.mrf.mxu0
  %v1845 = vadd.f32 %v1732, %v1844
  %1846 = vmatprep.mubr.f32.mxu0 %v1186
  %1847 = vmatmul.mubr.f32.gmra.mxu0 %v991
  %v1848 = vpop.f32.mrf.mxu0
  %v1849 = vadd.f32 %v1736, %v1848
  %v1850 = vpop.f32.mrf.mxu0
  %v1851 = vadd.f32 %v1738, %v1850
  %1852 = vmatprep.mubr.f32.mxu0 %v1191
  %1853 = vmatmul.mubr.f32.gmra.mxu0 %v997
  %v1854 = vpop.f32.mrf.mxu0
  %v1855 = vadd.f32 %v1742, %v1854
  %v1856 = vpop.f32.mrf.mxu0
  %v1857 = vadd.f32 %v1744, %v1856
  %1858 = vmatprep.mubr.f32.mxu0 %v1196
  %1859 = vmatmul.mubr.f32.gmra.mxu0 %v1003
  %v1860 = vpop.f32.mrf.mxu0
  %v1861 = vadd.f32 %v1748, %v1860
  %v1862 = vpop.f32.mrf.mxu0
  %v1863 = vadd.f32 %v1750, %v1862
  %1864 = vmatprep.mubr.f32.mxu0 %v1201
  %1865 = vmatmul.mubr.f32.gmra.mxu0 %v1009
  %v1866 = vpop.f32.mrf.mxu0
  %v1867 = vadd.f32 %v1754, %v1866
  %v1868 = vpop.f32.mrf.mxu0
  %v1869 = vadd.f32 %v1756, %v1868
  %1870 = vdwg.mxu0
  %1871 = vmatprep.subr.mxu0 %v1467
  %1872 = vmatpush1.msra.mxu0 %v1466
  %1873 = vmatprep.subr.mxu0 %v1465
  %1874 = vmatpush1.msra.mxu0 %v1464
  %1875 = vmatprep.subr.mxu0 %v1463
  %1876 = vmatpush1.msra.mxu0 %v1462
  %1877 = vmatprep.subr.mxu0 %v1461
  %1878 = vmatpush1.msra.mxu0 %v1460
  %1879 = vmatprep.subr.mxu0 %v1459
  %1880 = vmatpush1.msra.mxu0 %v1458
  %1881 = vmatprep.subr.mxu0 %v1457
  %1882 = vmatpush1.msra.mxu0 %v1456
  %1883 = vmatprep.subr.mxu0 %v1455
  %1884 = vmatpush1.msra.mxu0 %v1454
  %1885 = vmatprep.subr.mxu0 %v1453
  %1886 = vmatpush1.msra.mxu0 %v1452
  %1887 = vmatprep.subr.mxu0 %v1451
  %1888 = vmatpush1.msra.mxu0 %v1450
  %1889 = vmatprep.subr.mxu0 %v1449
  %1890 = vmatpush1.msra.mxu0 %v1448
  %1891 = vmatprep.subr.mxu0 %v1447
  %1892 = vmatpush1.msra.mxu0 %v1446
  %1893 = vmatprep.subr.mxu0 %v1445
  %1894 = vmatpush1.msra.mxu0 %v1444
  %1895 = vmatprep.subr.mxu0 %v1443
  %1896 = vmatpush1.msra.mxu0 %v1442
  %1897 = vmatprep.subr.mxu0 %v1441
  %1898 = vmatpush1.msra.mxu0 %v1440
  %1899 = vmatprep.subr.mxu0 %v1439
  %1900 = vmatpush1.msra.mxu0 %v1438
  %1901 = vmatprep.subr.mxu0 %v1437
  %1902 = vmatpush1.msra.mxu0 %v1436
  %1903 = vmatprep.subr.mxu0 %v1499
  %1904 = vmatpush2.msra.mxu0 %v1498
  %1905 = vmatprep.subr.mxu0 %v1497
  %1906 = vmatpush2.msra.mxu0 %v1496
  %1907 = vmatprep.subr.mxu0 %v1495
  %1908 = vmatpush2.msra.mxu0 %v1494
  %1909 = vmatprep.subr.mxu0 %v1493
  %1910 = vmatpush2.msra.mxu0 %v1492
  %1911 = vmatprep.subr.mxu0 %v1491
  %1912 = vmatpush2.msra.mxu0 %v1490
  %1913 = vmatprep.subr.mxu0 %v1489
  %1914 = vmatpush2.msra.mxu0 %v1488
  %1915 = vmatprep.subr.mxu0 %v1487
  %1916 = vmatpush2.msra.mxu0 %v1486
  %1917 = vmatprep.subr.mxu0 %v1485
  %1918 = vmatpush2.msra.mxu0 %v1484
  %1919 = vmatprep.subr.mxu0 %v1483
  %1920 = vmatpush2.msra.mxu0 %v1482
  %1921 = vmatprep.subr.mxu0 %v1481
  %1922 = vmatpush2.msra.mxu0 %v1480
  %1923 = vmatprep.subr.mxu0 %v1479
  %1924 = vmatpush2.msra.mxu0 %v1478
  %1925 = vmatprep.subr.mxu0 %v1477
  %1926 = vmatpush2.msra.mxu0 %v1476
  %1927 = vmatprep.subr.mxu0 %v1475
  %1928 = vmatpush2.msra.mxu0 %v1474
  %1929 = vmatprep.subr.mxu0 %v1473
  %1930 = vmatpush2.msra.mxu0 %v1472
  %1931 = vmatprep.subr.mxu0 %v1471
  %1932 = vmatpush2.msra.mxu0 %v1470
  %1933 = vmatprep.subr.mxu0 %v1469
  %1934 = vmatpush2.msra.mxu0 %v1468
  %1935 = vmatprep.mubr.f32.mxu0 %v1015
  %1936 = vmatmul.mubr.f32.gmra.mxu0 %v1013
  %v1937 = vpop.f32.mrf.mxu0
  %v1938 = vadd.f32 %v1825, %v1937
  %v1939 = vpop.f32.mrf.mxu0
  %v1940 = vadd.f32 %v1827, %v1939
  %1941 = vmatprep.mubr.f32.mxu0 %v1021
  %1942 = vmatmul.mubr.f32.gmra.mxu0 %v1019
  %v1943 = vpop.f32.mrf.mxu0
  %v1944 = vadd.f32 %v1831, %v1943
  %v1945 = vpop.f32.mrf.mxu0
  %v1946 = vadd.f32 %v1833, %v1945
  %1947 = vmatprep.mubr.f32.mxu0 %v1027
  %1948 = vmatmul.mubr.f32.gmra.mxu0 %v1025
  %v1949 = vpop.f32.mrf.mxu0
  %v1950 = vadd.f32 %v1837, %v1949
  %v1951 = vpop.f32.mrf.mxu0
  %v1952 = vadd.f32 %v1839, %v1951
  %1953 = vmatprep.mubr.f32.mxu0 %v1033
  %1954 = vmatmul.mubr.f32.gmra.mxu0 %v1031
  %v1955 = vpop.f32.mrf.mxu0
  %v1956 = vadd.f32 %v1843, %v1955
  %v1957 = vpop.f32.mrf.mxu0
  %v1958 = vadd.f32 %v1845, %v1957
  %1959 = vmatprep.mubr.f32.mxu0 %v1039
  %1960 = vmatmul.mubr.f32.gmra.mxu0 %v1037
  %v1961 = vpop.f32.mrf.mxu0
  %v1962 = vadd.f32 %v1849, %v1961
  %v1963 = vpop.f32.mrf.mxu0
  %v1964 = vadd.f32 %v1851, %v1963
  %1965 = vmatprep.mubr.f32.mxu0 %v1045
  %1966 = vmatmul.mubr.f32.gmra.mxu0 %v1043
  %v1967 = vpop.f32.mrf.mxu0
  %v1968 = vadd.f32 %v1855, %v1967
  %v1969 = vpop.f32.mrf.mxu0
  %v1970 = vadd.f32 %v1857, %v1969
  %1971 = vmatprep.mubr.f32.mxu0 %v1051
  %1972 = vmatmul.mubr.f32.gmra.mxu0 %v1049
  %v1973 = vpop.f32.mrf.mxu0
  %v1974 = vadd.f32 %v1861, %v1973
  %v1975 = vpop.f32.mrf.mxu0
  %v1976 = vadd.f32 %v1863, %v1975
  %1977 = vmatprep.mubr.f32.mxu0 %v1057
  %1978 = vmatmul.mubr.f32.gmra.mxu0 %v1055
  %v1979 = vpop.f32.mrf.mxu0
  %v1980 = vadd.f32 %v1867, %v1979
  %v1981 = vpop.f32.mrf.mxu0
  %v1982 = vadd.f32 %v1869, %v1981
  %1983 = vdwg.mxu0
  %1984 = vmatprep.subr.mxu0 %v1531
  %1985 = vmatpush1.msra.mxu0 %v1530
  %1986 = vmatprep.subr.mxu0 %v1529
  %1987 = vmatpush1.msra.mxu0 %v1528
  %1988 = vmatprep.subr.mxu0 %v1527
  %1989 = vmatpush1.msra.mxu0 %v1526
  %1990 = vmatprep.subr.mxu0 %v1525
  %1991 = vmatpush1.msra.mxu0 %v1524
  %1992 = vmatprep.subr.mxu0 %v1523
  %1993 = vmatpush1.msra.mxu0 %v1522
  %1994 = vmatprep.subr.mxu0 %v1521
  %1995 = vmatpush1.msra.mxu0 %v1520
  %1996 = vmatprep.subr.mxu0 %v1519
  %1997 = vmatpush1.msra.mxu0 %v1518
  %1998 = vmatprep.subr.mxu0 %v1517
  %1999 = vmatpush1.msra.mxu0 %v1516
  %2000 = vmatprep.subr.mxu0 %v1515
  %2001 = vmatpush1.msra.mxu0 %v1514
  %2002 = vmatprep.subr.mxu0 %v1513
  %2003 = vmatpush1.msra.mxu0 %v1512
  %2004 = vmatprep.subr.mxu0 %v1511
  %2005 = vmatpush1.msra.mxu0 %v1510
  %2006 = vmatprep.subr.mxu0 %v1509
  %2007 = vmatpush1.msra.mxu0 %v1508
  %2008 = vmatprep.subr.mxu0 %v1507
  %2009 = vmatpush1.msra.mxu0 %v1506
  %2010 = vmatprep.subr.mxu0 %v1505
  %2011 = vmatpush1.msra.mxu0 %v1504
  %2012 = vmatprep.subr.mxu0 %v1503
  %2013 = vmatpush1.msra.mxu0 %v1502
  %2014 = vmatprep.subr.mxu0 %v1501
  %2015 = vmatpush1.msra.mxu0 %v1500
  %2016 = vmatprep.subr.mxu0 0.0
  %2017 = vmatpush2.msra.mxu0 0.0
  %2018 = vmatprep.subr.mxu0 0.0
  %2019 = vmatpush2.msra.mxu0 0.0
  %2020 = vmatprep.subr.mxu0 0.0
  %2021 = vmatpush2.msra.mxu0 0.0
  %2022 = vmatprep.subr.mxu0 0.0
  %2023 = vmatpush2.msra.mxu0 0.0
  %2024 = vmatprep.subr.mxu0 0.0
  %2025 = vmatpush2.msra.mxu0 0.0
  %2026 = vmatprep.subr.mxu0 0.0
  %2027 = vmatpush2.msra.mxu0 0.0
  %2028 = vmatprep.subr.mxu0 0.0
  %2029 = vmatpush2.msra.mxu0 0.0
  %2030 = vmatprep.subr.mxu0 0.0
  %2031 = vmatpush2.msra.mxu0 0.0
  %2032 = vmatprep.subr.mxu0 0.0
  %2033 = vmatpush2.msra.mxu0 0.0
  %2034 = vmatprep.subr.mxu0 0.0
  %2035 = vmatpush2.msra.mxu0 0.0
  %2036 = vmatprep.subr.mxu0 0.0
  %2037 = vmatpush2.msra.mxu0 0.0
  %2038 = vmatprep.subr.mxu0 0.0
  %2039 = vmatpush2.msra.mxu0 0.0
  %2040 = vmatprep.subr.mxu0 0.0
  %2041 = vmatpush2.msra.mxu0 0.0
  %2042 = vmatprep.subr.mxu0 0.0
  %2043 = vmatpush2.msra.mxu0 0.0
  %2044 = vmatprep.subr.mxu0 0.0
  %2045 = vmatpush2.msra.mxu0 0.0
  %2046 = vmatprep.subr.mxu0 0.0
  %2047 = vmatpush2.msra.mxu0 0.0
  %2048 = vmatprep.mubr.f32.mxu0 0.0
  %2049 = vmatmul.mubr.f32.gmra.mxu0 %v1206
  %v2050 = vpop.f32.mrf.mxu0
  %v2051 = vadd.f32 %v1938, %v2050
  %v2052 = vpop.f32.mrf.mxu0
  %v2053 = vadd.f32 %v1940, %v2052
  %2054 = vmatprep.mubr.f32.mxu0 0.0
  %2055 = vmatmul.mubr.f32.gmra.mxu0 %v1211
  %v2056 = vpop.f32.mrf.mxu0
  %v2057 = vadd.f32 %v1944, %v2056
  %v2058 = vpop.f32.mrf.mxu0
  %v2059 = vadd.f32 %v1946, %v2058
  %2060 = vmatprep.mubr.f32.mxu0 0.0
  %2061 = vmatmul.mubr.f32.gmra.mxu0 %v1216
  %v2062 = vpop.f32.mrf.mxu0
  %v2063 = vadd.f32 %v1950, %v2062
  %v2064 = vpop.f32.mrf.mxu0
  %v2065 = vadd.f32 %v1952, %v2064
  %2066 = vmatprep.mubr.f32.mxu0 0.0
  %2067 = vmatmul.mubr.f32.gmra.mxu0 %v1221
  %v2068 = vpop.f32.mrf.mxu0
  %v2069 = vadd.f32 %v1956, %v2068
  %v2070 = vpop.f32.mrf.mxu0
  %v2071 = vadd.f32 %v1958, %v2070
  %2072 = vmatprep.mubr.f32.mxu0 0.0
  %2073 = vmatmul.mubr.f32.gmra.mxu0 %v1226
  %v2074 = vpop.f32.mrf.mxu0
  %v2075 = vadd.f32 %v1962, %v2074
  %v2076 = vpop.f32.mrf.mxu0
  %v2077 = vadd.f32 %v1964, %v2076
  %2078 = vmatprep.mubr.f32.mxu0 0.0
  %2079 = vmatmul.mubr.f32.gmra.mxu0 %v1231
  %v2080 = vpop.f32.mrf.mxu0
  %v2081 = vadd.f32 %v1968, %v2080
  %v2082 = vpop.f32.mrf.mxu0
  %v2083 = vadd.f32 %v1970, %v2082
  %2084 = vmatprep.mubr.f32.mxu0 0.0
  %2085 = vmatmul.mubr.f32.gmra.mxu0 %v1236
  %v2086 = vpop.f32.mrf.mxu0
  %v2087 = vadd.f32 %v1974, %v2086
  %v2088 = vpop.f32.mrf.mxu0
  %v2089 = vadd.f32 %v1976, %v2088
  %2090 = vmatprep.mubr.f32.mxu0 0.0
  %2091 = vmatmul.mubr.f32.gmra.mxu0 %v1241
  %v2092 = vpop.f32.mrf.mxu0
  %v2093 = vadd.f32 %v1980, %v2092
  %v2094 = vpop.f32.mrf.mxu0
  %v2095 = vadd.f32 %v1982, %v2094
  %2096 = vdwg.mxu0
  %s2097 = scalar_lea.vmem %s8, 2
  %v2098 = vld [vmem:[%s2097] ss:$8 sm:$0x3]
  %v2100 = vlaneseq
  %v2101 = vshrl.u32 %v2100, 7
  %v2102 = vsub.s32 0, %v2101
  %v2103 = vrot.slane %v2098, %v2102
  %v2104 = vlaneseq
  %v2105 = vshrl.u32 %v2104, 7
  %v2106 = vsub.s32 1, %v2105
  %v2107 = vrot.slane %v2098, %v2106
  %v2110 = vmul.f32 %v2051, %v2103
  %v2111 = vmul.f32 %v2053, %v2107
  %v2112 = vmul.f32 %v2057, %v2103
  %v2113 = vmul.f32 %v2059, %v2107
  %v2114 = vmul.f32 %v2063, %v2103
  %v2115 = vmul.f32 %v2065, %v2107
  %v2116 = vmul.f32 %v2069, %v2103
  %v2117 = vmul.f32 %v2071, %v2107
  %v2118 = vmul.f32 %v2075, %v2103
  %v2119 = vmul.f32 %v2077, %v2107
  %v2120 = vmul.f32 %v2081, %v2103
  %v2121 = vmul.f32 %v2083, %v2107
  %v2122 = vmul.f32 %v2087, %v2103
  %v2123 = vmul.f32 %v2089, %v2107
  %v2124 = vmul.f32 %v2093, %v2103
  %v2125 = vmul.f32 %v2095, %v2107
  %s2126 = scalar_lea.vmem %s8, 3
  %v2127 = vld [vmem:[%s2126] ss:$8 sm:$0x3]
  %v2129 = vlaneseq
  %v2130 = vshrl.u32 %v2129, 7
  %v2131 = vsub.s32 0, %v2130
  %v2132 = vrot.slane %v2127, %v2131
  %v2133 = vlaneseq
  %v2134 = vshrl.u32 %v2133, 7
  %v2135 = vsub.s32 1, %v2134
  %v2136 = vrot.slane %v2127, %v2135
  %v2139 = vadd.f32 %v2110, %v2132
  %v2140 = vadd.f32 %v2111, %v2136
  %v2141 = vadd.f32 %v2112, %v2132
  %v2142 = vadd.f32 %v2113, %v2136
  %v2143 = vadd.f32 %v2114, %v2132
  %v2144 = vadd.f32 %v2115, %v2136
  %v2145 = vadd.f32 %v2116, %v2132
  %v2146 = vadd.f32 %v2117, %v2136
  %v2147 = vadd.f32 %v2118, %v2132
  %v2148 = vadd.f32 %v2119, %v2136
  %v2149 = vadd.f32 %v2120, %v2132
  %v2150 = vadd.f32 %v2121, %v2136
  %v2151 = vadd.f32 %v2122, %v2132
  %v2152 = vadd.f32 %v2123, %v2136
  %v2153 = vadd.f32 %v2124, %v2132
  %v2154 = vadd.f32 %v2125, %v2136
  %v2155 = vmax.f32 %v2139, 0.0
  %v2156 = vmax.f32 %v2140, 0.0
  %v2157 = vmax.f32 %v2141, 0.0
  %v2158 = vmax.f32 %v2142, 0.0
  %v2159 = vmax.f32 %v2143, 0.0
  %v2160 = vmax.f32 %v2144, 0.0
  %v2161 = vmax.f32 %v2145, 0.0
  %v2162 = vmax.f32 %v2146, 0.0
  %v2163 = vmax.f32 %v2147, 0.0
  %v2164 = vmax.f32 %v2148, 0.0
  %v2165 = vmax.f32 %v2149, 0.0
  %v2166 = vmax.f32 %v2150, 0.0
  %v2167 = vmax.f32 %v2151, 0.0
  %v2168 = vmax.f32 %v2152, 0.0
  %v2169 = vmax.f32 %v2153, 0.0
  %v2170 = vmax.f32 %v2154, 0.0
  %v2171 = vadd.f32 %v2155, %v2157
  %v2172 = vadd.f32 %v2171, %v2159
  %v2173 = vadd.f32 %v2172, %v2161
  %v2174 = vrot.slane %v2173, 4
  %v2175 = vadd.f32 %v2173, %v2174
  %v2176 = vrot.slane %v2175, 2
  %v2177 = vadd.f32 %v2175, %v2176
  %v2178 = vrot.slane %v2177, 1
  %v2179 = vadd.f32 %v2177, %v2178
  %vm2180 = vcmask 523264
  %v2181 = vsel %vm2180, %v2156, 0.0
  %v2182 = vsel %vm2180, %v2158, 0.0
  %v2183 = vadd.f32 %v2181, %v2182
  %v2184 = vsel %vm2180, %v2160, 0.0
  %v2185 = vadd.f32 %v2183, %v2184
  %v2186 = vsel %vm2180, %v2162, 0.0
  %v2187 = vadd.f32 %v2185, %v2186
  %v2188 = vrot.slane %v2187, 4
  %v2189 = vadd.f32 %v2187, %v2188
  %v2190 = vrot.slane %v2189, 2
  %v2191 = vadd.f32 %v2189, %v2190
  %v2192 = vrot.slane %v2191, 1
  %v2193 = vadd.f32 %v2191, %v2192
  %v2194 = vadd.f32 %v2163, %v2165
  %v2195 = vadd.f32 %v2194, %v2167
  %v2196 = vadd.f32 %v2195, %v2169
  %v2197 = vrot.slane %v2196, 4
  %v2198 = vadd.f32 %v2196, %v2197
  %v2199 = vrot.slane %v2198, 2
  %v2200 = vadd.f32 %v2198, %v2199
  %v2201 = vrot.slane %v2200, 1
  %v2202 = vadd.f32 %v2200, %v2201
  %v2203 = vsel %vm2180, %v2164, 0.0
  %v2204 = vsel %vm2180, %v2166, 0.0
  %v2205 = vadd.f32 %v2203, %v2204
  %v2206 = vsel %vm2180, %v2168, 0.0
  %v2207 = vadd.f32 %v2205, %v2206
  %v2208 = vsel %vm2180, %v2170, 0.0
  %v2209 = vadd.f32 %v2207, %v2208
  %v2210 = vrot.slane %v2209, 4
  %v2211 = vadd.f32 %v2209, %v2210
  %v2212 = vrot.slane %v2211, 2
  %v2213 = vadd.f32 %v2211, %v2212
  %v2214 = vrot.slane %v2213, 1
  %v2215 = vadd.f32 %v2213, %v2214
  %vm2216 = vcmask 1040384
  %v2217 = vsel %vm2216, %v2179, %v2202
  %v2218 = vsel %vm2216, %v2193, %v2215
  %v2219 = vld [vmem:[%s6] sm:$0xff]
  %v2220 = vld [vmem:[%s6 + $0x8] sm:$0xff]
  %v2221 = vld [vmem:[%s6 + $0x10] sm:$0xff]
  %v2222 = vld [vmem:[%s6 + $0x18] sm:$0xff]
  %v2223 = vld [vmem:[%s6 + $0x20] sm:$0xff]
  %v2224 = vld [vmem:[%s6 + $0x28] sm:$0xff]
  %v2225 = vld [vmem:[%s6 + $0x30] sm:$0xff]
  %v2226 = vld [vmem:[%s6 + $0x38] sm:$0xff]
  %v2227 = vld [vmem:[%s6 + $0x40] sm:$0xff]
  %v2228 = vld [vmem:[%s6 + $0x48] sm:$0xff]
  %v2229 = vld [vmem:[%s6 + $0x50] sm:$0xff]
  %v2230 = vld [vmem:[%s6 + $0x58] sm:$0xff]
  %v2231 = vld [vmem:[%s6 + $0x60] sm:$0xff]
  %v2232 = vld [vmem:[%s6 + $0x68] sm:$0xff]
  %v2233 = vld [vmem:[%s6 + $0x70] sm:$0xff]
  %v2234 = vld [vmem:[%s6 + $0x78] sm:$0xff]
  %v2235 = vld [vmem:[%s6 + $0x80] sm:$0xff]
  %v2236 = vld [vmem:[%s6 + $0x88] sm:$0xff]
  %v2237 = vld [vmem:[%s6 + $0x90] sm:$0xff]
  %v2238 = vld [vmem:[%s6 + $0x98] sm:$0xff]
  %v2239 = vld [vmem:[%s6 + $0xa0] sm:$0xff]
  %v2240 = vld [vmem:[%s6 + $0xa8] sm:$0xff]
  %v2241 = vld [vmem:[%s6 + $0xb0] sm:$0xff]
  %v2242 = vld [vmem:[%s6 + $0xb8] sm:$0xff]
  %v2244 = vsel %vm2180, %v2218, 0
  %2246 = vmatprep.subr.mxu0 0.0
  %2247 = vmatpush1.msra.mxu0 %v2234
  %2248 = vmatprep.subr.mxu0 0.0
  %2249 = vmatpush1.msra.mxu0 %v2233
  %2250 = vmatprep.subr.mxu0 0.0
  %2251 = vmatpush1.msra.mxu0 %v2232
  %2252 = vmatprep.subr.mxu0 0.0
  %2253 = vmatpush1.msra.mxu0 %v2231
  %2254 = vmatprep.subr.mxu0 0.0
  %2255 = vmatpush1.msra.mxu0 %v2230
  %2256 = vmatprep.subr.mxu0 0.0
  %2257 = vmatpush1.msra.mxu0 %v2229
  %2258 = vmatprep.subr.mxu0 0.0
  %2259 = vmatpush1.msra.mxu0 %v2228
  %2260 = vmatprep.subr.mxu0 0.0
  %2261 = vmatpush1.msra.mxu0 %v2227
  %2262 = vmatprep.subr.mxu0 0.0
  %2263 = vmatpush1.msra.mxu0 %v2226
  %2264 = vmatprep.subr.mxu0 0.0
  %2265 = vmatpush1.msra.mxu0 %v2225
  %2266 = vmatprep.subr.mxu0 0.0
  %2267 = vmatpush1.msra.mxu0 %v2224
  %2268 = vmatprep.subr.mxu0 0.0
  %2269 = vmatpush1.msra.mxu0 %v2223
  %2270 = vmatprep.subr.mxu0 0.0
  %2271 = vmatpush1.msra.mxu0 %v2222
  %2272 = vmatprep.subr.mxu0 0.0
  %2273 = vmatpush1.msra.mxu0 %v2221
  %2274 = vmatprep.subr.mxu0 0.0
  %2275 = vmatpush1.msra.mxu0 %v2220
  %2276 = vmatprep.subr.mxu0 0.0
  %2277 = vmatpush1.msra.mxu0 %v2219
  %2278 = vmatprep.subr.mxu0 0.0
  %2279 = vmatpush2.msra.mxu0 0.0
  %2280 = vmatprep.subr.mxu0 0.0
  %2281 = vmatpush2.msra.mxu0 0.0
  %2282 = vmatprep.subr.mxu0 0.0
  %2283 = vmatpush2.msra.mxu0 0.0
  %2284 = vmatprep.subr.mxu0 0.0
  %2285 = vmatpush2.msra.mxu0 0.0
  %2286 = vmatprep.subr.mxu0 0.0
  %2287 = vmatpush2.msra.mxu0 0.0
  %2288 = vmatprep.subr.mxu0 0.0
  %2289 = vmatpush2.msra.mxu0 0.0
  %2290 = vmatprep.subr.mxu0 0.0
  %2291 = vmatpush2.msra.mxu0 0.0
  %2292 = vmatprep.subr.mxu0 0.0
  %2293 = vmatpush2.msra.mxu0 0.0
  %2294 = vmatprep.subr.mxu0 0.0
  %2295 = vmatpush2.msra.mxu0 %v2242
  %2296 = vmatprep.subr.mxu0 0.0
  %2297 = vmatpush2.msra.mxu0 %v2241
  %2298 = vmatprep.subr.mxu0 0.0
  %2299 = vmatpush2.msra.mxu0 %v2240
  %2300 = vmatprep.subr.mxu0 0.0
  %2301 = vmatpush2.msra.mxu0 %v2239
  %2302 = vmatprep.subr.mxu0 0.0
  %2303 = vmatpush2.msra.mxu0 %v2238
  %2304 = vmatprep.subr.mxu0 0.0
  %2305 = vmatpush2.msra.mxu0 %v2237
  %2306 = vmatprep.subr.mxu0 0.0
  %2307 = vmatpush2.msra.mxu0 %v2236
  %2308 = vmatprep.subr.mxu0 0.0
  %2309 = vmatpush2.msra.mxu0 %v2235
  %2310 = vmatprep.mubr.f32.mxu0 %v2244
  %2311 = vmatmul.mubr.f32.gmra.mxu0 %v2217
  %v2312 = vpop.f32.mrf.mxu0
  %v2313 = vadd.f32 0.0, %v2312
  %v2314 = vpop.f32.mrf.mxu0
  %2315 = vdwg.mxu0
  %v2316 = vld [vmem:[%s7] sm:$0xff]
  %v2317 = vld [vmem:[%s7 + $0x10] sm:$0xff]
  %v2318 = vld [vmem:[%s7 + $0x20] sm:$0xff]
  %v2319 = vld [vmem:[%s8 + $0x7] ss:$0 sm:$0xff]
  %vm2320 = vcmask 195584
  %v2322 = vsel %vm2320, %v2313, 0
  %2324 = vmatprep.subr.mxu0 0.0
  %2325 = vmatpush1.msra.mxu0 0.0
  %2326 = vmatprep.subr.mxu0 0.0
  %2327 = vmatpush1.msra.mxu0 0.0
  %2328 = vmatprep.subr.mxu0 0.0
  %2329 = vmatpush1.msra.mxu0 0.0
  %2330 = vmatprep.subr.mxu0 0.0
  %2331 = vmatpush1.msra.mxu0 0.0
  %2332 = vmatprep.subr.mxu0 0.0
  %2333 = vmatpush1.msra.mxu0 0.0
  %2334 = vmatprep.subr.mxu0 0.0
  %2335 = vmatpush1.msra.mxu0 0.0
  %2336 = vmatprep.subr.mxu0 0.0
  %2337 = vmatpush1.msra.mxu0 0.0
  %2338 = vmatprep.subr.mxu0 0.0
  %2339 = vmatpush1.msra.mxu0 0.0
  %2340 = vmatprep.subr.mxu0 0.0
  %2341 = vmatpush1.msra.mxu0 0.0
  %2342 = vmatprep.subr.mxu0 0.0
  %2343 = vmatpush1.msra.mxu0 0.0
  %2344 = vmatprep.subr.mxu0 0.0
  %2345 = vmatpush1.msra.mxu0 0.0
  %2346 = vmatprep.subr.mxu0 0.0
  %2347 = vmatpush1.msra.mxu0 0.0
  %2348 = vmatprep.subr.mxu0 0.0
  %2349 = vmatpush1.msra.mxu0 0.0
  %2350 = vmatprep.subr.mxu0 0.0
  %2351 = vmatpush1.msra.mxu0 %v2318
  %2352 = vmatprep.subr.mxu0 0.0
  %2353 = vmatpush1.msra.mxu0 %v2317
  %2354 = vmatprep.subr.mxu0 0.0
  %2355 = vmatpush1.msra.mxu0 %v2316
  %2356 = vmatprep.subr.mxu0 0.0
  %2357 = vmatpush2.msra.mxu0 0.0
  %2358 = vmatprep.subr.mxu0 0.0
  %2359 = vmatpush2.msra.mxu0 0.0
  %2360 = vmatprep.subr.mxu0 0.0
  %2361 = vmatpush2.msra.mxu0 0.0
  %2362 = vmatprep.subr.mxu0 0.0
  %2363 = vmatpush2.msra.mxu0 0.0
  %2364 = vmatprep.subr.mxu0 0.0
  %2365 = vmatpush2.msra.mxu0 0.0
  %2366 = vmatprep.subr.mxu0 0.0
  %2367 = vmatpush2.msra.mxu0 0.0
  %2368 = vmatprep.subr.mxu0 0.0
  %2369 = vmatpush2.msra.mxu0 0.0
  %2370 = vmatprep.subr.mxu0 0.0
  %2371 = vmatpush2.msra.mxu0 0.0
  %2372 = vmatprep.subr.mxu0 0.0
  %2373 = vmatpush2.msra.mxu0 0.0
  %2374 = vmatprep.subr.mxu0 0.0
  %2375 = vmatpush2.msra.mxu0 0.0
  %2376 = vmatprep.subr.mxu0 0.0
  %2377 = vmatpush2.msra.mxu0 0.0
  %2378 = vmatprep.subr.mxu0 0.0
  %2379 = vmatpush2.msra.mxu0 0.0
  %2380 = vmatprep.subr.mxu0 0.0
  %2381 = vmatpush2.msra.mxu0 0.0
  %2382 = vmatprep.subr.mxu0 0.0
  %2383 = vmatpush2.msra.mxu0 0.0
  %2384 = vmatprep.subr.mxu0 0.0
  %2385 = vmatpush2.msra.mxu0 0.0
  %2386 = vmatprep.subr.mxu0 0.0
  %2387 = vmatpush2.msra.mxu0 0.0
  %2388 = vmatprep.mubr.f32.mxu0 0.0
  %2389 = vmatmul.mubr.f32.gmra.mxu0 %v2322
  %v2390 = vpop.f32.mrf.mxu0
  %v2391 = vadd.f32 %v2319, %v2390
  %v2392 = vpop.f32.mrf.mxu0
  %2393 = vdwg.mxu0
  %v2394 = vmax.f32 %v2391, 0.0
  %v2395 = vld [vmem:[%s7 + $0x30] sm:$0xff]
  %v2396 = vld [vmem:[%s7 + $0x38] sm:$0xff]
  %s2397 = scalar_lea.vmem %s8, 24
  %v2398 = vld [vmem:[%s2397] ss:$8 sm:$0x3]
  %v2400 = vlaneseq
  %v2401 = vshrl.u32 %v2400, 7
  %v2402 = vsub.s32 0, %v2401
  %v2403 = vrot.slane %v2398, %v2402
  %v2404 = vlaneseq
  %v2405 = vshrl.u32 %v2404, 7
  %v2406 = vsub.s32 1, %v2405
  %v2407 = vrot.slane %v2398, %v2406
  %vm2410 = vcmask 64512
  %v2412 = vsel %vm2410, %v2394, 0
  %2414 = vmatprep.subr.mxu0 0.0
  %2415 = vmatpush1.msra.mxu0 0.0
  %2416 = vmatprep.subr.mxu0 0.0
  %2417 = vmatpush1.msra.mxu0 0.0
  %2418 = vmatprep.subr.mxu0 0.0
  %2419 = vmatpush1.msra.mxu0 0.0
  %2420 = vmatprep.subr.mxu0 0.0
  %2421 = vmatpush1.msra.mxu0 0.0
  %2422 = vmatprep.subr.mxu0 0.0
  %2423 = vmatpush1.msra.mxu0 0.0
  %2424 = vmatprep.subr.mxu0 0.0
  %2425 = vmatpush1.msra.mxu0 0.0
  %2426 = vmatprep.subr.mxu0 0.0
  %2427 = vmatpush1.msra.mxu0 0.0
  %2428 = vmatprep.subr.mxu0 0.0
  %2429 = vmatpush1.msra.mxu0 0.0
  %2430 = vmatprep.subr.mxu0 0.0
  %2431 = vmatpush1.msra.mxu0 0.0
  %2432 = vmatprep.subr.mxu0 0.0
  %2433 = vmatpush1.msra.mxu0 0.0
  %2434 = vmatprep.subr.mxu0 0.0
  %2435 = vmatpush1.msra.mxu0 0.0
  %2436 = vmatprep.subr.mxu0 0.0
  %2437 = vmatpush1.msra.mxu0 0.0
  %2438 = vmatprep.subr.mxu0 0.0
  %2439 = vmatpush1.msra.mxu0 0.0
  %2440 = vmatprep.subr.mxu0 0.0
  %2441 = vmatpush1.msra.mxu0 0.0
  %2442 = vmatprep.subr.mxu0 0.0
  %2443 = vmatpush1.msra.mxu0 0.0
  %2444 = vmatprep.subr.mxu0 %v2396
  %2445 = vmatpush1.msra.mxu0 %v2395
  %2446 = vmatprep.subr.mxu0 0.0
  %2447 = vmatpush2.msra.mxu0 0.0
  %2448 = vmatprep.subr.mxu0 0.0
  %2449 = vmatpush2.msra.mxu0 0.0
  %2450 = vmatprep.subr.mxu0 0.0
  %2451 = vmatpush2.msra.mxu0 0.0
  %2452 = vmatprep.subr.mxu0 0.0
  %2453 = vmatpush2.msra.mxu0 0.0
  %2454 = vmatprep.subr.mxu0 0.0
  %2455 = vmatpush2.msra.mxu0 0.0
  %2456 = vmatprep.subr.mxu0 0.0
  %2457 = vmatpush2.msra.mxu0 0.0
  %2458 = vmatprep.subr.mxu0 0.0
  %2459 = vmatpush2.msra.mxu0 0.0
  %2460 = vmatprep.subr.mxu0 0.0
  %2461 = vmatpush2.msra.mxu0 0.0
  %2462 = vmatprep.subr.mxu0 0.0
  %2463 = vmatpush2.msra.mxu0 0.0
  %2464 = vmatprep.subr.mxu0 0.0
  %2465 = vmatpush2.msra.mxu0 0.0
  %2466 = vmatprep.subr.mxu0 0.0
  %2467 = vmatpush2.msra.mxu0 0.0
  %2468 = vmatprep.subr.mxu0 0.0
  %2469 = vmatpush2.msra.mxu0 0.0
  %2470 = vmatprep.subr.mxu0 0.0
  %2471 = vmatpush2.msra.mxu0 0.0
  %2472 = vmatprep.subr.mxu0 0.0
  %2473 = vmatpush2.msra.mxu0 0.0
  %2474 = vmatprep.subr.mxu0 0.0
  %2475 = vmatpush2.msra.mxu0 0.0
  %2476 = vmatprep.subr.mxu0 0.0
  %2477 = vmatpush2.msra.mxu0 0.0
  %2478 = vmatprep.mubr.f32.mxu0 0.0
  %2479 = vmatmul.mubr.f32.gmra.mxu0 %v2412
  %v2480 = vpop.f32.mrf.mxu0
  %v2481 = vadd.f32 %v2403, %v2480
  %v2482 = vpop.f32.mrf.mxu0
  %v2483 = vadd.f32 %v2407, %v2482
  %2484 = vdwg.mxu0
  %v2485 = vxor.u32 %v2481, 2147483648
  %v2486 = vxor.u32 %v2483, 2147483648
  %v2487 = vmul.f32 %v2485, 1.442695
  %v2488 = vpow.pop %v2487
  %v2489 = vmul.f32 %v2486, 1.442695
  %v2490 = vpow.pop %v2489
  %v2491 = vadd.f32 %v2488, 1.0
  %v2492 = vadd.f32 %v2490, 1.0
  %v2493 = vrcp.pop %v2491
  %v2494 = vmul.f32 1.0, %v2493
  %v2495 = vrcp.pop %v2492
  %v2496 = vmul.f32 1.0, %v2495
  %v2497 = vlaneseq
  %v2498 = vshrl.u32 %v2497, 7
  %v2499 = vsub.s32 0, %v2498
  %v2500 = vrot.slane %v2494, %v2499
  %v2501 = vlaneseq
  %v2502 = vshrl.u32 %v2501, 7
  %v2503 = vsub.s32 0, %v2502
  %v2504 = vrot.slane %v2496, %v2503
  %v2505 = vmul.f32 %v2155, %v2500
  %v2506 = vmul.f32 %v2156, %v2504
  %v2507 = vmul.f32 %v2157, %v2500
  %v2508 = vmul.f32 %v2158, %v2504
  %v2509 = vmul.f32 %v2159, %v2500
  %v2510 = vmul.f32 %v2160, %v2504
  %v2511 = vmul.f32 %v2161, %v2500
  %v2512 = vmul.f32 %v2162, %v2504
  %v2513 = vlaneseq
  %v2514 = vshrl.u32 %v2513, 7
  %v2515 = vsub.s32 1, %v2514
  %v2516 = vrot.slane %v2494, %v2515
  %v2517 = vlaneseq
  %v2518 = vshrl.u32 %v2517, 7
  %v2519 = vsub.s32 1, %v2518
  %v2520 = vrot.slane %v2496, %v2519
  %v2521 = vmul.f32 %v2163, %v2516
  %v2522 = vmul.f32 %v2164, %v2520
  %v2523 = vmul.f32 %v2165, %v2516
  %v2524 = vmul.f32 %v2166, %v2520
  %v2525 = vmul.f32 %v2167, %v2516
  %v2526 = vmul.f32 %v2168, %v2520
  %v2527 = vmul.f32 %v2169, %v2516
  %v2528 = vmul.f32 %v2170, %v2520
  %v2529 = vld [vmem:[%s9] sm:$0xff]
  %v2530 = vld [vmem:[%s9 + $0x8] sm:$0xff]
  %v2531 = vld [vmem:[%s9 + $0x10] sm:$0xff]
  %v2532 = vld [vmem:[%s9 + $0x18] sm:$0xff]
  %v2533 = vld [vmem:[%s9 + $0x20] sm:$0xff]
  %v2534 = vld [vmem:[%s9 + $0x28] sm:$0xff]
  %v2535 = vld [vmem:[%s9 + $0x30] sm:$0xff]
  %v2536 = vld [vmem:[%s9 + $0x38] sm:$0xff]
  %v2537 = vld [vmem:[%s9 + $0x40] sm:$0xff]
  %v2538 = vld [vmem:[%s9 + $0x48] sm:$0xff]
  %v2539 = vld [vmem:[%s9 + $0x50] sm:$0xff]
  %v2540 = vld [vmem:[%s9 + $0x58] sm:$0xff]
  %v2541 = vld [vmem:[%s9 + $0x60] sm:$0xff]
  %v2542 = vld [vmem:[%s9 + $0x68] sm:$0xff]
  %v2543 = vld [vmem:[%s9 + $0x70] sm:$0xff]
  %v2544 = vld [vmem:[%s9 + $0x78] sm:$0xff]
  %v2545 = vld [vmem:[%s9 + $0x80] sm:$0xff]
  %v2546 = vld [vmem:[%s9 + $0x88] sm:$0xff]
  %v2547 = vld [vmem:[%s9 + $0x90] sm:$0xff]
  %v2548 = vld [vmem:[%s9 + $0x98] sm:$0xff]
  %v2549 = vld [vmem:[%s9 + $0xa0] sm:$0xff]
  %v2550 = vld [vmem:[%s9 + $0xa8] sm:$0xff]
  %v2551 = vld [vmem:[%s9 + $0xb0] sm:$0xff]
  %v2552 = vld [vmem:[%s9 + $0xb8] sm:$0xff]
  %v2554 = vsel %vm2180, %v2506, 0
  %v2557 = vsel %vm2180, %v2508, 0
  %v2560 = vsel %vm2180, %v2510, 0
  %v2563 = vsel %vm2180, %v2512, 0
  %v2566 = vsel %vm2180, %v2522, 0
  %v2569 = vsel %vm2180, %v2524, 0
  %v2572 = vsel %vm2180, %v2526, 0
  %v2575 = vsel %vm2180, %v2528, 0
  %2577 = vmatprep.subr.mxu0 0.0
  %2578 = vmatpush1.msra.mxu0 %v2544
  %2579 = vmatprep.subr.mxu0 0.0
  %2580 = vmatpush1.msra.mxu0 %v2543
  %2581 = vmatprep.subr.mxu0 0.0
  %2582 = vmatpush1.msra.mxu0 %v2542
  %2583 = vmatprep.subr.mxu0 0.0
  %2584 = vmatpush1.msra.mxu0 %v2541
  %2585 = vmatprep.subr.mxu0 0.0
  %2586 = vmatpush1.msra.mxu0 %v2540
  %2587 = vmatprep.subr.mxu0 0.0
  %2588 = vmatpush1.msra.mxu0 %v2539
  %2589 = vmatprep.subr.mxu0 0.0
  %2590 = vmatpush1.msra.mxu0 %v2538
  %2591 = vmatprep.subr.mxu0 0.0
  %2592 = vmatpush1.msra.mxu0 %v2537
  %2593 = vmatprep.subr.mxu0 0.0
  %2594 = vmatpush1.msra.mxu0 %v2536
  %2595 = vmatprep.subr.mxu0 0.0
  %2596 = vmatpush1.msra.mxu0 %v2535
  %2597 = vmatprep.subr.mxu0 0.0
  %2598 = vmatpush1.msra.mxu0 %v2534
  %2599 = vmatprep.subr.mxu0 0.0
  %2600 = vmatpush1.msra.mxu0 %v2533
  %2601 = vmatprep.subr.mxu0 0.0
  %2602 = vmatpush1.msra.mxu0 %v2532
  %2603 = vmatprep.subr.mxu0 0.0
  %2604 = vmatpush1.msra.mxu0 %v2531
  %2605 = vmatprep.subr.mxu0 0.0
  %2606 = vmatpush1.msra.mxu0 %v2530
  %2607 = vmatprep.subr.mxu0 0.0
  %2608 = vmatpush1.msra.mxu0 %v2529
  %2609 = vmatprep.subr.mxu0 0.0
  %2610 = vmatpush2.msra.mxu0 0.0
  %2611 = vmatprep.subr.mxu0 0.0
  %2612 = vmatpush2.msra.mxu0 0.0
  %2613 = vmatprep.subr.mxu0 0.0
  %2614 = vmatpush2.msra.mxu0 0.0
  %2615 = vmatprep.subr.mxu0 0.0
  %2616 = vmatpush2.msra.mxu0 0.0
  %2617 = vmatprep.subr.mxu0 0.0
  %2618 = vmatpush2.msra.mxu0 0.0
  %2619 = vmatprep.subr.mxu0 0.0
  %2620 = vmatpush2.msra.mxu0 0.0
  %2621 = vmatprep.subr.mxu0 0.0
  %2622 = vmatpush2.msra.mxu0 0.0
  %2623 = vmatprep.subr.mxu0 0.0
  %2624 = vmatpush2.msra.mxu0 0.0
  %2625 = vmatprep.subr.mxu0 0.0
  %2626 = vmatpush2.msra.mxu0 %v2552
  %2627 = vmatprep.subr.mxu0 0.0
  %2628 = vmatpush2.msra.mxu0 %v2551
  %2629 = vmatprep.subr.mxu0 0.0
  %2630 = vmatpush2.msra.mxu0 %v2550
  %2631 = vmatprep.subr.mxu0 0.0
  %2632 = vmatpush2.msra.mxu0 %v2549
  %2633 = vmatprep.subr.mxu0 0.0
  %2634 = vmatpush2.msra.mxu0 %v2548
  %2635 = vmatprep.subr.mxu0 0.0
  %2636 = vmatpush2.msra.mxu0 %v2547
  %2637 = vmatprep.subr.mxu0 0.0
  %2638 = vmatpush2.msra.mxu0 %v2546
  %2639 = vmatprep.subr.mxu0 0.0
  %2640 = vmatpush2.msra.mxu0 %v2545
  %2641 = vmatprep.mubr.f32.mxu0 %v2554
  %2642 = vmatmul.mubr.f32.gmra.mxu0 %v2505
  %v2643 = vpop.f32.mrf.mxu0
  %v2644 = vadd.f32 0.0, %v2643
  %v2645 = vpop.f32.mrf.mxu0
  %2646 = vmatprep.mubr.f32.mxu0 %v2557
  %2647 = vmatmul.mubr.f32.gmra.mxu0 %v2507
  %v2648 = vpop.f32.mrf.mxu0
  %v2649 = vadd.f32 0.0, %v2648
  %v2650 = vpop.f32.mrf.mxu0
  %2651 = vmatprep.mubr.f32.mxu0 %v2560
  %2652 = vmatmul.mubr.f32.gmra.mxu0 %v2509
  %v2653 = vpop.f32.mrf.mxu0
  %v2654 = vadd.f32 0.0, %v2653
  %v2655 = vpop.f32.mrf.mxu0
  %2656 = vmatprep.mubr.f32.mxu0 %v2563
  %2657 = vmatmul.mubr.f32.gmra.mxu0 %v2511
  %v2658 = vpop.f32.mrf.mxu0
  %v2659 = vadd.f32 0.0, %v2658
  %v2660 = vpop.f32.mrf.mxu0
  %2661 = vmatprep.mubr.f32.mxu0 %v2566
  %2662 = vmatmul.mubr.f32.gmra.mxu0 %v2521
  %v2663 = vpop.f32.mrf.mxu0
  %v2664 = vadd.f32 0.0, %v2663
  %v2665 = vpop.f32.mrf.mxu0
  %2666 = vmatprep.mubr.f32.mxu0 %v2569
  %2667 = vmatmul.mubr.f32.gmra.mxu0 %v2523
  %v2668 = vpop.f32.mrf.mxu0
  %v2669 = vadd.f32 0.0, %v2668
  %v2670 = vpop.f32.mrf.mxu0
  %2671 = vmatprep.mubr.f32.mxu0 %v2572
  %2672 = vmatmul.mubr.f32.gmra.mxu0 %v2525
  %v2673 = vpop.f32.mrf.mxu0
  %v2674 = vadd.f32 0.0, %v2673
  %v2675 = vpop.f32.mrf.mxu0
  %2676 = vmatprep.mubr.f32.mxu0 %v2575
  %2677 = vmatmul.mubr.f32.gmra.mxu0 %v2527
  %v2678 = vpop.f32.mrf.mxu0
  %v2679 = vadd.f32 0.0, %v2678
  %v2680 = vpop.f32.mrf.mxu0
  %2681 = vdwg.mxu0
  %v2682 = vld [vmem:[%s8 + $0x4] ss:$0 sm:$0xff]
  %v2683 = vmul.f32 %v2644, %v2682
  %v2684 = vmul.f32 %v2649, %v2682
  %v2685 = vmul.f32 %v2654, %v2682
  %v2686 = vmul.f32 %v2659, %v2682
  %v2687 = vmul.f32 %v2664, %v2682
  %v2688 = vmul.f32 %v2669, %v2682
  %v2689 = vmul.f32 %v2674, %v2682
  %v2690 = vmul.f32 %v2679, %v2682
  %v2691 = vld [vmem:[%s8 + $0x5] ss:$0 sm:$0xff]
  %v2692 = vadd.f32 %v2683, %v2691
  %v2693 = vadd.f32 %v2684, %v2691
  %v2694 = vadd.f32 %v2685, %v2691
  %v2695 = vadd.f32 %v2686, %v2691
  %v2696 = vadd.f32 %v2687, %v2691
  %v2697 = vadd.f32 %v2688, %v2691
  %v2698 = vadd.f32 %v2689, %v2691
  %v2699 = vadd.f32 %v2690, %v2691
  %v2700 = vld [vmem:[%s4 + $0xc0] sm:$0xff]
  %v2701 = vld [vmem:[%s4 + $0xc8] sm:$0xff]
  %v2702 = vld [vmem:[%s4 + $0xd0] sm:$0xff]
  %v2703 = vld [vmem:[%s4 + $0xd8] sm:$0xff]
  %v2704 = vld [vmem:[%s4 + $0xe0] sm:$0xff]
  %v2705 = vld [vmem:[%s4 + $0xe8] sm:$0xff]
  %v2706 = vld [vmem:[%s4 + $0xf0] sm:$0xff]
  %v2707 = vld [vmem:[%s4 + $0xf8] sm:$0xff]
  %2708 = vmatprep.subr.mxu0 0.0
  %2709 = vmatpush1.msra.mxu0 %v290
  %2710 = vmatprep.subr.mxu0 0.0
  %2711 = vmatpush1.msra.mxu0 %v285
  %2712 = vmatprep.subr.mxu0 0.0
  %2713 = vmatpush1.msra.mxu0 %v280
  %2714 = vmatprep.subr.mxu0 0.0
  %2715 = vmatpush1.msra.mxu0 %v275
  %2716 = vmatprep.subr.mxu0 0.0
  %2717 = vmatpush1.msra.mxu0 %v270
  %2718 = vmatprep.subr.mxu0 0.0
  %2719 = vmatpush1.msra.mxu0 %v265
  %2720 = vmatprep.subr.mxu0 0.0
  %2721 = vmatpush1.msra.mxu0 %v260
  %2722 = vmatprep.subr.mxu0 0.0
  %2723 = vmatpush1.msra.mxu0 %v255
  %2724 = vmatprep.subr.mxu0 0.0
  %2725 = vmatpush1.msra.mxu0 %v250
  %2726 = vmatprep.subr.mxu0 0.0
  %2727 = vmatpush1.msra.mxu0 %v245
  %2728 = vmatprep.subr.mxu0 0.0
  %2729 = vmatpush1.msra.mxu0 %v240
  %2730 = vmatprep.subr.mxu0 0.0
  %2731 = vmatpush1.msra.mxu0 %v235
  %2732 = vmatprep.subr.mxu0 0.0
  %2733 = vmatpush1.msra.mxu0 %v230
  %2734 = vmatprep.subr.mxu0 0.0
  %2735 = vmatpush1.msra.mxu0 %v225
  %2736 = vmatprep.subr.mxu0 0.0
  %2737 = vmatpush1.msra.mxu0 %v220
  %2738 = vmatprep.subr.mxu0 0.0
  %2739 = vmatpush1.msra.mxu0 %v215
  %2740 = vmatprep.subr.mxu0 0.0
  %2741 = vmatpush2.msra.mxu0 0.0
  %2742 = vmatprep.subr.mxu0 0.0
  %2743 = vmatpush2.msra.mxu0 0.0
  %2744 = vmatprep.subr.mxu0 0.0
  %2745 = vmatpush2.msra.mxu0 0.0
  %2746 = vmatprep.subr.mxu0 0.0
  %2747 = vmatpush2.msra.mxu0 0.0
  %2748 = vmatprep.subr.mxu0 0.0
  %2749 = vmatpush2.msra.mxu0 0.0
  %2750 = vmatprep.subr.mxu0 0.0
  %2751 = vmatpush2.msra.mxu0 0.0
  %2752 = vmatprep.subr.mxu0 0.0
  %2753 = vmatpush2.msra.mxu0 0.0
  %2754 = vmatprep.subr.mxu0 0.0
  %2755 = vmatpush2.msra.mxu0 0.0
  %2756 = vmatprep.subr.mxu0 0.0
  %2757 = vmatpush2.msra.mxu0 0.0
  %2758 = vmatprep.subr.mxu0 0.0
  %2759 = vmatpush2.msra.mxu0 0.0
  %2760 = vmatprep.subr.mxu0 0.0
  %2761 = vmatpush2.msra.mxu0 0.0
  %2762 = vmatprep.subr.mxu0 0.0
  %2763 = vmatpush2.msra.mxu0 0.0
  %2764 = vmatprep.subr.mxu0 0.0
  %2765 = vmatpush2.msra.mxu0 0.0
  %2766 = vmatprep.subr.mxu0 0.0
  %2767 = vmatpush2.msra.mxu0 0.0
  %2768 = vmatprep.subr.mxu0 0.0
  %2769 = vmatpush2.msra.mxu0 0.0
  %2770 = vmatprep.subr.mxu0 0.0
  %2771 = vmatpush2.msra.mxu0 0.0
  %2772 = vmatprep.mubr.f32.mxu0 0.0
  %2773 = vmatmul.mubr.f32.gmra.mxu0 %v2700
  %v2774 = vpop.f32.mrf.mxu0
  %v2775 = vadd.f32 0.0, %v2774
  %v2776 = vpop.f32.mrf.mxu0
  %2777 = vmatprep.mubr.f32.mxu0 0.0
  %2778 = vmatmul.mubr.f32.gmra.mxu0 %v2701
  %v2779 = vpop.f32.mrf.mxu0
  %v2780 = vadd.f32 0.0, %v2779
  %v2781 = vpop.f32.mrf.mxu0
  %2782 = vmatprep.mubr.f32.mxu0 0.0
  %2783 = vmatmul.mubr.f32.gmra.mxu0 %v2702
  %v2784 = vpop.f32.mrf.mxu0
  %v2785 = vadd.f32 0.0, %v2784
  %v2786 = vpop.f32.mrf.mxu0
  %2787 = vmatprep.mubr.f32.mxu0 0.0
  %2788 = vmatmul.mubr.f32.gmra.mxu0 %v2703
  %v2789 = vpop.f32.mrf.mxu0
  %v2790 = vadd.f32 0.0, %v2789
  %v2791 = vpop.f32.mrf.mxu0
  %2792 = vmatprep.mubr.f32.mxu0 0.0
  %2793 = vmatmul.mubr.f32.gmra.mxu0 %v2704
  %v2794 = vpop.f32.mrf.mxu0
  %v2795 = vadd.f32 0.0, %v2794
  %v2796 = vpop.f32.mrf.mxu0
  %2797 = vmatprep.mubr.f32.mxu0 0.0
  %2798 = vmatmul.mubr.f32.gmra.mxu0 %v2705
  %v2799 = vpop.f32.mrf.mxu0
  %v2800 = vadd.f32 0.0, %v2799
  %v2801 = vpop.f32.mrf.mxu0
  %2802 = vmatprep.mubr.f32.mxu0 0.0
  %2803 = vmatmul.mubr.f32.gmra.mxu0 %v2706
  %v2804 = vpop.f32.mrf.mxu0
  %v2805 = vadd.f32 0.0, %v2804
  %v2806 = vpop.f32.mrf.mxu0
  %2807 = vmatprep.mubr.f32.mxu0 0.0
  %2808 = vmatmul.mubr.f32.gmra.mxu0 %v2707
  %v2809 = vpop.f32.mrf.mxu0
  %v2810 = vadd.f32 0.0, %v2809
  %v2811 = vpop.f32.mrf.mxu0
  %2812 = vdwg.mxu0
  %v2813 = vld [vmem:[%s10] sm:$0xff]
  %v2814 = vld [vmem:[%s10 + $0x8] sm:$0xff]
  %v2815 = vld [vmem:[%s10 + $0x10] sm:$0xff]
  %v2816 = vld [vmem:[%s10 + $0x18] sm:$0xff]
  %v2817 = vld [vmem:[%s10 + $0x20] sm:$0xff]
  %v2818 = vld [vmem:[%s10 + $0x28] sm:$0xff]
  %v2819 = vld [vmem:[%s10 + $0x30] sm:$0xff]
  %v2820 = vld [vmem:[%s10 + $0x38] sm:$0xff]
  %v2821 = vld [vmem:[%s10 + $0x40] sm:$0xff]
  %v2822 = vld [vmem:[%s10 + $0x48] sm:$0xff]
  %v2823 = vld [vmem:[%s10 + $0x50] sm:$0xff]
  %v2824 = vld [vmem:[%s10 + $0x58] sm:$0xff]
  %v2825 = vld [vmem:[%s10 + $0x60] sm:$0xff]
  %v2826 = vld [vmem:[%s10 + $0x68] sm:$0xff]
  %v2827 = vld [vmem:[%s10 + $0x70] sm:$0xff]
  %v2828 = vld [vmem:[%s10 + $0x78] sm:$0xff]
  %v2829 = vld [vmem:[%s8 + $0x6] ss:$0 sm:$0xff]
  %2830 = vmatprep.subr.mxu0 0.0
  %2831 = vmatpush1.msra.mxu0 %v2828
  %2832 = vmatprep.subr.mxu0 0.0
  %2833 = vmatpush1.msra.mxu0 %v2827
  %2834 = vmatprep.subr.mxu0 0.0
  %2835 = vmatpush1.msra.mxu0 %v2826
  %2836 = vmatprep.subr.mxu0 0.0
  %2837 = vmatpush1.msra.mxu0 %v2825
  %2838 = vmatprep.subr.mxu0 0.0
  %2839 = vmatpush1.msra.mxu0 %v2824
  %2840 = vmatprep.subr.mxu0 0.0
  %2841 = vmatpush1.msra.mxu0 %v2823
  %2842 = vmatprep.subr.mxu0 0.0
  %2843 = vmatpush1.msra.mxu0 %v2822
  %2844 = vmatprep.subr.mxu0 0.0
  %2845 = vmatpush1.msra.mxu0 %v2821
  %2846 = vmatprep.subr.mxu0 0.0
  %2847 = vmatpush1.msra.mxu0 %v2820
  %2848 = vmatprep.subr.mxu0 0.0
  %2849 = vmatpush1.msra.mxu0 %v2819
  %2850 = vmatprep.subr.mxu0 0.0
  %2851 = vmatpush1.msra.mxu0 %v2818
  %2852 = vmatprep.subr.mxu0 0.0
  %2853 = vmatpush1.msra.mxu0 %v2817
  %2854 = vmatprep.subr.mxu0 0.0
  %2855 = vmatpush1.msra.mxu0 %v2816
  %2856 = vmatprep.subr.mxu0 0.0
  %2857 = vmatpush1.msra.mxu0 %v2815
  %2858 = vmatprep.subr.mxu0 0.0
  %2859 = vmatpush1.msra.mxu0 %v2814
  %2860 = vmatprep.subr.mxu0 0.0
  %2861 = vmatpush1.msra.mxu0 %v2813
  %2862 = vmatprep.subr.mxu0 0.0
  %2863 = vmatpush2.msra.mxu0 0.0
  %2864 = vmatprep.subr.mxu0 0.0
  %2865 = vmatpush2.msra.mxu0 0.0
  %2866 = vmatprep.subr.mxu0 0.0
  %2867 = vmatpush2.msra.mxu0 0.0
  %2868 = vmatprep.subr.mxu0 0.0
  %2869 = vmatpush2.msra.mxu0 0.0
  %2870 = vmatprep.subr.mxu0 0.0
  %2871 = vmatpush2.msra.mxu0 0.0
  %2872 = vmatprep.subr.mxu0 0.0
  %2873 = vmatpush2.msra.mxu0 0.0
  %2874 = vmatprep.subr.mxu0 0.0
  %2875 = vmatpush2.msra.mxu0 0.0
  %2876 = vmatprep.subr.mxu0 0.0
  %2877 = vmatpush2.msra.mxu0 0.0
  %2878 = vmatprep.subr.mxu0 0.0
  %2879 = vmatpush2.msra.mxu0 0.0
  %2880 = vmatprep.subr.mxu0 0.0
  %2881 = vmatpush2.msra.mxu0 0.0
  %2882 = vmatprep.subr.mxu0 0.0
  %2883 = vmatpush2.msra.mxu0 0.0
  %2884 = vmatprep.subr.mxu0 0.0
  %2885 = vmatpush2.msra.mxu0 0.0
  %2886 = vmatprep.subr.mxu0 0.0
  %2887 = vmatpush2.msra.mxu0 0.0
  %2888 = vmatprep.subr.mxu0 0.0
  %2889 = vmatpush2.msra.mxu0 0.0
  %2890 = vmatprep.subr.mxu0 0.0
  %2891 = vmatpush2.msra.mxu0 0.0
  %2892 = vmatprep.subr.mxu0 0.0
  %2893 = vmatpush2.msra.mxu0 0.0
  %2894 = vmatprep.mubr.f32.mxu0 0.0
  %2895 = vmatmul.mubr.f32.gmra.mxu0 %v2775
  %v2896 = vpop.f32.mrf.mxu0
  %v2897 = vadd.f32 %v2829, %v2896
  %v2898 = vpop.f32.mrf.mxu0
  %2899 = vmatprep.mubr.f32.mxu0 0.0
  %2900 = vmatmul.mubr.f32.gmra.mxu0 %v2780
  %v2901 = vpop.f32.mrf.mxu0
  %v2902 = vadd.f32 %v2829, %v2901
  %v2903 = vpop.f32.mrf.mxu0
  %2904 = vmatprep.mubr.f32.mxu0 0.0
  %2905 = vmatmul.mubr.f32.gmra.mxu0 %v2785
  %v2906 = vpop.f32.mrf.mxu0
  %v2907 = vadd.f32 %v2829, %v2906
  %v2908 = vpop.f32.mrf.mxu0
  %2909 = vmatprep.mubr.f32.mxu0 0.0
  %2910 = vmatmul.mubr.f32.gmra.mxu0 %v2790
  %v2911 = vpop.f32.mrf.mxu0
  %v2912 = vadd.f32 %v2829, %v2911
  %v2913 = vpop.f32.mrf.mxu0
  %2914 = vmatprep.mubr.f32.mxu0 0.0
  %2915 = vmatmul.mubr.f32.gmra.mxu0 %v2795
  %v2916 = vpop.f32.mrf.mxu0
  %v2917 = vadd.f32 %v2829, %v2916
  %v2918 = vpop.f32.mrf.mxu0
  %2919 = vmatprep.mubr.f32.mxu0 0.0
  %2920 = vmatmul.mubr.f32.gmra.mxu0 %v2800
  %v2921 = vpop.f32.mrf.mxu0
  %v2922 = vadd.f32 %v2829, %v2921
  %v2923 = vpop.f32.mrf.mxu0
  %2924 = vmatprep.mubr.f32.mxu0 0.0
  %2925 = vmatmul.mubr.f32.gmra.mxu0 %v2805
  %v2926 = vpop.f32.mrf.mxu0
  %v2927 = vadd.f32 %v2829, %v2926
  %v2928 = vpop.f32.mrf.mxu0
  %2929 = vmatprep.mubr.f32.mxu0 0.0
  %2930 = vmatmul.mubr.f32.gmra.mxu0 %v2810
  %v2931 = vpop.f32.mrf.mxu0
  %v2932 = vadd.f32 %v2829, %v2931
  %v2933 = vpop.f32.mrf.mxu0
  %2934 = vdwg.mxu0
  %v2935 = vadd.f32 %v2692, %v2897
  %v2936 = vadd.f32 %v2693, %v2902
  %v2937 = vadd.f32 %v2694, %v2907
  %v2938 = vadd.f32 %v2695, %v2912
  %v2939 = vadd.f32 %v2696, %v2917
  %v2940 = vadd.f32 %v2697, %v2922
  %v2941 = vadd.f32 %v2698, %v2927
  %v2942 = vadd.f32 %v2699, %v2932
  %v2943 = vld [vmem:[%s11] sm:$0xff]
  %v2944 = vld [vmem:[%s11 + $0x8] sm:$0xff]
  %v2945 = vld [vmem:[%s11 + $0x10] sm:$0xff]
  %v2946 = vld [vmem:[%s11 + $0x18] sm:$0xff]
  %v2947 = vld [vmem:[%s11 + $0x20] sm:$0xff]
  %v2948 = vld [vmem:[%s11 + $0x28] sm:$0xff]
  %v2949 = vld [vmem:[%s11 + $0x30] sm:$0xff]
  %v2950 = vld [vmem:[%s11 + $0x38] sm:$0xff]
  %v2951 = vadd.f32 %v2935, %v2943
  %v2952 = vadd.f32 %v2936, %v2944
  %v2953 = vadd.f32 %v2937, %v2945
  %v2954 = vadd.f32 %v2938, %v2946
  %v2955 = vadd.f32 %v2939, %v2947
  %v2956 = vadd.f32 %v2940, %v2948
  %v2957 = vadd.f32 %v2941, %v2949
  %v2958 = vadd.f32 %v2942, %v2950
  %v2959 = vld [vmem:[%s12] sm:$0xff]
  %v2960 = vld [vmem:[%s12 + $0x8] sm:$0xff]
  %v2961 = vld [vmem:[%s12 + $0x10] sm:$0xff]
  %v2962 = vld [vmem:[%s12 + $0x18] sm:$0xff]
  %v2963 = vld [vmem:[%s12 + $0x20] sm:$0xff]
  %v2964 = vld [vmem:[%s12 + $0x28] sm:$0xff]
  %v2965 = vld [vmem:[%s12 + $0x30] sm:$0xff]
  %v2966 = vld [vmem:[%s12 + $0x38] sm:$0xff]
  %v2967 = vld [vmem:[%s12 + $0x40] sm:$0xff]
  %v2968 = vld [vmem:[%s12 + $0x48] sm:$0xff]
  %v2969 = vld [vmem:[%s12 + $0x50] sm:$0xff]
  %v2970 = vld [vmem:[%s12 + $0x58] sm:$0xff]
  %v2971 = vld [vmem:[%s12 + $0x60] sm:$0xff]
  %v2972 = vld [vmem:[%s12 + $0x68] sm:$0xff]
  %v2973 = vld [vmem:[%s12 + $0x70] sm:$0xff]
  %v2974 = vld [vmem:[%s12 + $0x78] sm:$0xff]
  %v2975 = vld [vmem:[%s12 + $0x80] sm:$0xff]
  %v2976 = vld [vmem:[%s12 + $0x88] sm:$0xff]
  %v2977 = vld [vmem:[%s12 + $0x90] sm:$0xff]
  %v2978 = vld [vmem:[%s12 + $0x98] sm:$0xff]
  %v2979 = vld [vmem:[%s12 + $0xa0] sm:$0xff]
  %v2980 = vld [vmem:[%s12 + $0xa8] sm:$0xff]
  %v2981 = vld [vmem:[%s12 + $0xb0] sm:$0xff]
  %v2982 = vld [vmem:[%s12 + $0xb8] sm:$0xff]
  %v2983 = vld [vmem:[%s12 + $0xc0] sm:$0xff]
  %v2984 = vld [vmem:[%s12 + $0xc8] sm:$0xff]
  %v2985 = vld [vmem:[%s12 + $0xd0] sm:$0xff]
  %v2986 = vld [vmem:[%s12 + $0xd8] sm:$0xff]
  %v2987 = vld [vmem:[%s12 + $0xe0] sm:$0xff]
  %v2988 = vld [vmem:[%s12 + $0xe8] sm:$0xff]
  %v2989 = vld [vmem:[%s12 + $0xf0] sm:$0xff]
  %v2990 = vld [vmem:[%s12 + $0xf8] sm:$0xff]
  %v2991 = vld [vmem:[%s12 + $0x100] sm:$0xff]
  %v2992 = vld [vmem:[%s12 + $0x108] sm:$0xff]
  %v2993 = vld [vmem:[%s12 + $0x110] sm:$0xff]
  %v2994 = vld [vmem:[%s12 + $0x118] sm:$0xff]
  %v2995 = vld [vmem:[%s12 + $0x120] sm:$0xff]
  %v2996 = vld [vmem:[%s12 + $0x128] sm:$0xff]
  %v2997 = vld [vmem:[%s12 + $0x130] sm:$0xff]
  %v2998 = vld [vmem:[%s12 + $0x138] sm:$0xff]
  %v2999 = vld [vmem:[%s12 + $0x140] sm:$0xff]
  %v3000 = vld [vmem:[%s12 + $0x148] sm:$0xff]
  %v3001 = vld [vmem:[%s12 + $0x150] sm:$0xff]
  %v3002 = vld [vmem:[%s12 + $0x158] sm:$0xff]
  %v3003 = vld [vmem:[%s12 + $0x160] sm:$0xff]
  %v3004 = vld [vmem:[%s12 + $0x168] sm:$0xff]
  %v3005 = vld [vmem:[%s12 + $0x170] sm:$0xff]
  %v3006 = vld [vmem:[%s12 + $0x178] sm:$0xff]
  %3007 = vmatprep.subr.mxu0 %v3005
  %3008 = vmatpush1.msra.mxu0 %v3004
  %3009 = vmatprep.subr.mxu0 %v3002
  %3010 = vmatpush1.msra.mxu0 %v3001
  %3011 = vmatprep.subr.mxu0 %v2999
  %3012 = vmatpush1.msra.mxu0 %v2998
  %3013 = vmatprep.subr.mxu0 %v2996
  %3014 = vmatpush1.msra.mxu0 %v2995
  %3015 = vmatprep.subr.mxu0 %v2993
  %3016 = vmatpush1.msra.mxu0 %v2992
  %3017 = vmatprep.subr.mxu0 %v2990
  %3018 = vmatpush1.msra.mxu0 %v2989
  %3019 = vmatprep.subr.mxu0 %v2987
  %3020 = vmatpush1.msra.mxu0 %v2986
  %3021 = vmatprep.subr.mxu0 %v2984
  %3022 = vmatpush1.msra.mxu0 %v2983
  %3023 = vmatprep.subr.mxu0 %v2981
  %3024 = vmatpush1.msra.mxu0 %v2980
  %3025 = vmatprep.subr.mxu0 %v2978
  %3026 = vmatpush1.msra.mxu0 %v2977
  %3027 = vmatprep.subr.mxu0 %v2975
  %3028 = vmatpush1.msra.mxu0 %v2974
  %3029 = vmatprep.subr.mxu0 %v2972
  %3030 = vmatpush1.msra.mxu0 %v2971
  %3031 = vmatprep.subr.mxu0 %v2969
  %3032 = vmatpush1.msra.mxu0 %v2968
  %3033 = vmatprep.subr.mxu0 %v2966
  %3034 = vmatpush1.msra.mxu0 %v2965
  %3035 = vmatprep.subr.mxu0 %v2963
  %3036 = vmatpush1.msra.mxu0 %v2962
  %3037 = vmatprep.subr.mxu0 %v2960
  %3038 = vmatpush1.msra.mxu0 %v2959
  %3039 = vmatprep.subr.mxu0 0.0
  %3040 = vmatpush2.msra.mxu0 0.0
  %3041 = vmatprep.subr.mxu0 0.0
  %3042 = vmatpush2.msra.mxu0 0.0
  %3043 = vmatprep.subr.mxu0 0.0
  %3044 = vmatpush2.msra.mxu0 0.0
  %3045 = vmatprep.subr.mxu0 0.0
  %3046 = vmatpush2.msra.mxu0 0.0
  %3047 = vmatprep.subr.mxu0 0.0
  %3048 = vmatpush2.msra.mxu0 0.0
  %3049 = vmatprep.subr.mxu0 0.0
  %3050 = vmatpush2.msra.mxu0 0.0
  %3051 = vmatprep.subr.mxu0 0.0
  %3052 = vmatpush2.msra.mxu0 0.0
  %3053 = vmatprep.subr.mxu0 0.0
  %3054 = vmatpush2.msra.mxu0 0.0
  %3055 = vmatprep.subr.mxu0 0.0
  %3056 = vmatpush2.msra.mxu0 0.0
  %3057 = vmatprep.subr.mxu0 0.0
  %3058 = vmatpush2.msra.mxu0 0.0
  %3059 = vmatprep.subr.mxu0 0.0
  %3060 = vmatpush2.msra.mxu0 0.0
  %3061 = vmatprep.subr.mxu0 0.0
  %3062 = vmatpush2.msra.mxu0 0.0
  %3063 = vmatprep.subr.mxu0 0.0
  %3064 = vmatpush2.msra.mxu0 0.0
  %3065 = vmatprep.subr.mxu0 0.0
  %3066 = vmatpush2.msra.mxu0 0.0
  %3067 = vmatprep.subr.mxu0 0.0
  %3068 = vmatpush2.msra.mxu0 0.0
  %3069 = vmatprep.subr.mxu0 0.0
  %3070 = vmatpush2.msra.mxu0 0.0
  %3071 = vmatprep.mubr.f32.mxu0 0.0
  %3072 = vmatmul.mubr.f32.gmra.mxu0 %v2951
  %v3073 = vpop.f32.mrf.mxu0
  %v3074 = vadd.f32 0.0, %v3073
  %v3075 = vpop.f32.mrf.mxu0
  %v3076 = vadd.f32 0.0, %v3075
  %3077 = vmatprep.mubr.f32.mxu0 0.0
  %3078 = vmatmul.mubr.f32.gmra.mxu0 %v2952
  %v3079 = vpop.f32.mrf.mxu0
  %v3080 = vadd.f32 0.0, %v3079
  %v3081 = vpop.f32.mrf.mxu0
  %v3082 = vadd.f32 0.0, %v3081
  %3083 = vmatprep.mubr.f32.mxu0 0.0
  %3084 = vmatmul.mubr.f32.gmra.mxu0 %v2953
  %v3085 = vpop.f32.mrf.mxu0
  %v3086 = vadd.f32 0.0, %v3085
  %v3087 = vpop.f32.mrf.mxu0
  %v3088 = vadd.f32 0.0, %v3087
  %3089 = vmatprep.mubr.f32.mxu0 0.0
  %3090 = vmatmul.mubr.f32.gmra.mxu0 %v2954
  %v3091 = vpop.f32.mrf.mxu0
  %v3092 = vadd.f32 0.0, %v3091
  %v3093 = vpop.f32.mrf.mxu0
  %v3094 = vadd.f32 0.0, %v3093
  %3095 = vmatprep.mubr.f32.mxu0 0.0
  %3096 = vmatmul.mubr.f32.gmra.mxu0 %v2955
  %v3097 = vpop.f32.mrf.mxu0
  %v3098 = vadd.f32 0.0, %v3097
  %v3099 = vpop.f32.mrf.mxu0
  %v3100 = vadd.f32 0.0, %v3099
  %3101 = vmatprep.mubr.f32.mxu0 0.0
  %3102 = vmatmul.mubr.f32.gmra.mxu0 %v2956
  %v3103 = vpop.f32.mrf.mxu0
  %v3104 = vadd.f32 0.0, %v3103
  %v3105 = vpop.f32.mrf.mxu0
  %v3106 = vadd.f32 0.0, %v3105
  %3107 = vmatprep.mubr.f32.mxu0 0.0
  %3108 = vmatmul.mubr.f32.gmra.mxu0 %v2957
  %v3109 = vpop.f32.mrf.mxu0
  %v3110 = vadd.f32 0.0, %v3109
  %v3111 = vpop.f32.mrf.mxu0
  %v3112 = vadd.f32 0.0, %v3111
  %3113 = vmatprep.mubr.f32.mxu0 0.0
  %3114 = vmatmul.mubr.f32.gmra.mxu0 %v2958
  %v3115 = vpop.f32.mrf.mxu0
  %v3116 = vadd.f32 0.0, %v3115
  %v3117 = vpop.f32.mrf.mxu0
  %v3118 = vadd.f32 0.0, %v3117
  %3119 = vdwg.mxu0
  %3120 = vmatprep.subr.mxu0 0.0
  %3121 = vmatpush1.msra.mxu0 %v3006
  %3122 = vmatprep.subr.mxu0 0.0
  %3123 = vmatpush1.msra.mxu0 %v3003
  %3124 = vmatprep.subr.mxu0 0.0
  %3125 = vmatpush1.msra.mxu0 %v3000
  %3126 = vmatprep.subr.mxu0 0.0
  %3127 = vmatpush1.msra.mxu0 %v2997
  %3128 = vmatprep.subr.mxu0 0.0
  %3129 = vmatpush1.msra.mxu0 %v2994
  %3130 = vmatprep.subr.mxu0 0.0
  %3131 = vmatpush1.msra.mxu0 %v2991
  %3132 = vmatprep.subr.mxu0 0.0
  %3133 = vmatpush1.msra.mxu0 %v2988
  %3134 = vmatprep.subr.mxu0 0.0
  %3135 = vmatpush1.msra.mxu0 %v2985
  %3136 = vmatprep.subr.mxu0 0.0
  %3137 = vmatpush1.msra.mxu0 %v2982
  %3138 = vmatprep.subr.mxu0 0.0
  %3139 = vmatpush1.msra.mxu0 %v2979
  %3140 = vmatprep.subr.mxu0 0.0
  %3141 = vmatpush1.msra.mxu0 %v2976
  %3142 = vmatprep.subr.mxu0 0.0
  %3143 = vmatpush1.msra.mxu0 %v2973
  %3144 = vmatprep.subr.mxu0 0.0
  %3145 = vmatpush1.msra.mxu0 %v2970
  %3146 = vmatprep.subr.mxu0 0.0
  %3147 = vmatpush1.msra.mxu0 %v2967
  %3148 = vmatprep.subr.mxu0 0.0
  %3149 = vmatpush1.msra.mxu0 %v2964
  %3150 = vmatprep.subr.mxu0 0.0
  %3151 = vmatpush1.msra.mxu0 %v2961
  %3152 = vmatprep.subr.mxu0 0.0
  %3153 = vmatpush2.msra.mxu0 0.0
  %3154 = vmatprep.subr.mxu0 0.0
  %3155 = vmatpush2.msra.mxu0 0.0
  %3156 = vmatprep.subr.mxu0 0.0
  %3157 = vmatpush2.msra.mxu0 0.0
  %3158 = vmatprep.subr.mxu0 0.0
  %3159 = vmatpush2.msra.mxu0 0.0
  %3160 = vmatprep.subr.mxu0 0.0
  %3161 = vmatpush2.msra.mxu0 0.0
  %3162 = vmatprep.subr.mxu0 0.0
  %3163 = vmatpush2.msra.mxu0 0.0
  %3164 = vmatprep.subr.mxu0 0.0
  %3165 = vmatpush2.msra.mxu0 0.0
  %3166 = vmatprep.subr.mxu0 0.0
  %3167 = vmatpush2.msra.mxu0 0.0
  %3168 = vmatprep.subr.mxu0 0.0
  %3169 = vmatpush2.msra.mxu0 0.0
  %3170 = vmatprep.subr.mxu0 0.0
  %3171 = vmatpush2.msra.mxu0 0.0
  %3172 = vmatprep.subr.mxu0 0.0
  %3173 = vmatpush2.msra.mxu0 0.0
  %3174 = vmatprep.subr.mxu0 0.0
  %3175 = vmatpush2.msra.mxu0 0.0
  %3176 = vmatprep.subr.mxu0 0.0
  %3177 = vmatpush2.msra.mxu0 0.0
  %3178 = vmatprep.subr.mxu0 0.0
  %3179 = vmatpush2.msra.mxu0 0.0
  %3180 = vmatprep.subr.mxu0 0.0
  %3181 = vmatpush2.msra.mxu0 0.0
  %3182 = vmatprep.subr.mxu0 0.0
  %3183 = vmatpush2.msra.mxu0 0.0
  %3184 = vmatprep.mubr.f32.mxu0 0.0
  %3185 = vmatmul.mubr.f32.gmra.mxu0 %v2951
  %v3186 = vpop.f32.mrf.mxu0
  %v3187 = vadd.f32 0.0, %v3186
  %v3188 = vpop.f32.mrf.mxu0
  %3189 = vmatprep.mubr.f32.mxu0 0.0
  %3190 = vmatmul.mubr.f32.gmra.mxu0 %v2952
  %v3191 = vpop.f32.mrf.mxu0
  %v3192 = vadd.f32 0.0, %v3191
  %v3193 = vpop.f32.mrf.mxu0
  %3194 = vmatprep.mubr.f32.mxu0 0.0
  %3195 = vmatmul.mubr.f32.gmra.mxu0 %v2953
  %v3196 = vpop.f32.mrf.mxu0
  %v3197 = vadd.f32 0.0, %v3196
  %v3198 = vpop.f32.mrf.mxu0
  %3199 = vmatprep.mubr.f32.mxu0 0.0
  %3200 = vmatmul.mubr.f32.gmra.mxu0 %v2954
  %v3201 = vpop.f32.mrf.mxu0
  %v3202 = vadd.f32 0.0, %v3201
  %v3203 = vpop.f32.mrf.mxu0
  %3204 = vmatprep.mubr.f32.mxu0 0.0
  %3205 = vmatmul.mubr.f32.gmra.mxu0 %v2955
  %v3206 = vpop.f32.mrf.mxu0
  %v3207 = vadd.f32 0.0, %v3206
  %v3208 = vpop.f32.mrf.mxu0
  %3209 = vmatprep.mubr.f32.mxu0 0.0
  %3210 = vmatmul.mubr.f32.gmra.mxu0 %v2956
  %v3211 = vpop.f32.mrf.mxu0
  %v3212 = vadd.f32 0.0, %v3211
  %v3213 = vpop.f32.mrf.mxu0
  %3214 = vmatprep.mubr.f32.mxu0 0.0
  %3215 = vmatmul.mubr.f32.gmra.mxu0 %v2957
  %v3216 = vpop.f32.mrf.mxu0
  %v3217 = vadd.f32 0.0, %v3216
  %v3218 = vpop.f32.mrf.mxu0
  %3219 = vmatprep.mubr.f32.mxu0 0.0
  %3220 = vmatmul.mubr.f32.gmra.mxu0 %v2958
  %v3221 = vpop.f32.mrf.mxu0
  %v3222 = vadd.f32 0.0, %v3221
  %v3223 = vpop.f32.mrf.mxu0
  %3224 = vdwg.mxu0
  %v3225 = vld [vmem:[%s17] ss:$8 sm:$0x7]
  %v3227 = vlaneseq
  %v3228 = vshrl.u32 %v3227, 7
  %v3229 = vsub.s32 0, %v3228
  %v3230 = vrot.slane %v3225, %v3229
  %v3231 = vlaneseq
  %v3232 = vshrl.u32 %v3231, 7
  %v3233 = vsub.s32 1, %v3232
  %v3234 = vrot.slane %v3225, %v3233
  %v3235 = vlaneseq
  %v3236 = vshrl.u32 %v3235, 7
  %v3237 = vsub.s32 2, %v3236
  %v3238 = vrot.slane %v3225, %v3237
  %v3242 = vmul.f32 %v3074, %v3230
  %v3243 = vmul.f32 %v3076, %v3234
  %v3244 = vmul.f32 %v3187, %v3238
  %v3245 = vmul.f32 %v3080, %v3230
  %v3246 = vmul.f32 %v3082, %v3234
  %v3247 = vmul.f32 %v3192, %v3238
  %v3248 = vmul.f32 %v3086, %v3230
  %v3249 = vmul.f32 %v3088, %v3234
  %v3250 = vmul.f32 %v3197, %v3238
  %v3251 = vmul.f32 %v3092, %v3230
  %v3252 = vmul.f32 %v3094, %v3234
  %v3253 = vmul.f32 %v3202, %v3238
  %v3254 = vmul.f32 %v3098, %v3230
  %v3255 = vmul.f32 %v3100, %v3234
  %v3256 = vmul.f32 %v3207, %v3238
  %v3257 = vmul.f32 %v3104, %v3230
  %v3258 = vmul.f32 %v3106, %v3234
  %v3259 = vmul.f32 %v3212, %v3238
  %v3260 = vmul.f32 %v3110, %v3230
  %v3261 = vmul.f32 %v3112, %v3234
  %v3262 = vmul.f32 %v3217, %v3238
  %v3263 = vmul.f32 %v3116, %v3230
  %v3264 = vmul.f32 %v3118, %v3234
  %v3265 = vmul.f32 %v3222, %v3238
  %s3266 = scalar_lea.vmem %s17, 1
  %v3267 = vld [vmem:[%s3266] ss:$8 sm:$0x7]
  %v3269 = vlaneseq
  %v3270 = vshrl.u32 %v3269, 7
  %v3271 = vsub.s32 0, %v3270
  %v3272 = vrot.slane %v3267, %v3271
  %v3273 = vlaneseq
  %v3274 = vshrl.u32 %v3273, 7
  %v3275 = vsub.s32 1, %v3274
  %v3276 = vrot.slane %v3267, %v3275
  %v3277 = vlaneseq
  %v3278 = vshrl.u32 %v3277, 7
  %v3279 = vsub.s32 2, %v3278
  %v3280 = vrot.slane %v3267, %v3279
  %v3284 = vadd.f32 %v3242, %v3272
  %v3285 = vadd.f32 %v3243, %v3276
  %v3286 = vadd.f32 %v3244, %v3280
  %v3287 = vadd.f32 %v3245, %v3272
  %v3288 = vadd.f32 %v3246, %v3276
  %v3289 = vadd.f32 %v3247, %v3280
  %v3290 = vadd.f32 %v3248, %v3272
  %v3291 = vadd.f32 %v3249, %v3276
  %v3292 = vadd.f32 %v3250, %v3280
  %v3293 = vadd.f32 %v3251, %v3272
  %v3294 = vadd.f32 %v3252, %v3276
  %v3295 = vadd.f32 %v3253, %v3280
  %v3296 = vadd.f32 %v3254, %v3272
  %v3297 = vadd.f32 %v3255, %v3276
  %v3298 = vadd.f32 %v3256, %v3280
  %v3299 = vadd.f32 %v3257, %v3272
  %v3300 = vadd.f32 %v3258, %v3276
  %v3301 = vadd.f32 %v3259, %v3280
  %v3302 = vadd.f32 %v3260, %v3272
  %v3303 = vadd.f32 %v3261, %v3276
  %v3304 = vadd.f32 %v3262, %v3280
  %v3305 = vadd.f32 %v3263, %v3272
  %v3306 = vadd.f32 %v3264, %v3276
  %v3307 = vadd.f32 %v3265, %v3280
  %v3308 = vmax.f32 %v3284, 0.0
  %v3309 = vmax.f32 %v3285, 0.0
  %v3310 = vmax.f32 %v3286, 0.0
  %v3311 = vmax.f32 %v3287, 0.0
  %v3312 = vmax.f32 %v3288, 0.0
  %v3313 = vmax.f32 %v3289, 0.0
  %v3314 = vmax.f32 %v3290, 0.0
  %v3315 = vmax.f32 %v3291, 0.0
  %v3316 = vmax.f32 %v3292, 0.0
  %v3317 = vmax.f32 %v3293, 0.0
  %v3318 = vmax.f32 %v3294, 0.0
  %v3319 = vmax.f32 %v3295, 0.0
  %v3320 = vmax.f32 %v3296, 0.0
  %v3321 = vmax.f32 %v3297, 0.0
  %v3322 = vmax.f32 %v3298, 0.0
  %v3323 = vmax.f32 %v3299, 0.0
  %v3324 = vmax.f32 %v3300, 0.0
  %v3325 = vmax.f32 %v3301, 0.0
  %v3326 = vmax.f32 %v3302, 0.0
  %v3327 = vmax.f32 %v3303, 0.0
  %v3328 = vmax.f32 %v3304, 0.0
  %v3329 = vmax.f32 %v3305, 0.0
  %v3330 = vmax.f32 %v3306, 0.0
  %v3331 = vmax.f32 %v3307, 0.0
  %v3332 = vld [vmem:[%s13] sm:$0xff]
  %v3333 = vld [vmem:[%s13 + $0x8] sm:$0xff]
  %v3334 = vld [vmem:[%s13 + $0x10] sm:$0xff]
  %v3335 = vld [vmem:[%s13 + $0x18] sm:$0xff]
  %v3336 = vld [vmem:[%s13 + $0x20] sm:$0xff]
  %v3337 = vld [vmem:[%s13 + $0x28] sm:$0xff]
  %v3338 = vld [vmem:[%s13 + $0x30] sm:$0xff]
  %v3339 = vld [vmem:[%s13 + $0x38] sm:$0xff]
  %v3340 = vld [vmem:[%s13 + $0x40] sm:$0xff]
  %v3341 = vld [vmem:[%s13 + $0x48] sm:$0xff]
  %v3342 = vld [vmem:[%s13 + $0x50] sm:$0xff]
  %v3343 = vld [vmem:[%s13 + $0x58] sm:$0xff]
  %v3345 = vsel %vm2180, %v3332, 0
  %v3348 = vsel %vm2180, %v3333, 0
  %v3351 = vsel %vm2180, %v3334, 0
  %v3354 = vsel %vm2180, %v3335, 0
  %v3357 = vsel %vm2180, %v3336, 0
  %v3360 = vsel %vm2180, %v3337, 0
  %v3363 = vsel %vm2180, %v3338, 0
  %v3366 = vsel %vm2180, %v3339, 0
  %v3369 = vsel %vm2180, %v3340, 0
  %v3372 = vsel %vm2180, %v3341, 0
  %v3375 = vsel %vm2180, %v3342, 0
  %v3378 = vsel %vm2180, %v3343, 0
  %3380 = vmatprep.subr.mxu0 0.0
  %3381 = vmatpush1.msra.mxu0 0.0
  %3382 = vmatprep.subr.mxu0 0.0
  %3383 = vmatpush1.msra.mxu0 0.0
  %3384 = vmatprep.subr.mxu0 0.0
  %3385 = vmatpush1.msra.mxu0 0.0
  %3386 = vmatprep.subr.mxu0 0.0
  %3387 = vmatpush1.msra.mxu0 0.0
  %3388 = vmatprep.subr.mxu0 0.0
  %3389 = vmatpush1.msra.mxu0 0.0
  %3390 = vmatprep.subr.mxu0 0.0
  %3391 = vmatpush1.msra.mxu0 0.0
  %3392 = vmatprep.subr.mxu0 0.0
  %3393 = vmatpush1.msra.mxu0 0.0
  %3394 = vmatprep.subr.mxu0 0.0
  %3395 = vmatpush1.msra.mxu0 0.0
  %3396 = vmatprep.subr.mxu0 %v3330
  %3397 = vmatpush1.msra.mxu0 %v3329
  %3398 = vmatprep.subr.mxu0 %v3327
  %3399 = vmatpush1.msra.mxu0 %v3326
  %3400 = vmatprep.subr.mxu0 %v3324
  %3401 = vmatpush1.msra.mxu0 %v3323
  %3402 = vmatprep.subr.mxu0 %v3321
  %3403 = vmatpush1.msra.mxu0 %v3320
  %3404 = vmatprep.subr.mxu0 %v3318
  %3405 = vmatpush1.msra.mxu0 %v3317
  %3406 = vmatprep.subr.mxu0 %v3315
  %3407 = vmatpush1.msra.mxu0 %v3314
  %3408 = vmatprep.subr.mxu0 %v3312
  %3409 = vmatpush1.msra.mxu0 %v3311
  %3410 = vmatprep.subr.mxu0 %v3309
  %3411 = vmatpush1.msra.mxu0 %v3308
  %3412 = vmatprep.subr.mxu0 0.0
  %3413 = vmatpush2.msra.mxu0 0.0
  %3414 = vmatprep.subr.mxu0 0.0
  %3415 = vmatpush2.msra.mxu0 0.0
  %3416 = vmatprep.subr.mxu0 0.0
  %3417 = vmatpush2.msra.mxu0 0.0
  %3418 = vmatprep.subr.mxu0 0.0
  %3419 = vmatpush2.msra.mxu0 0.0
  %3420 = vmatprep.subr.mxu0 0.0
  %3421 = vmatpush2.msra.mxu0 0.0
  %3422 = vmatprep.subr.mxu0 0.0
  %3423 = vmatpush2.msra.mxu0 0.0
  %3424 = vmatprep.subr.mxu0 0.0
  %3425 = vmatpush2.msra.mxu0 0.0
  %3426 = vmatprep.subr.mxu0 0.0
  %3427 = vmatpush2.msra.mxu0 0.0
  %3428 = vmatprep.subr.mxu0 0.0
  %3429 = vmatpush2.msra.mxu0 0.0
  %3430 = vmatprep.subr.mxu0 0.0
  %3431 = vmatpush2.msra.mxu0 0.0
  %3432 = vmatprep.subr.mxu0 0.0
  %3433 = vmatpush2.msra.mxu0 0.0
  %3434 = vmatprep.subr.mxu0 0.0
  %3435 = vmatpush2.msra.mxu0 0.0
  %3436 = vmatprep.subr.mxu0 0.0
  %3437 = vmatpush2.msra.mxu0 0.0
  %3438 = vmatprep.subr.mxu0 0.0
  %3439 = vmatpush2.msra.mxu0 0.0
  %3440 = vmatprep.subr.mxu0 0.0
  %3441 = vmatpush2.msra.mxu0 0.0
  %3442 = vmatprep.subr.mxu0 0.0
  %3443 = vmatpush2.msra.mxu0 0.0
  %3444 = vmatprep.mubr.f32.mxu0 0.0
  %3445 = vmatmul.mubr.f32.gmra.mxu0 %v3345
  %v3446 = vpop.f32.mrf.mxu0
  %v3447 = vadd.f32 0.0, %v3446
  %v3448 = vpop.f32.mrf.mxu0
  %v3449 = vadd.f32 0.0, %v3448
  %3450 = vmatprep.mubr.f32.mxu0 0.0
  %3451 = vmatmul.mubr.f32.gmra.mxu0 %v3348
  %v3452 = vpop.f32.mrf.mxu0
  %v3453 = vadd.f32 0.0, %v3452
  %v3454 = vpop.f32.mrf.mxu0
  %v3455 = vadd.f32 0.0, %v3454
  %3456 = vmatprep.mubr.f32.mxu0 0.0
  %3457 = vmatmul.mubr.f32.gmra.mxu0 %v3351
  %v3458 = vpop.f32.mrf.mxu0
  %v3459 = vadd.f32 0.0, %v3458
  %v3460 = vpop.f32.mrf.mxu0
  %v3461 = vadd.f32 0.0, %v3460
  %3462 = vmatprep.mubr.f32.mxu0 0.0
  %3463 = vmatmul.mubr.f32.gmra.mxu0 %v3354
  %v3464 = vpop.f32.mrf.mxu0
  %v3465 = vadd.f32 0.0, %v3464
  %v3466 = vpop.f32.mrf.mxu0
  %v3467 = vadd.f32 0.0, %v3466
  %3468 = vmatprep.mubr.f32.mxu0 0.0
  %3469 = vmatmul.mubr.f32.gmra.mxu0 %v3357
  %v3470 = vpop.f32.mrf.mxu0
  %v3471 = vadd.f32 0.0, %v3470
  %v3472 = vpop.f32.mrf.mxu0
  %v3473 = vadd.f32 0.0, %v3472
  %3474 = vmatprep.mubr.f32.mxu0 0.0
  %3475 = vmatmul.mubr.f32.gmra.mxu0 %v3360
  %v3476 = vpop.f32.mrf.mxu0
  %v3477 = vadd.f32 0.0, %v3476
  %v3478 = vpop.f32.mrf.mxu0
  %v3479 = vadd.f32 0.0, %v3478
  %3480 = vmatprep.mubr.f32.mxu0 0.0
  %3481 = vmatmul.mubr.f32.gmra.mxu0 %v3363
  %v3482 = vpop.f32.mrf.mxu0
  %v3483 = vadd.f32 0.0, %v3482
  %v3484 = vpop.f32.mrf.mxu0
  %v3485 = vadd.f32 0.0, %v3484
  %3486 = vmatprep.mubr.f32.mxu0 0.0
  %3487 = vmatmul.mubr.f32.gmra.mxu0 %v3366
  %v3488 = vpop.f32.mrf.mxu0
  %v3489 = vadd.f32 0.0, %v3488
  %v3490 = vpop.f32.mrf.mxu0
  %v3491 = vadd.f32 0.0, %v3490
  %3492 = vmatprep.mubr.f32.mxu0 0.0
  %3493 = vmatmul.mubr.f32.gmra.mxu0 %v3369
  %v3494 = vpop.f32.mrf.mxu0
  %v3495 = vadd.f32 0.0, %v3494
  %v3496 = vpop.f32.mrf.mxu0
  %v3497 = vadd.f32 0.0, %v3496
  %3498 = vmatprep.mubr.f32.mxu0 0.0
  %3499 = vmatmul.mubr.f32.gmra.mxu0 %v3372
  %v3500 = vpop.f32.mrf.mxu0
  %v3501 = vadd.f32 0.0, %v3500
  %v3502 = vpop.f32.mrf.mxu0
  %v3503 = vadd.f32 0.0, %v3502
  %3504 = vmatprep.mubr.f32.mxu0 0.0
  %3505 = vmatmul.mubr.f32.gmra.mxu0 %v3375
  %v3506 = vpop.f32.mrf.mxu0
  %v3507 = vadd.f32 0.0, %v3506
  %v3508 = vpop.f32.mrf.mxu0
  %v3509 = vadd.f32 0.0, %v3508
  %3510 = vmatprep.mubr.f32.mxu0 0.0
  %3511 = vmatmul.mubr.f32.gmra.mxu0 %v3378
  %v3512 = vpop.f32.mrf.mxu0
  %v3513 = vadd.f32 0.0, %v3512
  %v3514 = vpop.f32.mrf.mxu0
  %v3515 = vadd.f32 0.0, %v3514
  %3516 = vdwg.mxu0
  %3517 = vmatprep.subr.mxu0 0.0
  %3518 = vmatpush1.msra.mxu0 0.0
  %3519 = vmatprep.subr.mxu0 0.0
  %3520 = vmatpush1.msra.mxu0 0.0
  %3521 = vmatprep.subr.mxu0 0.0
  %3522 = vmatpush1.msra.mxu0 0.0
  %3523 = vmatprep.subr.mxu0 0.0
  %3524 = vmatpush1.msra.mxu0 0.0
  %3525 = vmatprep.subr.mxu0 0.0
  %3526 = vmatpush1.msra.mxu0 0.0
  %3527 = vmatprep.subr.mxu0 0.0
  %3528 = vmatpush1.msra.mxu0 0.0
  %3529 = vmatprep.subr.mxu0 0.0
  %3530 = vmatpush1.msra.mxu0 0.0
  %3531 = vmatprep.subr.mxu0 0.0
  %3532 = vmatpush1.msra.mxu0 0.0
  %3533 = vmatprep.subr.mxu0 0.0
  %3534 = vmatpush1.msra.mxu0 %v3331
  %3535 = vmatprep.subr.mxu0 0.0
  %3536 = vmatpush1.msra.mxu0 %v3328
  %3537 = vmatprep.subr.mxu0 0.0
  %3538 = vmatpush1.msra.mxu0 %v3325
  %3539 = vmatprep.subr.mxu0 0.0
  %3540 = vmatpush1.msra.mxu0 %v3322
  %3541 = vmatprep.subr.mxu0 0.0
  %3542 = vmatpush1.msra.mxu0 %v3319
  %3543 = vmatprep.subr.mxu0 0.0
  %3544 = vmatpush1.msra.mxu0 %v3316
  %3545 = vmatprep.subr.mxu0 0.0
  %3546 = vmatpush1.msra.mxu0 %v3313
  %3547 = vmatprep.subr.mxu0 0.0
  %3548 = vmatpush1.msra.mxu0 %v3310
  %3549 = vmatprep.subr.mxu0 0.0
  %3550 = vmatpush2.msra.mxu0 0.0
  %3551 = vmatprep.subr.mxu0 0.0
  %3552 = vmatpush2.msra.mxu0 0.0
  %3553 = vmatprep.subr.mxu0 0.0
  %3554 = vmatpush2.msra.mxu0 0.0
  %3555 = vmatprep.subr.mxu0 0.0
  %3556 = vmatpush2.msra.mxu0 0.0
  %3557 = vmatprep.subr.mxu0 0.0
  %3558 = vmatpush2.msra.mxu0 0.0
  %3559 = vmatprep.subr.mxu0 0.0
  %3560 = vmatpush2.msra.mxu0 0.0
  %3561 = vmatprep.subr.mxu0 0.0
  %3562 = vmatpush2.msra.mxu0 0.0
  %3563 = vmatprep.subr.mxu0 0.0
  %3564 = vmatpush2.msra.mxu0 0.0
  %3565 = vmatprep.subr.mxu0 0.0
  %3566 = vmatpush2.msra.mxu0 0.0
  %3567 = vmatprep.subr.mxu0 0.0
  %3568 = vmatpush2.msra.mxu0 0.0
  %3569 = vmatprep.subr.mxu0 0.0
  %3570 = vmatpush2.msra.mxu0 0.0
  %3571 = vmatprep.subr.mxu0 0.0
  %3572 = vmatpush2.msra.mxu0 0.0
  %3573 = vmatprep.subr.mxu0 0.0
  %3574 = vmatpush2.msra.mxu0 0.0
  %3575 = vmatprep.subr.mxu0 0.0
  %3576 = vmatpush2.msra.mxu0 0.0
  %3577 = vmatprep.subr.mxu0 0.0
  %3578 = vmatpush2.msra.mxu0 0.0
  %3579 = vmatprep.subr.mxu0 0.0
  %3580 = vmatpush2.msra.mxu0 0.0
  %3581 = vmatprep.mubr.f32.mxu0 0.0
  %3582 = vmatmul.mubr.f32.gmra.mxu0 %v3345
  %v3583 = vpop.f32.mrf.mxu0
  %v3584 = vadd.f32 0.0, %v3583
  %v3585 = vpop.f32.mrf.mxu0
  %3586 = vmatprep.mubr.f32.mxu0 0.0
  %3587 = vmatmul.mubr.f32.gmra.mxu0 %v3348
  %v3588 = vpop.f32.mrf.mxu0
  %v3589 = vadd.f32 0.0, %v3588
  %v3590 = vpop.f32.mrf.mxu0
  %3591 = vmatprep.mubr.f32.mxu0 0.0
  %3592 = vmatmul.mubr.f32.gmra.mxu0 %v3351
  %v3593 = vpop.f32.mrf.mxu0
  %v3594 = vadd.f32 0.0, %v3593
  %v3595 = vpop.f32.mrf.mxu0
  %3596 = vmatprep.mubr.f32.mxu0 0.0
  %3597 = vmatmul.mubr.f32.gmra.mxu0 %v3354
  %v3598 = vpop.f32.mrf.mxu0
  %v3599 = vadd.f32 0.0, %v3598
  %v3600 = vpop.f32.mrf.mxu0
  %3601 = vmatprep.mubr.f32.mxu0 0.0
  %3602 = vmatmul.mubr.f32.gmra.mxu0 %v3357
  %v3603 = vpop.f32.mrf.mxu0
  %v3604 = vadd.f32 0.0, %v3603
  %v3605 = vpop.f32.mrf.mxu0
  %3606 = vmatprep.mubr.f32.mxu0 0.0
  %3607 = vmatmul.mubr.f32.gmra.mxu0 %v3360
  %v3608 = vpop.f32.mrf.mxu0
  %v3609 = vadd.f32 0.0, %v3608
  %v3610 = vpop.f32.mrf.mxu0
  %3611 = vmatprep.mubr.f32.mxu0 0.0
  %3612 = vmatmul.mubr.f32.gmra.mxu0 %v3363
  %v3613 = vpop.f32.mrf.mxu0
  %v3614 = vadd.f32 0.0, %v3613
  %v3615 = vpop.f32.mrf.mxu0
  %3616 = vmatprep.mubr.f32.mxu0 0.0
  %3617 = vmatmul.mubr.f32.gmra.mxu0 %v3366
  %v3618 = vpop.f32.mrf.mxu0
  %v3619 = vadd.f32 0.0, %v3618
  %v3620 = vpop.f32.mrf.mxu0
  %3621 = vmatprep.mubr.f32.mxu0 0.0
  %3622 = vmatmul.mubr.f32.gmra.mxu0 %v3369
  %v3623 = vpop.f32.mrf.mxu0
  %v3624 = vadd.f32 0.0, %v3623
  %v3625 = vpop.f32.mrf.mxu0
  %3626 = vmatprep.mubr.f32.mxu0 0.0
  %3627 = vmatmul.mubr.f32.gmra.mxu0 %v3372
  %v3628 = vpop.f32.mrf.mxu0
  %v3629 = vadd.f32 0.0, %v3628
  %v3630 = vpop.f32.mrf.mxu0
  %3631 = vmatprep.mubr.f32.mxu0 0.0
  %3632 = vmatmul.mubr.f32.gmra.mxu0 %v3375
  %v3633 = vpop.f32.mrf.mxu0
  %v3634 = vadd.f32 0.0, %v3633
  %v3635 = vpop.f32.mrf.mxu0
  %3636 = vmatprep.mubr.f32.mxu0 0.0
  %3637 = vmatmul.mubr.f32.gmra.mxu0 %v3378
  %v3638 = vpop.f32.mrf.mxu0
  %v3639 = vadd.f32 0.0, %v3638
  %v3640 = vpop.f32.mrf.mxu0
  %3641 = vdwg.mxu0
  %v3642 = vld [vmem:[%s14] sm:$0xff]
  %v3643 = vld [vmem:[%s14 + $0x8] sm:$0xff]
  %v3644 = vld [vmem:[%s14 + $0x10] sm:$0xff]
  %v3645 = vld [vmem:[%s14 + $0x18] sm:$0xff]
  %v3646 = vld [vmem:[%s14 + $0x20] sm:$0xff]
  %v3647 = vld [vmem:[%s14 + $0x28] sm:$0xff]
  %v3648 = vld [vmem:[%s14 + $0x30] sm:$0xff]
  %v3649 = vld [vmem:[%s14 + $0x38] sm:$0xff]
  %v3650 = vld [vmem:[%s14 + $0x40] sm:$0xff]
  %v3651 = vld [vmem:[%s14 + $0x48] sm:$0xff]
  %v3652 = vld [vmem:[%s14 + $0x50] sm:$0xff]
  %v3653 = vld [vmem:[%s14 + $0x58] sm:$0xff]
  %v3654 = vld [vmem:[%s14 + $0x60] sm:$0xff]
  %v3655 = vld [vmem:[%s14 + $0x68] sm:$0xff]
  %v3656 = vld [vmem:[%s14 + $0x70] sm:$0xff]
  %v3657 = vld [vmem:[%s14 + $0x78] sm:$0xff]
  %v3658 = vld [vmem:[%s14 + $0x80] sm:$0xff]
  %v3659 = vld [vmem:[%s14 + $0x88] sm:$0xff]
  %v3660 = vld [vmem:[%s14 + $0x90] sm:$0xff]
  %v3661 = vld [vmem:[%s14 + $0x98] sm:$0xff]
  %v3662 = vld [vmem:[%s14 + $0xa0] sm:$0xff]
  %v3663 = vld [vmem:[%s14 + $0xa8] sm:$0xff]
  %v3664 = vld [vmem:[%s14 + $0xb0] sm:$0xff]
  %v3665 = vld [vmem:[%s14 + $0xb8] sm:$0xff]
  %v3666 = vld [vmem:[%s14 + $0xc0] sm:$0xff]
  %v3667 = vld [vmem:[%s14 + $0xc8] sm:$0xff]
  %v3668 = vld [vmem:[%s14 + $0xd0] sm:$0xff]
  %v3669 = vld [vmem:[%s14 + $0xd8] sm:$0xff]
  %v3670 = vld [vmem:[%s14 + $0xe0] sm:$0xff]
  %v3671 = vld [vmem:[%s14 + $0xe8] sm:$0xff]
  %v3672 = vld [vmem:[%s14 + $0xf0] sm:$0xff]
  %v3673 = vld [vmem:[%s14 + $0xf8] sm:$0xff]
  %v3674 = vld [vmem:[%s14 + $0x100] sm:$0xff]
  %v3675 = vld [vmem:[%s14 + $0x108] sm:$0xff]
  %v3676 = vld [vmem:[%s14 + $0x110] sm:$0xff]
  %v3677 = vld [vmem:[%s14 + $0x118] sm:$0xff]
  %v3678 = vld [vmem:[%s14 + $0x120] sm:$0xff]
  %v3679 = vld [vmem:[%s14 + $0x128] sm:$0xff]
  %v3680 = vld [vmem:[%s14 + $0x130] sm:$0xff]
  %v3681 = vld [vmem:[%s14 + $0x138] sm:$0xff]
  %v3682 = vld [vmem:[%s14 + $0x140] sm:$0xff]
  %v3683 = vld [vmem:[%s14 + $0x148] sm:$0xff]
  %v3684 = vld [vmem:[%s14 + $0x150] sm:$0xff]
  %v3685 = vld [vmem:[%s14 + $0x158] sm:$0xff]
  %v3686 = vld [vmem:[%s14 + $0x160] sm:$0xff]
  %v3687 = vld [vmem:[%s14 + $0x168] sm:$0xff]
  %v3688 = vld [vmem:[%s14 + $0x170] sm:$0xff]
  %v3689 = vld [vmem:[%s14 + $0x178] sm:$0xff]
  %v3690 = vld [vmem:[%s14 + $0x180] sm:$0xff]
  %v3691 = vld [vmem:[%s14 + $0x188] sm:$0xff]
  %v3692 = vld [vmem:[%s14 + $0x190] sm:$0xff]
  %v3693 = vld [vmem:[%s14 + $0x198] sm:$0xff]
  %v3694 = vld [vmem:[%s14 + $0x1a0] sm:$0xff]
  %v3695 = vld [vmem:[%s14 + $0x1a8] sm:$0xff]
  %v3696 = vld [vmem:[%s14 + $0x1b0] sm:$0xff]
  %v3697 = vld [vmem:[%s14 + $0x1b8] sm:$0xff]
  %v3698 = vld [vmem:[%s14 + $0x1c0] sm:$0xff]
  %v3699 = vld [vmem:[%s14 + $0x1c8] sm:$0xff]
  %v3700 = vld [vmem:[%s14 + $0x1d0] sm:$0xff]
  %v3701 = vld [vmem:[%s14 + $0x1d8] sm:$0xff]
  %v3702 = vld [vmem:[%s14 + $0x1e0] sm:$0xff]
  %v3703 = vld [vmem:[%s14 + $0x1e8] sm:$0xff]
  %v3704 = vld [vmem:[%s14 + $0x1f0] sm:$0xff]
  %v3705 = vld [vmem:[%s14 + $0x1f8] sm:$0xff]
  %v3706 = vld [vmem:[%s14 + $0x200] sm:$0xff]
  %v3707 = vld [vmem:[%s14 + $0x208] sm:$0xff]
  %v3708 = vld [vmem:[%s14 + $0x210] sm:$0xff]
  %v3709 = vld [vmem:[%s14 + $0x218] sm:$0xff]
  %v3710 = vld [vmem:[%s14 + $0x220] sm:$0xff]
  %v3711 = vld [vmem:[%s14 + $0x228] sm:$0xff]
  %v3712 = vld [vmem:[%s14 + $0x230] sm:$0xff]
  %v3713 = vld [vmem:[%s14 + $0x238] sm:$0xff]
  %v3714 = vld [vmem:[%s14 + $0x240] sm:$0xff]
  %v3715 = vld [vmem:[%s14 + $0x248] sm:$0xff]
  %v3716 = vld [vmem:[%s14 + $0x250] sm:$0xff]
  %v3717 = vld [vmem:[%s14 + $0x258] sm:$0xff]
  %v3718 = vld [vmem:[%s14 + $0x260] sm:$0xff]
  %v3719 = vld [vmem:[%s14 + $0x268] sm:$0xff]
  %v3720 = vld [vmem:[%s14 + $0x270] sm:$0xff]
  %v3721 = vld [vmem:[%s14 + $0x278] sm:$0xff]
  %v3722 = vld [vmem:[%s14 + $0x280] sm:$0xff]
  %v3723 = vld [vmem:[%s14 + $0x288] sm:$0xff]
  %v3724 = vld [vmem:[%s14 + $0x290] sm:$0xff]
  %v3725 = vld [vmem:[%s14 + $0x298] sm:$0xff]
  %v3726 = vld [vmem:[%s14 + $0x2a0] sm:$0xff]
  %v3727 = vld [vmem:[%s14 + $0x2a8] sm:$0xff]
  %v3728 = vld [vmem:[%s14 + $0x2b0] sm:$0xff]
  %v3729 = vld [vmem:[%s14 + $0x2b8] sm:$0xff]
  %v3730 = vld [vmem:[%s14 + $0x2c0] sm:$0xff]
  %v3731 = vld [vmem:[%s14 + $0x2c8] sm:$0xff]
  %v3732 = vld [vmem:[%s14 + $0x2d0] sm:$0xff]
  %v3733 = vld [vmem:[%s14 + $0x2d8] sm:$0xff]
  %v3734 = vld [vmem:[%s14 + $0x2e0] sm:$0xff]
  %v3735 = vld [vmem:[%s14 + $0x2e8] sm:$0xff]
  %v3736 = vld [vmem:[%s14 + $0x2f0] sm:$0xff]
  %v3737 = vld [vmem:[%s14 + $0x2f8] sm:$0xff]
  %v3738 = vld [vmem:[%s14 + $0x300] sm:$0xff]
  %v3739 = vld [vmem:[%s14 + $0x308] sm:$0xff]
  %v3740 = vld [vmem:[%s14 + $0x310] sm:$0xff]
  %v3741 = vld [vmem:[%s14 + $0x318] sm:$0xff]
  %v3742 = vld [vmem:[%s14 + $0x320] sm:$0xff]
  %v3743 = vld [vmem:[%s14 + $0x328] sm:$0xff]
  %v3744 = vld [vmem:[%s14 + $0x330] sm:$0xff]
  %v3745 = vld [vmem:[%s14 + $0x338] sm:$0xff]
  %v3746 = vld [vmem:[%s14 + $0x340] sm:$0xff]
  %v3747 = vld [vmem:[%s14 + $0x348] sm:$0xff]
  %v3748 = vld [vmem:[%s14 + $0x350] sm:$0xff]
  %v3749 = vld [vmem:[%s14 + $0x358] sm:$0xff]
  %v3750 = vld [vmem:[%s14 + $0x360] sm:$0xff]
  %v3751 = vld [vmem:[%s14 + $0x368] sm:$0xff]
  %v3752 = vld [vmem:[%s14 + $0x370] sm:$0xff]
  %v3753 = vld [vmem:[%s14 + $0x378] sm:$0xff]
  %v3754 = vld [vmem:[%s14 + $0x380] sm:$0xff]
  %v3755 = vld [vmem:[%s14 + $0x388] sm:$0xff]
  %v3756 = vld [vmem:[%s14 + $0x390] sm:$0xff]
  %v3757 = vld [vmem:[%s14 + $0x398] sm:$0xff]
  %v3758 = vld [vmem:[%s14 + $0x3a0] sm:$0xff]
  %v3759 = vld [vmem:[%s14 + $0x3a8] sm:$0xff]
  %v3760 = vld [vmem:[%s14 + $0x3b0] sm:$0xff]
  %v3761 = vld [vmem:[%s14 + $0x3b8] sm:$0xff]
  %v3762 = vld [vmem:[%s14 + $0x3c0] sm:$0xff]
  %v3763 = vld [vmem:[%s14 + $0x3c8] sm:$0xff]
  %v3764 = vld [vmem:[%s14 + $0x3d0] sm:$0xff]
  %v3765 = vld [vmem:[%s14 + $0x3d8] sm:$0xff]
  %v3766 = vld [vmem:[%s14 + $0x3e0] sm:$0xff]
  %v3767 = vld [vmem:[%s14 + $0x3e8] sm:$0xff]
  %v3768 = vld [vmem:[%s14 + $0x3f0] sm:$0xff]
  %v3769 = vld [vmem:[%s14 + $0x3f8] sm:$0xff]
  %v3770 = vld [vmem:[%s14 + $0x400] sm:$0xff]
  %v3771 = vld [vmem:[%s14 + $0x408] sm:$0xff]
  %v3772 = vld [vmem:[%s14 + $0x410] sm:$0xff]
  %v3773 = vld [vmem:[%s14 + $0x418] sm:$0xff]
  %v3774 = vld [vmem:[%s14 + $0x420] sm:$0xff]
  %v3775 = vld [vmem:[%s14 + $0x428] sm:$0xff]
  %v3776 = vld [vmem:[%s14 + $0x430] sm:$0xff]
  %v3777 = vld [vmem:[%s14 + $0x438] sm:$0xff]
  %v3778 = vld [vmem:[%s14 + $0x440] sm:$0xff]
  %v3779 = vld [vmem:[%s14 + $0x448] sm:$0xff]
  %v3780 = vld [vmem:[%s14 + $0x450] sm:$0xff]
  %v3781 = vld [vmem:[%s14 + $0x458] sm:$0xff]
  %v3782 = vld [vmem:[%s14 + $0x460] sm:$0xff]
  %v3783 = vld [vmem:[%s14 + $0x468] sm:$0xff]
  %v3784 = vld [vmem:[%s14 + $0x470] sm:$0xff]
  %v3785 = vld [vmem:[%s14 + $0x478] sm:$0xff]
  %v3786 = vld [vmem:[%s14 + $0x480] sm:$0xff]
  %v3787 = vld [vmem:[%s14 + $0x488] sm:$0xff]
  %v3788 = vld [vmem:[%s14 + $0x490] sm:$0xff]
  %v3789 = vld [vmem:[%s14 + $0x498] sm:$0xff]
  %v3790 = vld [vmem:[%s14 + $0x4a0] sm:$0xff]
  %v3791 = vld [vmem:[%s14 + $0x4a8] sm:$0xff]
  %v3792 = vld [vmem:[%s14 + $0x4b0] sm:$0xff]
  %v3793 = vld [vmem:[%s14 + $0x4b8] sm:$0xff]
  %v3794 = vld [vmem:[%s14 + $0x4c0] sm:$0xff]
  %v3795 = vld [vmem:[%s14 + $0x4c8] sm:$0xff]
  %v3796 = vld [vmem:[%s14 + $0x4d0] sm:$0xff]
  %v3797 = vld [vmem:[%s14 + $0x4d8] sm:$0xff]
  %v3798 = vld [vmem:[%s14 + $0x4e0] sm:$0xff]
  %v3799 = vld [vmem:[%s14 + $0x4e8] sm:$0xff]
  %v3800 = vld [vmem:[%s14 + $0x4f0] sm:$0xff]
  %v3801 = vld [vmem:[%s14 + $0x4f8] sm:$0xff]
  %v3802 = vld [vmem:[%s14 + $0x500] sm:$0xff]
  %v3803 = vld [vmem:[%s14 + $0x508] sm:$0xff]
  %v3804 = vld [vmem:[%s14 + $0x510] sm:$0xff]
  %v3805 = vld [vmem:[%s14 + $0x518] sm:$0xff]
  %v3806 = vld [vmem:[%s14 + $0x520] sm:$0xff]
  %v3807 = vld [vmem:[%s14 + $0x528] sm:$0xff]
  %v3808 = vld [vmem:[%s14 + $0x530] sm:$0xff]
  %v3809 = vld [vmem:[%s14 + $0x538] sm:$0xff]
  %v3810 = vld [vmem:[%s14 + $0x540] sm:$0xff]
  %v3811 = vld [vmem:[%s14 + $0x548] sm:$0xff]
  %v3812 = vld [vmem:[%s14 + $0x550] sm:$0xff]
  %v3813 = vld [vmem:[%s14 + $0x558] sm:$0xff]
  %v3814 = vld [vmem:[%s14 + $0x560] sm:$0xff]
  %v3815 = vld [vmem:[%s14 + $0x568] sm:$0xff]
  %v3816 = vld [vmem:[%s14 + $0x570] sm:$0xff]
  %v3817 = vld [vmem:[%s14 + $0x578] sm:$0xff]
  %v3818 = vld [vmem:[%s14 + $0x580] sm:$0xff]
  %v3819 = vld [vmem:[%s14 + $0x588] sm:$0xff]
  %v3820 = vld [vmem:[%s14 + $0x590] sm:$0xff]
  %v3821 = vld [vmem:[%s14 + $0x598] sm:$0xff]
  %v3822 = vld [vmem:[%s14 + $0x5a0] sm:$0xff]
  %v3823 = vld [vmem:[%s14 + $0x5a8] sm:$0xff]
  %v3824 = vld [vmem:[%s14 + $0x5b0] sm:$0xff]
  %v3825 = vld [vmem:[%s14 + $0x5b8] sm:$0xff]
  %v3826 = vld [vmem:[%s14 + $0x5c0] sm:$0xff]
  %v3827 = vld [vmem:[%s14 + $0x5c8] sm:$0xff]
  %v3828 = vld [vmem:[%s14 + $0x5d0] sm:$0xff]
  %v3829 = vld [vmem:[%s14 + $0x5d8] sm:$0xff]
  %v3830 = vld [vmem:[%s14 + $0x5e0] sm:$0xff]
  %v3831 = vld [vmem:[%s14 + $0x5e8] sm:$0xff]
  %v3832 = vld [vmem:[%s14 + $0x5f0] sm:$0xff]
  %v3833 = vld [vmem:[%s14 + $0x5f8] sm:$0xff]
  %v3834 = vld [vmem:[%s14 + $0x600] sm:$0xff]
  %v3835 = vld [vmem:[%s14 + $0x608] sm:$0xff]
  %v3836 = vld [vmem:[%s14 + $0x610] sm:$0xff]
  %v3837 = vld [vmem:[%s14 + $0x618] sm:$0xff]
  %v3838 = vld [vmem:[%s14 + $0x620] sm:$0xff]
  %v3839 = vld [vmem:[%s14 + $0x628] sm:$0xff]
  %v3840 = vld [vmem:[%s14 + $0x630] sm:$0xff]
  %v3841 = vld [vmem:[%s14 + $0x638] sm:$0xff]
  %v3842 = vld [vmem:[%s14 + $0x640] sm:$0xff]
  %v3843 = vld [vmem:[%s14 + $0x648] sm:$0xff]
  %v3844 = vld [vmem:[%s14 + $0x650] sm:$0xff]
  %v3845 = vld [vmem:[%s14 + $0x658] sm:$0xff]
  %v3846 = vld [vmem:[%s14 + $0x660] sm:$0xff]
  %v3847 = vld [vmem:[%s14 + $0x668] sm:$0xff]
  %v3848 = vld [vmem:[%s14 + $0x670] sm:$0xff]
  %v3849 = vld [vmem:[%s14 + $0x678] sm:$0xff]
  %v3850 = vld [vmem:[%s14 + $0x680] sm:$0xff]
  %v3851 = vld [vmem:[%s14 + $0x688] sm:$0xff]
  %v3852 = vld [vmem:[%s14 + $0x690] sm:$0xff]
  %v3853 = vld [vmem:[%s14 + $0x698] sm:$0xff]
  %v3854 = vld [vmem:[%s14 + $0x6a0] sm:$0xff]
  %v3855 = vld [vmem:[%s14 + $0x6a8] sm:$0xff]
  %v3856 = vld [vmem:[%s14 + $0x6b0] sm:$0xff]
  %v3857 = vld [vmem:[%s14 + $0x6b8] sm:$0xff]
  %v3858 = vld [vmem:[%s14 + $0x6c0] sm:$0xff]
  %v3859 = vld [vmem:[%s14 + $0x6c8] sm:$0xff]
  %v3860 = vld [vmem:[%s14 + $0x6d0] sm:$0xff]
  %v3861 = vld [vmem:[%s14 + $0x6d8] sm:$0xff]
  %v3862 = vld [vmem:[%s14 + $0x6e0] sm:$0xff]
  %v3863 = vld [vmem:[%s14 + $0x6e8] sm:$0xff]
  %v3864 = vld [vmem:[%s14 + $0x6f0] sm:$0xff]
  %v3865 = vld [vmem:[%s14 + $0x6f8] sm:$0xff]
  %v3866 = vld [vmem:[%s14 + $0x700] sm:$0xff]
  %v3867 = vld [vmem:[%s14 + $0x708] sm:$0xff]
  %v3868 = vld [vmem:[%s14 + $0x710] sm:$0xff]
  %v3869 = vld [vmem:[%s14 + $0x718] sm:$0xff]
  %v3870 = vld [vmem:[%s14 + $0x720] sm:$0xff]
  %v3871 = vld [vmem:[%s14 + $0x728] sm:$0xff]
  %v3872 = vld [vmem:[%s14 + $0x730] sm:$0xff]
  %v3873 = vld [vmem:[%s14 + $0x738] sm:$0xff]
  %v3874 = vld [vmem:[%s14 + $0x740] sm:$0xff]
  %v3875 = vld [vmem:[%s14 + $0x748] sm:$0xff]
  %v3876 = vld [vmem:[%s14 + $0x750] sm:$0xff]
  %v3877 = vld [vmem:[%s14 + $0x758] sm:$0xff]
  %v3878 = vld [vmem:[%s14 + $0x760] sm:$0xff]
  %v3879 = vld [vmem:[%s14 + $0x768] sm:$0xff]
  %v3880 = vld [vmem:[%s14 + $0x770] sm:$0xff]
  %v3881 = vld [vmem:[%s14 + $0x778] sm:$0xff]
  %v3882 = vld [vmem:[%s14 + $0x780] sm:$0xff]
  %v3883 = vld [vmem:[%s14 + $0x788] sm:$0xff]
  %v3884 = vld [vmem:[%s14 + $0x790] sm:$0xff]
  %v3885 = vld [vmem:[%s14 + $0x798] sm:$0xff]
  %v3886 = vld [vmem:[%s14 + $0x7a0] sm:$0xff]
  %v3887 = vld [vmem:[%s14 + $0x7a8] sm:$0xff]
  %v3888 = vld [vmem:[%s14 + $0x7b0] sm:$0xff]
  %v3889 = vld [vmem:[%s14 + $0x7b8] sm:$0xff]
  %v3890 = vld [vmem:[%s14 + $0x7c0] sm:$0xff]
  %v3891 = vld [vmem:[%s14 + $0x7c8] sm:$0xff]
  %v3892 = vld [vmem:[%s14 + $0x7d0] sm:$0xff]
  %v3893 = vld [vmem:[%s14 + $0x7d8] sm:$0xff]
  %v3894 = vld [vmem:[%s14 + $0x7e0] sm:$0xff]
  %v3895 = vld [vmem:[%s14 + $0x7e8] sm:$0xff]
  %v3896 = vld [vmem:[%s14 + $0x7f0] sm:$0xff]
  %v3897 = vld [vmem:[%s14 + $0x7f8] sm:$0xff]
  %v3898 = vld [vmem:[%s14 + $0x800] sm:$0xff]
  %v3899 = vld [vmem:[%s14 + $0x808] sm:$0xff]
  %v3900 = vld [vmem:[%s14 + $0x810] sm:$0xff]
  %v3901 = vld [vmem:[%s14 + $0x818] sm:$0xff]
  %v3902 = vld [vmem:[%s14 + $0x820] sm:$0xff]
  %v3903 = vld [vmem:[%s14 + $0x828] sm:$0xff]
  %v3904 = vld [vmem:[%s14 + $0x830] sm:$0xff]
  %v3905 = vld [vmem:[%s14 + $0x838] sm:$0xff]
  %v3906 = vld [vmem:[%s14 + $0x840] sm:$0xff]
  %v3907 = vld [vmem:[%s14 + $0x848] sm:$0xff]
  %v3908 = vld [vmem:[%s14 + $0x850] sm:$0xff]
  %v3909 = vld [vmem:[%s14 + $0x858] sm:$0xff]
  %v3910 = vld [vmem:[%s14 + $0x860] sm:$0xff]
  %v3911 = vld [vmem:[%s14 + $0x868] sm:$0xff]
  %v3912 = vld [vmem:[%s14 + $0x870] sm:$0xff]
  %v3913 = vld [vmem:[%s14 + $0x878] sm:$0xff]
  %v3914 = vld [vmem:[%s14 + $0x880] sm:$0xff]
  %v3915 = vld [vmem:[%s14 + $0x888] sm:$0xff]
  %v3916 = vld [vmem:[%s14 + $0x890] sm:$0xff]
  %v3917 = vld [vmem:[%s14 + $0x898] sm:$0xff]
  %v3918 = vld [vmem:[%s14 + $0x8a0] sm:$0xff]
  %v3919 = vld [vmem:[%s14 + $0x8a8] sm:$0xff]
  %v3920 = vld [vmem:[%s14 + $0x8b0] sm:$0xff]
  %v3921 = vld [vmem:[%s14 + $0x8b8] sm:$0xff]
  %v3922 = vld [vmem:[%s14 + $0x8c0] sm:$0xff]
  %v3923 = vld [vmem:[%s14 + $0x8c8] sm:$0xff]
  %v3924 = vld [vmem:[%s14 + $0x8d0] sm:$0xff]
  %v3925 = vld [vmem:[%s14 + $0x8d8] sm:$0xff]
  %v3926 = vld [vmem:[%s14 + $0x8e0] sm:$0xff]
  %v3927 = vld [vmem:[%s14 + $0x8e8] sm:$0xff]
  %v3928 = vld [vmem:[%s14 + $0x8f0] sm:$0xff]
  %v3929 = vld [vmem:[%s14 + $0x8f8] sm:$0xff]
  %3930 = vmatprep.subr.mxu0 %v3673
  %3931 = vmatpush1.msra.mxu0 %v3672
  %3932 = vmatprep.subr.mxu0 %v3671
  %3933 = vmatpush1.msra.mxu0 %v3670
  %3934 = vmatprep.subr.mxu0 %v3669
  %3935 = vmatpush1.msra.mxu0 %v3668
  %3936 = vmatprep.subr.mxu0 %v3667
  %3937 = vmatpush1.msra.mxu0 %v3666
  %3938 = vmatprep.subr.mxu0 %v3665
  %3939 = vmatpush1.msra.mxu0 %v3664
  %3940 = vmatprep.subr.mxu0 %v3663
  %3941 = vmatpush1.msra.mxu0 %v3662
  %3942 = vmatprep.subr.mxu0 %v3661
  %3943 = vmatpush1.msra.mxu0 %v3660
  %3944 = vmatprep.subr.mxu0 %v3659
  %3945 = vmatpush1.msra.mxu0 %v3658
  %3946 = vmatprep.subr.mxu0 %v3657
  %3947 = vmatpush1.msra.mxu0 %v3656
  %3948 = vmatprep.subr.mxu0 %v3655
  %3949 = vmatpush1.msra.mxu0 %v3654
  %3950 = vmatprep.subr.mxu0 %v3653
  %3951 = vmatpush1.msra.mxu0 %v3652
  %3952 = vmatprep.subr.mxu0 %v3651
  %3953 = vmatpush1.msra.mxu0 %v3650
  %3954 = vmatprep.subr.mxu0 %v3649
  %3955 = vmatpush1.msra.mxu0 %v3648
  %3956 = vmatprep.subr.mxu0 %v3647
  %3957 = vmatpush1.msra.mxu0 %v3646
  %3958 = vmatprep.subr.mxu0 %v3645
  %3959 = vmatpush1.msra.mxu0 %v3644
  %3960 = vmatprep.subr.mxu0 %v3643
  %3961 = vmatpush1.msra.mxu0 %v3642
  %3962 = vmatprep.subr.mxu0 %v3705
  %3963 = vmatpush2.msra.mxu0 %v3704
  %3964 = vmatprep.subr.mxu0 %v3703
  %3965 = vmatpush2.msra.mxu0 %v3702
  %3966 = vmatprep.subr.mxu0 %v3701
  %3967 = vmatpush2.msra.mxu0 %v3700
  %3968 = vmatprep.subr.mxu0 %v3699
  %3969 = vmatpush2.msra.mxu0 %v3698
  %3970 = vmatprep.subr.mxu0 %v3697
  %3971 = vmatpush2.msra.mxu0 %v3696
  %3972 = vmatprep.subr.mxu0 %v3695
  %3973 = vmatpush2.msra.mxu0 %v3694
  %3974 = vmatprep.subr.mxu0 %v3693
  %3975 = vmatpush2.msra.mxu0 %v3692
  %3976 = vmatprep.subr.mxu0 %v3691
  %3977 = vmatpush2.msra.mxu0 %v3690
  %3978 = vmatprep.subr.mxu0 %v3689
  %3979 = vmatpush2.msra.mxu0 %v3688
  %3980 = vmatprep.subr.mxu0 %v3687
  %3981 = vmatpush2.msra.mxu0 %v3686
  %3982 = vmatprep.subr.mxu0 %v3685
  %3983 = vmatpush2.msra.mxu0 %v3684
  %3984 = vmatprep.subr.mxu0 %v3683
  %3985 = vmatpush2.msra.mxu0 %v3682
  %3986 = vmatprep.subr.mxu0 %v3681
  %3987 = vmatpush2.msra.mxu0 %v3680
  %3988 = vmatprep.subr.mxu0 %v3679
  %3989 = vmatpush2.msra.mxu0 %v3678
  %3990 = vmatprep.subr.mxu0 %v3677
  %3991 = vmatpush2.msra.mxu0 %v3676
  %3992 = vmatprep.subr.mxu0 %v3675
  %3993 = vmatpush2.msra.mxu0 %v3674
  %3994 = vmatprep.mubr.f32.mxu0 %v3449
  %3995 = vmatmul.mubr.f32.gmra.mxu0 %v3447
  %v3996 = vpop.f32.mrf.mxu0
  %v3997 = vadd.f32 0.0, %v3996
  %v3998 = vpop.f32.mrf.mxu0
  %v3999 = vadd.f32 0.0, %v3998
  %4000 = vmatprep.mubr.f32.mxu0 %v3455
  %4001 = vmatmul.mubr.f32.gmra.mxu0 %v3453
  %v4002 = vpop.f32.mrf.mxu0
  %v4003 = vadd.f32 0.0, %v4002
  %v4004 = vpop.f32.mrf.mxu0
  %v4005 = vadd.f32 0.0, %v4004
  %4006 = vmatprep.mubr.f32.mxu0 %v3461
  %4007 = vmatmul.mubr.f32.gmra.mxu0 %v3459
  %v4008 = vpop.f32.mrf.mxu0
  %v4009 = vadd.f32 0.0, %v4008
  %v4010 = vpop.f32.mrf.mxu0
  %v4011 = vadd.f32 0.0, %v4010
  %4012 = vmatprep.mubr.f32.mxu0 %v3467
  %4013 = vmatmul.mubr.f32.gmra.mxu0 %v3465
  %v4014 = vpop.f32.mrf.mxu0
  %v4015 = vadd.f32 0.0, %v4014
  %v4016 = vpop.f32.mrf.mxu0
  %v4017 = vadd.f32 0.0, %v4016
  %4018 = vdwg.mxu0
  %4019 = vmatprep.subr.mxu0 %v3737
  %4020 = vmatpush1.msra.mxu0 %v3736
  %4021 = vmatprep.subr.mxu0 %v3735
  %4022 = vmatpush1.msra.mxu0 %v3734
  %4023 = vmatprep.subr.mxu0 %v3733
  %4024 = vmatpush1.msra.mxu0 %v3732
  %4025 = vmatprep.subr.mxu0 %v3731
  %4026 = vmatpush1.msra.mxu0 %v3730
  %4027 = vmatprep.subr.mxu0 %v3729
  %4028 = vmatpush1.msra.mxu0 %v3728
  %4029 = vmatprep.subr.mxu0 %v3727
  %4030 = vmatpush1.msra.mxu0 %v3726
  %4031 = vmatprep.subr.mxu0 %v3725
  %4032 = vmatpush1.msra.mxu0 %v3724
  %4033 = vmatprep.subr.mxu0 %v3723
  %4034 = vmatpush1.msra.mxu0 %v3722
  %4035 = vmatprep.subr.mxu0 %v3721
  %4036 = vmatpush1.msra.mxu0 %v3720
  %4037 = vmatprep.subr.mxu0 %v3719
  %4038 = vmatpush1.msra.mxu0 %v3718
  %4039 = vmatprep.subr.mxu0 %v3717
  %4040 = vmatpush1.msra.mxu0 %v3716
  %4041 = vmatprep.subr.mxu0 %v3715
  %4042 = vmatpush1.msra.mxu0 %v3714
  %4043 = vmatprep.subr.mxu0 %v3713
  %4044 = vmatpush1.msra.mxu0 %v3712
  %4045 = vmatprep.subr.mxu0 %v3711
  %4046 = vmatpush1.msra.mxu0 %v3710
  %4047 = vmatprep.subr.mxu0 %v3709
  %4048 = vmatpush1.msra.mxu0 %v3708
  %4049 = vmatprep.subr.mxu0 %v3707
  %4050 = vmatpush1.msra.mxu0 %v3706
  %4051 = vmatprep.subr.mxu0 %v3769
  %4052 = vmatpush2.msra.mxu0 %v3768
  %4053 = vmatprep.subr.mxu0 %v3767
  %4054 = vmatpush2.msra.mxu0 %v3766
  %4055 = vmatprep.subr.mxu0 %v3765
  %4056 = vmatpush2.msra.mxu0 %v3764
  %4057 = vmatprep.subr.mxu0 %v3763
  %4058 = vmatpush2.msra.mxu0 %v3762
  %4059 = vmatprep.subr.mxu0 %v3761
  %4060 = vmatpush2.msra.mxu0 %v3760
  %4061 = vmatprep.subr.mxu0 %v3759
  %4062 = vmatpush2.msra.mxu0 %v3758
  %4063 = vmatprep.subr.mxu0 %v3757
  %4064 = vmatpush2.msra.mxu0 %v3756
  %4065 = vmatprep.subr.mxu0 %v3755
  %4066 = vmatpush2.msra.mxu0 %v3754
  %4067 = vmatprep.subr.mxu0 %v3753
  %4068 = vmatpush2.msra.mxu0 %v3752
  %4069 = vmatprep.subr.mxu0 %v3751
  %4070 = vmatpush2.msra.mxu0 %v3750
  %4071 = vmatprep.subr.mxu0 %v3749
  %4072 = vmatpush2.msra.mxu0 %v3748
  %4073 = vmatprep.subr.mxu0 %v3747
  %4074 = vmatpush2.msra.mxu0 %v3746
  %4075 = vmatprep.subr.mxu0 %v3745
  %4076 = vmatpush2.msra.mxu0 %v3744
  %4077 = vmatprep.subr.mxu0 %v3743
  %4078 = vmatpush2.msra.mxu0 %v3742
  %4079 = vmatprep.subr.mxu0 %v3741
  %4080 = vmatpush2.msra.mxu0 %v3740
  %4081 = vmatprep.subr.mxu0 %v3739
  %4082 = vmatpush2.msra.mxu0 %v3738
  %4083 = vmatprep.mubr.f32.mxu0 %v3471
  %4084 = vmatmul.mubr.f32.gmra.mxu0 %v3584
  %v4085 = vpop.f32.mrf.mxu0
  %v4086 = vadd.f32 %v3997, %v4085
  %v4087 = vpop.f32.mrf.mxu0
  %v4088 = vadd.f32 %v3999, %v4087
  %4089 = vmatprep.mubr.f32.mxu0 %v3477
  %4090 = vmatmul.mubr.f32.gmra.mxu0 %v3589
  %v4091 = vpop.f32.mrf.mxu0
  %v4092 = vadd.f32 %v4003, %v4091
  %v4093 = vpop.f32.mrf.mxu0
  %v4094 = vadd.f32 %v4005, %v4093
  %4095 = vmatprep.mubr.f32.mxu0 %v3483
  %4096 = vmatmul.mubr.f32.gmra.mxu0 %v3594
  %v4097 = vpop.f32.mrf.mxu0
  %v4098 = vadd.f32 %v4009, %v4097
  %v4099 = vpop.f32.mrf.mxu0
  %v4100 = vadd.f32 %v4011, %v4099
  %4101 = vmatprep.mubr.f32.mxu0 %v3489
  %4102 = vmatmul.mubr.f32.gmra.mxu0 %v3599
  %v4103 = vpop.f32.mrf.mxu0
  %v4104 = vadd.f32 %v4015, %v4103
  %v4105 = vpop.f32.mrf.mxu0
  %v4106 = vadd.f32 %v4017, %v4105
  %4107 = vdwg.mxu0
  %4108 = vmatprep.subr.mxu0 %v3801
  %4109 = vmatpush1.msra.mxu0 %v3800
  %4110 = vmatprep.subr.mxu0 %v3799
  %4111 = vmatpush1.msra.mxu0 %v3798
  %4112 = vmatprep.subr.mxu0 %v3797
  %4113 = vmatpush1.msra.mxu0 %v3796
  %4114 = vmatprep.subr.mxu0 %v3795
  %4115 = vmatpush1.msra.mxu0 %v3794
  %4116 = vmatprep.subr.mxu0 %v3793
  %4117 = vmatpush1.msra.mxu0 %v3792
  %4118 = vmatprep.subr.mxu0 %v3791
  %4119 = vmatpush1.msra.mxu0 %v3790
  %4120 = vmatprep.subr.mxu0 %v3789
  %4121 = vmatpush1.msra.mxu0 %v3788
  %4122 = vmatprep.subr.mxu0 %v3787
  %4123 = vmatpush1.msra.mxu0 %v3786
  %4124 = vmatprep.subr.mxu0 %v3785
  %4125 = vmatpush1.msra.mxu0 %v3784
  %4126 = vmatprep.subr.mxu0 %v3783
  %4127 = vmatpush1.msra.mxu0 %v3782
  %4128 = vmatprep.subr.mxu0 %v3781
  %4129 = vmatpush1.msra.mxu0 %v3780
  %4130 = vmatprep.subr.mxu0 %v3779
  %4131 = vmatpush1.msra.mxu0 %v3778
  %4132 = vmatprep.subr.mxu0 %v3777
  %4133 = vmatpush1.msra.mxu0 %v3776
  %4134 = vmatprep.subr.mxu0 %v3775
  %4135 = vmatpush1.msra.mxu0 %v3774
  %4136 = vmatprep.subr.mxu0 %v3773
  %4137 = vmatpush1.msra.mxu0 %v3772
  %4138 = vmatprep.subr.mxu0 %v3771
  %4139 = vmatpush1.msra.mxu0 %v3770
  %4140 = vmatprep.subr.mxu0 %v3833
  %4141 = vmatpush2.msra.mxu0 %v3832
  %4142 = vmatprep.subr.mxu0 %v3831
  %4143 = vmatpush2.msra.mxu0 %v3830
  %4144 = vmatprep.subr.mxu0 %v3829
  %4145 = vmatpush2.msra.mxu0 %v3828
  %4146 = vmatprep.subr.mxu0 %v3827
  %4147 = vmatpush2.msra.mxu0 %v3826
  %4148 = vmatprep.subr.mxu0 %v3825
  %4149 = vmatpush2.msra.mxu0 %v3824
  %4150 = vmatprep.subr.mxu0 %v3823
  %4151 = vmatpush2.msra.mxu0 %v3822
  %4152 = vmatprep.subr.mxu0 %v3821
  %4153 = vmatpush2.msra.mxu0 %v3820
  %4154 = vmatprep.subr.mxu0 %v3819
  %4155 = vmatpush2.msra.mxu0 %v3818
  %4156 = vmatprep.subr.mxu0 %v3817
  %4157 = vmatpush2.msra.mxu0 %v3816
  %4158 = vmatprep.subr.mxu0 %v3815
  %4159 = vmatpush2.msra.mxu0 %v3814
  %4160 = vmatprep.subr.mxu0 %v3813
  %4161 = vmatpush2.msra.mxu0 %v3812
  %4162 = vmatprep.subr.mxu0 %v3811
  %4163 = vmatpush2.msra.mxu0 %v3810
  %4164 = vmatprep.subr.mxu0 %v3809
  %4165 = vmatpush2.msra.mxu0 %v3808
  %4166 = vmatprep.subr.mxu0 %v3807
  %4167 = vmatpush2.msra.mxu0 %v3806
  %4168 = vmatprep.subr.mxu0 %v3805
  %4169 = vmatpush2.msra.mxu0 %v3804
  %4170 = vmatprep.subr.mxu0 %v3803
  %4171 = vmatpush2.msra.mxu0 %v3802
  %4172 = vmatprep.mubr.f32.mxu0 %v3604
  %4173 = vmatmul.mubr.f32.gmra.mxu0 %v3473
  %v4174 = vpop.f32.mrf.mxu0
  %v4175 = vadd.f32 %v4086, %v4174
  %v4176 = vpop.f32.mrf.mxu0
  %v4177 = vadd.f32 %v4088, %v4176
  %4178 = vmatprep.mubr.f32.mxu0 %v3609
  %4179 = vmatmul.mubr.f32.gmra.mxu0 %v3479
  %v4180 = vpop.f32.mrf.mxu0
  %v4181 = vadd.f32 %v4092, %v4180
  %v4182 = vpop.f32.mrf.mxu0
  %v4183 = vadd.f32 %v4094, %v4182
  %4184 = vmatprep.mubr.f32.mxu0 %v3614
  %4185 = vmatmul.mubr.f32.gmra.mxu0 %v3485
  %v4186 = vpop.f32.mrf.mxu0
  %v4187 = vadd.f32 %v4098, %v4186
  %v4188 = vpop.f32.mrf.mxu0
  %v4189 = vadd.f32 %v4100, %v4188
  %4190 = vmatprep.mubr.f32.mxu0 %v3619
  %4191 = vmatmul.mubr.f32.gmra.mxu0 %v3491
  %v4192 = vpop.f32.mrf.mxu0
  %v4193 = vadd.f32 %v4104, %v4192
  %v4194 = vpop.f32.mrf.mxu0
  %v4195 = vadd.f32 %v4106, %v4194
  %4196 = vdwg.mxu0
  %4197 = vmatprep.subr.mxu0 %v3865
  %4198 = vmatpush1.msra.mxu0 %v3864
  %4199 = vmatprep.subr.mxu0 %v3863
  %4200 = vmatpush1.msra.mxu0 %v3862
  %4201 = vmatprep.subr.mxu0 %v3861
  %4202 = vmatpush1.msra.mxu0 %v3860
  %4203 = vmatprep.subr.mxu0 %v3859
  %4204 = vmatpush1.msra.mxu0 %v3858
  %4205 = vmatprep.subr.mxu0 %v3857
  %4206 = vmatpush1.msra.mxu0 %v3856
  %4207 = vmatprep.subr.mxu0 %v3855
  %4208 = vmatpush1.msra.mxu0 %v3854
  %4209 = vmatprep.subr.mxu0 %v3853
  %4210 = vmatpush1.msra.mxu0 %v3852
  %4211 = vmatprep.subr.mxu0 %v3851
  %4212 = vmatpush1.msra.mxu0 %v3850
  %4213 = vmatprep.subr.mxu0 %v3849
  %4214 = vmatpush1.msra.mxu0 %v3848
  %4215 = vmatprep.subr.mxu0 %v3847
  %4216 = vmatpush1.msra.mxu0 %v3846
  %4217 = vmatprep.subr.mxu0 %v3845
  %4218 = vmatpush1.msra.mxu0 %v3844
  %4219 = vmatprep.subr.mxu0 %v3843
  %4220 = vmatpush1.msra.mxu0 %v3842
  %4221 = vmatprep.subr.mxu0 %v3841
  %4222 = vmatpush1.msra.mxu0 %v3840
  %4223 = vmatprep.subr.mxu0 %v3839
  %4224 = vmatpush1.msra.mxu0 %v3838
  %4225 = vmatprep.subr.mxu0 %v3837
  %4226 = vmatpush1.msra.mxu0 %v3836
  %4227 = vmatprep.subr.mxu0 %v3835
  %4228 = vmatpush1.msra.mxu0 %v3834
  %4229 = vmatprep.subr.mxu0 %v3897
  %4230 = vmatpush2.msra.mxu0 %v3896
  %4231 = vmatprep.subr.mxu0 %v3895
  %4232 = vmatpush2.msra.mxu0 %v3894
  %4233 = vmatprep.subr.mxu0 %v3893
  %4234 = vmatpush2.msra.mxu0 %v3892
  %4235 = vmatprep.subr.mxu0 %v3891
  %4236 = vmatpush2.msra.mxu0 %v3890
  %4237 = vmatprep.subr.mxu0 %v3889
  %4238 = vmatpush2.msra.mxu0 %v3888
  %4239 = vmatprep.subr.mxu0 %v3887
  %4240 = vmatpush2.msra.mxu0 %v3886
  %4241 = vmatprep.subr.mxu0 %v3885
  %4242 = vmatpush2.msra.mxu0 %v3884
  %4243 = vmatprep.subr.mxu0 %v3883
  %4244 = vmatpush2.msra.mxu0 %v3882
  %4245 = vmatprep.subr.mxu0 %v3881
  %4246 = vmatpush2.msra.mxu0 %v3880
  %4247 = vmatprep.subr.mxu0 %v3879
  %4248 = vmatpush2.msra.mxu0 %v3878
  %4249 = vmatprep.subr.mxu0 %v3877
  %4250 = vmatpush2.msra.mxu0 %v3876
  %4251 = vmatprep.subr.mxu0 %v3875
  %4252 = vmatpush2.msra.mxu0 %v3874
  %4253 = vmatprep.subr.mxu0 %v3873
  %4254 = vmatpush2.msra.mxu0 %v3872
  %4255 = vmatprep.subr.mxu0 %v3871
  %4256 = vmatpush2.msra.mxu0 %v3870
  %4257 = vmatprep.subr.mxu0 %v3869
  %4258 = vmatpush2.msra.mxu0 %v3868
  %4259 = vmatprep.subr.mxu0 %v3867
  %4260 = vmatpush2.msra.mxu0 %v3866
  %4261 = vmatprep.mubr.f32.mxu0 %v3497
  %4262 = vmatmul.mubr.f32.gmra.mxu0 %v3495
  %v4263 = vpop.f32.mrf.mxu0
  %v4264 = vadd.f32 %v4175, %v4263
  %v4265 = vpop.f32.mrf.mxu0
  %v4266 = vadd.f32 %v4177, %v4265
  %4267 = vmatprep.mubr.f32.mxu0 %v3503
  %4268 = vmatmul.mubr.f32.gmra.mxu0 %v3501
  %v4269 = vpop.f32.mrf.mxu0
  %v4270 = vadd.f32 %v4181, %v4269
  %v4271 = vpop.f32.mrf.mxu0
  %v4272 = vadd.f32 %v4183, %v4271
  %4273 = vmatprep.mubr.f32.mxu0 %v3509
  %4274 = vmatmul.mubr.f32.gmra.mxu0 %v3507
  %v4275 = vpop.f32.mrf.mxu0
  %v4276 = vadd.f32 %v4187, %v4275
  %v4277 = vpop.f32.mrf.mxu0
  %v4278 = vadd.f32 %v4189, %v4277
  %4279 = vmatprep.mubr.f32.mxu0 %v3515
  %4280 = vmatmul.mubr.f32.gmra.mxu0 %v3513
  %v4281 = vpop.f32.mrf.mxu0
  %v4282 = vadd.f32 %v4193, %v4281
  %v4283 = vpop.f32.mrf.mxu0
  %v4284 = vadd.f32 %v4195, %v4283
  %4285 = vdwg.mxu0
  %4286 = vmatprep.subr.mxu0 %v3929
  %4287 = vmatpush1.msra.mxu0 %v3928
  %4288 = vmatprep.subr.mxu0 %v3927
  %4289 = vmatpush1.msra.mxu0 %v3926
  %4290 = vmatprep.subr.mxu0 %v3925
  %4291 = vmatpush1.msra.mxu0 %v3924
  %4292 = vmatprep.subr.mxu0 %v3923
  %4293 = vmatpush1.msra.mxu0 %v3922
  %4294 = vmatprep.subr.mxu0 %v3921
  %4295 = vmatpush1.msra.mxu0 %v3920
  %4296 = vmatprep.subr.mxu0 %v3919
  %4297 = vmatpush1.msra.mxu0 %v3918
  %4298 = vmatprep.subr.mxu0 %v3917
  %4299 = vmatpush1.msra.mxu0 %v3916
  %4300 = vmatprep.subr.mxu0 %v3915
  %4301 = vmatpush1.msra.mxu0 %v3914
  %4302 = vmatprep.subr.mxu0 %v3913
  %4303 = vmatpush1.msra.mxu0 %v3912
  %4304 = vmatprep.subr.mxu0 %v3911
  %4305 = vmatpush1.msra.mxu0 %v3910
  %4306 = vmatprep.subr.mxu0 %v3909
  %4307 = vmatpush1.msra.mxu0 %v3908
  %4308 = vmatprep.subr.mxu0 %v3907
  %4309 = vmatpush1.msra.mxu0 %v3906
  %4310 = vmatprep.subr.mxu0 %v3905
  %4311 = vmatpush1.msra.mxu0 %v3904
  %4312 = vmatprep.subr.mxu0 %v3903
  %4313 = vmatpush1.msra.mxu0 %v3902
  %4314 = vmatprep.subr.mxu0 %v3901
  %4315 = vmatpush1.msra.mxu0 %v3900
  %4316 = vmatprep.subr.mxu0 %v3899
  %4317 = vmatpush1.msra.mxu0 %v3898
  %4318 = vmatprep.subr.mxu0 0.0
  %4319 = vmatpush2.msra.mxu0 0.0
  %4320 = vmatprep.subr.mxu0 0.0
  %4321 = vmatpush2.msra.mxu0 0.0
  %4322 = vmatprep.subr.mxu0 0.0
  %4323 = vmatpush2.msra.mxu0 0.0
  %4324 = vmatprep.subr.mxu0 0.0
  %4325 = vmatpush2.msra.mxu0 0.0
  %4326 = vmatprep.subr.mxu0 0.0
  %4327 = vmatpush2.msra.mxu0 0.0
  %4328 = vmatprep.subr.mxu0 0.0
  %4329 = vmatpush2.msra.mxu0 0.0
  %4330 = vmatprep.subr.mxu0 0.0
  %4331 = vmatpush2.msra.mxu0 0.0
  %4332 = vmatprep.subr.mxu0 0.0
  %4333 = vmatpush2.msra.mxu0 0.0
  %4334 = vmatprep.subr.mxu0 0.0
  %4335 = vmatpush2.msra.mxu0 0.0
  %4336 = vmatprep.subr.mxu0 0.0
  %4337 = vmatpush2.msra.mxu0 0.0
  %4338 = vmatprep.subr.mxu0 0.0
  %4339 = vmatpush2.msra.mxu0 0.0
  %4340 = vmatprep.subr.mxu0 0.0
  %4341 = vmatpush2.msra.mxu0 0.0
  %4342 = vmatprep.subr.mxu0 0.0
  %4343 = vmatpush2.msra.mxu0 0.0
  %4344 = vmatprep.subr.mxu0 0.0
  %4345 = vmatpush2.msra.mxu0 0.0
  %4346 = vmatprep.subr.mxu0 0.0
  %4347 = vmatpush2.msra.mxu0 0.0
  %4348 = vmatprep.subr.mxu0 0.0
  %4349 = vmatpush2.msra.mxu0 0.0
  %4350 = vmatprep.mubr.f32.mxu0 0.0
  %4351 = vmatmul.mubr.f32.gmra.mxu0 %v3624
  %v4352 = vpop.f32.mrf.mxu0
  %v4353 = vadd.f32 %v4264, %v4352
  %v4354 = vpop.f32.mrf.mxu0
  %v4355 = vadd.f32 %v4266, %v4354
  %4356 = vmatprep.mubr.f32.mxu0 0.0
  %4357 = vmatmul.mubr.f32.gmra.mxu0 %v3629
  %v4358 = vpop.f32.mrf.mxu0
  %v4359 = vadd.f32 %v4270, %v4358
  %v4360 = vpop.f32.mrf.mxu0
  %v4361 = vadd.f32 %v4272, %v4360
  %4362 = vmatprep.mubr.f32.mxu0 0.0
  %4363 = vmatmul.mubr.f32.gmra.mxu0 %v3634
  %v4364 = vpop.f32.mrf.mxu0
  %v4365 = vadd.f32 %v4276, %v4364
  %v4366 = vpop.f32.mrf.mxu0
  %v4367 = vadd.f32 %v4278, %v4366
  %4368 = vmatprep.mubr.f32.mxu0 0.0
  %4369 = vmatmul.mubr.f32.gmra.mxu0 %v3639
  %v4370 = vpop.f32.mrf.mxu0
  %v4371 = vadd.f32 %v4282, %v4370
  %v4372 = vpop.f32.mrf.mxu0
  %v4373 = vadd.f32 %v4284, %v4372
  %4374 = vdwg.mxu0
  %s4375 = scalar_lea.vmem %s17, 2
  %v4376 = vld [vmem:[%s4375] ss:$8 sm:$0x3]
  %v4378 = vlaneseq
  %v4379 = vshrl.u32 %v4378, 7
  %v4380 = vsub.s32 0, %v4379
  %v4381 = vrot.slane %v4376, %v4380
  %v4382 = vlaneseq
  %v4383 = vshrl.u32 %v4382, 7
  %v4384 = vsub.s32 1, %v4383
  %v4385 = vrot.slane %v4376, %v4384
  %v4388 = vmul.f32 %v4353, %v4381
  %v4389 = vmul.f32 %v4355, %v4385
  %v4390 = vmul.f32 %v4359, %v4381
  %v4391 = vmul.f32 %v4361, %v4385
  %v4392 = vmul.f32 %v4365, %v4381
  %v4393 = vmul.f32 %v4367, %v4385
  %v4394 = vmul.f32 %v4371, %v4381
  %v4395 = vmul.f32 %v4373, %v4385
  %s4396 = scalar_lea.vmem %s17, 3
  %v4397 = vld [vmem:[%s4396] ss:$8 sm:$0x3]
  %v4399 = vlaneseq
  %v4400 = vshrl.u32 %v4399, 7
  %v4401 = vsub.s32 0, %v4400
  %v4402 = vrot.slane %v4397, %v4401
  %v4403 = vlaneseq
  %v4404 = vshrl.u32 %v4403, 7
  %v4405 = vsub.s32 1, %v4404
  %v4406 = vrot.slane %v4397, %v4405
  %v4409 = vadd.f32 %v4388, %v4402
  %v4410 = vadd.f32 %v4389, %v4406
  %v4411 = vadd.f32 %v4390, %v4402
  %v4412 = vadd.f32 %v4391, %v4406
  %v4413 = vadd.f32 %v4392, %v4402
  %v4414 = vadd.f32 %v4393, %v4406
  %v4415 = vadd.f32 %v4394, %v4402
  %v4416 = vadd.f32 %v4395, %v4406
  %v4417 = vmax.f32 %v4409, 0.0
  %v4418 = vmax.f32 %v4410, 0.0
  %v4419 = vmax.f32 %v4411, 0.0
  %v4420 = vmax.f32 %v4412, 0.0
  %v4421 = vmax.f32 %v4413, 0.0
  %v4422 = vmax.f32 %v4414, 0.0
  %v4423 = vmax.f32 %v4415, 0.0
  %v4424 = vmax.f32 %v4416, 0.0
  %v4425 = vadd.f32 %v4417, %v4419
  %v4426 = vrot.slane %v4425, 4
  %v4427 = vadd.f32 %v4425, %v4426
  %v4428 = vrot.slane %v4427, 2
  %v4429 = vadd.f32 %v4427, %v4428
  %v4430 = vrot.slane %v4429, 1
  %v4431 = vadd.f32 %v4429, %v4430
  %v4432 = vsel %vm2180, %v4418, 0.0
  %v4433 = vsel %vm2180, %v4420, 0.0
  %v4434 = vadd.f32 %v4432, %v4433
  %v4435 = vrot.slane %v4434, 4
  %v4436 = vadd.f32 %v4434, %v4435
  %v4437 = vrot.slane %v4436, 2
  %v4438 = vadd.f32 %v4436, %v4437
  %v4439 = vrot.slane %v4438, 1
  %v4440 = vadd.f32 %v4438, %v4439
  %v4441 = vadd.f32 %v4421, %v4423
  %v4442 = vrot.slane %v4441, 4
  %v4443 = vadd.f32 %v4441, %v4442
  %v4444 = vrot.slane %v4443, 2
  %v4445 = vadd.f32 %v4443, %v4444
  %v4446 = vrot.slane %v4445, 1
  %v4447 = vadd.f32 %v4445, %v4446
  %v4448 = vsel %vm2180, %v4422, 0.0
  %v4449 = vsel %vm2180, %v4424, 0.0
  %v4450 = vadd.f32 %v4448, %v4449
  %v4451 = vrot.slane %v4450, 4
  %v4452 = vadd.f32 %v4450, %v4451
  %v4453 = vrot.slane %v4452, 2
  %v4454 = vadd.f32 %v4452, %v4453
  %v4455 = vrot.slane %v4454, 1
  %v4456 = vadd.f32 %v4454, %v4455
  %v4457 = vsel %vm2216, %v4431, %v4447
  %v4458 = vsel %vm2216, %v4440, %v4456
  %v4459 = vld [vmem:[%s15] sm:$0xff]
  %v4460 = vld [vmem:[%s15 + $0x8] sm:$0xff]
  %v4461 = vld [vmem:[%s15 + $0x10] sm:$0xff]
  %v4462 = vld [vmem:[%s15 + $0x18] sm:$0xff]
  %v4463 = vld [vmem:[%s15 + $0x20] sm:$0xff]
  %v4464 = vld [vmem:[%s15 + $0x28] sm:$0xff]
  %v4465 = vld [vmem:[%s15 + $0x30] sm:$0xff]
  %v4466 = vld [vmem:[%s15 + $0x38] sm:$0xff]
  %v4467 = vld [vmem:[%s15 + $0x40] sm:$0xff]
  %v4468 = vld [vmem:[%s15 + $0x48] sm:$0xff]
  %v4469 = vld [vmem:[%s15 + $0x50] sm:$0xff]
  %v4470 = vld [vmem:[%s15 + $0x58] sm:$0xff]
  %v4471 = vld [vmem:[%s15 + $0x60] sm:$0xff]
  %v4472 = vld [vmem:[%s15 + $0x68] sm:$0xff]
  %v4473 = vld [vmem:[%s15 + $0x70] sm:$0xff]
  %v4474 = vld [vmem:[%s15 + $0x78] sm:$0xff]
  %v4475 = vld [vmem:[%s15 + $0x80] sm:$0xff]
  %v4476 = vld [vmem:[%s15 + $0x88] sm:$0xff]
  %v4477 = vld [vmem:[%s15 + $0x90] sm:$0xff]
  %v4478 = vld [vmem:[%s15 + $0x98] sm:$0xff]
  %v4479 = vld [vmem:[%s15 + $0xa0] sm:$0xff]
  %v4480 = vld [vmem:[%s15 + $0xa8] sm:$0xff]
  %v4481 = vld [vmem:[%s15 + $0xb0] sm:$0xff]
  %v4482 = vld [vmem:[%s15 + $0xb8] sm:$0xff]
  %v4484 = vsel %vm2180, %v4458, 0
  %4486 = vmatprep.subr.mxu0 0.0
  %4487 = vmatpush1.msra.mxu0 %v4474
  %4488 = vmatprep.subr.mxu0 0.0
  %4489 = vmatpush1.msra.mxu0 %v4473
  %4490 = vmatprep.subr.mxu0 0.0
  %4491 = vmatpush1.msra.mxu0 %v4472
  %4492 = vmatprep.subr.mxu0 0.0
  %4493 = vmatpush1.msra.mxu0 %v4471
  %4494 = vmatprep.subr.mxu0 0.0
  %4495 = vmatpush1.msra.mxu0 %v4470
  %4496 = vmatprep.subr.mxu0 0.0
  %4497 = vmatpush1.msra.mxu0 %v4469
  %4498 = vmatprep.subr.mxu0 0.0
  %4499 = vmatpush1.msra.mxu0 %v4468
  %4500 = vmatprep.subr.mxu0 0.0
  %4501 = vmatpush1.msra.mxu0 %v4467
  %4502 = vmatprep.subr.mxu0 0.0
  %4503 = vmatpush1.msra.mxu0 %v4466
  %4504 = vmatprep.subr.mxu0 0.0
  %4505 = vmatpush1.msra.mxu0 %v4465
  %4506 = vmatprep.subr.mxu0 0.0
  %4507 = vmatpush1.msra.mxu0 %v4464
  %4508 = vmatprep.subr.mxu0 0.0
  %4509 = vmatpush1.msra.mxu0 %v4463
  %4510 = vmatprep.subr.mxu0 0.0
  %4511 = vmatpush1.msra.mxu0 %v4462
  %4512 = vmatprep.subr.mxu0 0.0
  %4513 = vmatpush1.msra.mxu0 %v4461
  %4514 = vmatprep.subr.mxu0 0.0
  %4515 = vmatpush1.msra.mxu0 %v4460
  %4516 = vmatprep.subr.mxu0 0.0
  %4517 = vmatpush1.msra.mxu0 %v4459
  %4518 = vmatprep.subr.mxu0 0.0
  %4519 = vmatpush2.msra.mxu0 0.0
  %4520 = vmatprep.subr.mxu0 0.0
  %4521 = vmatpush2.msra.mxu0 0.0
  %4522 = vmatprep.subr.mxu0 0.0
  %4523 = vmatpush2.msra.mxu0 0.0
  %4524 = vmatprep.subr.mxu0 0.0
  %4525 = vmatpush2.msra.mxu0 0.0
  %4526 = vmatprep.subr.mxu0 0.0
  %4527 = vmatpush2.msra.mxu0 0.0
  %4528 = vmatprep.subr.mxu0 0.0
  %4529 = vmatpush2.msra.mxu0 0.0
  %4530 = vmatprep.subr.mxu0 0.0
  %4531 = vmatpush2.msra.mxu0 0.0
  %4532 = vmatprep.subr.mxu0 0.0
  %4533 = vmatpush2.msra.mxu0 0.0
  %4534 = vmatprep.subr.mxu0 0.0
  %4535 = vmatpush2.msra.mxu0 %v4482
  %4536 = vmatprep.subr.mxu0 0.0
  %4537 = vmatpush2.msra.mxu0 %v4481
  %4538 = vmatprep.subr.mxu0 0.0
  %4539 = vmatpush2.msra.mxu0 %v4480
  %4540 = vmatprep.subr.mxu0 0.0
  %4541 = vmatpush2.msra.mxu0 %v4479
  %4542 = vmatprep.subr.mxu0 0.0
  %4543 = vmatpush2.msra.mxu0 %v4478
  %4544 = vmatprep.subr.mxu0 0.0
  %4545 = vmatpush2.msra.mxu0 %v4477
  %4546 = vmatprep.subr.mxu0 0.0
  %4547 = vmatpush2.msra.mxu0 %v4476
  %4548 = vmatprep.subr.mxu0 0.0
  %4549 = vmatpush2.msra.mxu0 %v4475
  %4550 = vmatprep.mubr.f32.mxu0 %v4484
  %4551 = vmatmul.mubr.f32.gmra.mxu0 %v4457
  %v4552 = vpop.f32.mrf.mxu0
  %v4553 = vadd.f32 0.0, %v4552
  %v4554 = vpop.f32.mrf.mxu0
  %4555 = vdwg.mxu0
  %v4556 = vld [vmem:[%s16] sm:$0xff]
  %v4557 = vld [vmem:[%s16 + $0x10] sm:$0xff]
  %v4558 = vld [vmem:[%s16 + $0x20] sm:$0xff]
  %v4559 = vld [vmem:[%s16 + $0x30] sm:$0xff]
  %v4560 = vld [vmem:[%s16 + $0x40] sm:$0xff]
  %v4561 = vld [vmem:[%s16 + $0x50] sm:$0xff]
  %v4562 = vld [vmem:[%s17 + $0x7] ss:$0 sm:$0xff]
  %vm4563 = vcmask 392192
  %v4565 = vsel %vm4563, %v4553, 0
  %4567 = vmatprep.subr.mxu0 0.0
  %4568 = vmatpush1.msra.mxu0 0.0
  %4569 = vmatprep.subr.mxu0 0.0
  %4570 = vmatpush1.msra.mxu0 0.0
  %4571 = vmatprep.subr.mxu0 0.0
  %4572 = vmatpush1.msra.mxu0 0.0
  %4573 = vmatprep.subr.mxu0 0.0
  %4574 = vmatpush1.msra.mxu0 0.0
  %4575 = vmatprep.subr.mxu0 0.0
  %4576 = vmatpush1.msra.mxu0 0.0
  %4577 = vmatprep.subr.mxu0 0.0
  %4578 = vmatpush1.msra.mxu0 0.0
  %4579 = vmatprep.subr.mxu0 0.0
  %4580 = vmatpush1.msra.mxu0 0.0
  %4581 = vmatprep.subr.mxu0 0.0
  %4582 = vmatpush1.msra.mxu0 0.0
  %4583 = vmatprep.subr.mxu0 0.0
  %4584 = vmatpush1.msra.mxu0 0.0
  %4585 = vmatprep.subr.mxu0 0.0
  %4586 = vmatpush1.msra.mxu0 0.0
  %4587 = vmatprep.subr.mxu0 0.0
  %4588 = vmatpush1.msra.mxu0 %v4561
  %4589 = vmatprep.subr.mxu0 0.0
  %4590 = vmatpush1.msra.mxu0 %v4560
  %4591 = vmatprep.subr.mxu0 0.0
  %4592 = vmatpush1.msra.mxu0 %v4559
  %4593 = vmatprep.subr.mxu0 0.0
  %4594 = vmatpush1.msra.mxu0 %v4558
  %4595 = vmatprep.subr.mxu0 0.0
  %4596 = vmatpush1.msra.mxu0 %v4557
  %4597 = vmatprep.subr.mxu0 0.0
  %4598 = vmatpush1.msra.mxu0 %v4556
  %4599 = vmatprep.subr.mxu0 0.0
  %4600 = vmatpush2.msra.mxu0 0.0
  %4601 = vmatprep.subr.mxu0 0.0
  %4602 = vmatpush2.msra.mxu0 0.0
  %4603 = vmatprep.subr.mxu0 0.0
  %4604 = vmatpush2.msra.mxu0 0.0
  %4605 = vmatprep.subr.mxu0 0.0
  %4606 = vmatpush2.msra.mxu0 0.0
  %4607 = vmatprep.subr.mxu0 0.0
  %4608 = vmatpush2.msra.mxu0 0.0
  %4609 = vmatprep.subr.mxu0 0.0
  %4610 = vmatpush2.msra.mxu0 0.0
  %4611 = vmatprep.subr.mxu0 0.0
  %4612 = vmatpush2.msra.mxu0 0.0
  %4613 = vmatprep.subr.mxu0 0.0
  %4614 = vmatpush2.msra.mxu0 0.0
  %4615 = vmatprep.subr.mxu0 0.0
  %4616 = vmatpush2.msra.mxu0 0.0
  %4617 = vmatprep.subr.mxu0 0.0
  %4618 = vmatpush2.msra.mxu0 0.0
  %4619 = vmatprep.subr.mxu0 0.0
  %4620 = vmatpush2.msra.mxu0 0.0
  %4621 = vmatprep.subr.mxu0 0.0
  %4622 = vmatpush2.msra.mxu0 0.0
  %4623 = vmatprep.subr.mxu0 0.0
  %4624 = vmatpush2.msra.mxu0 0.0
  %4625 = vmatprep.subr.mxu0 0.0
  %4626 = vmatpush2.msra.mxu0 0.0
  %4627 = vmatprep.subr.mxu0 0.0
  %4628 = vmatpush2.msra.mxu0 0.0
  %4629 = vmatprep.subr.mxu0 0.0
  %4630 = vmatpush2.msra.mxu0 0.0
  %4631 = vmatprep.mubr.f32.mxu0 0.0
  %4632 = vmatmul.mubr.f32.gmra.mxu0 %v4565
  %v4633 = vpop.f32.mrf.mxu0
  %v4634 = vadd.f32 %v4562, %v4633
  %v4635 = vpop.f32.mrf.mxu0
  %4636 = vdwg.mxu0
  %v4637 = vmax.f32 %v4634, 0.0
  %v4638 = vld [vmem:[%s16 + $0x60] sm:$0xff]
  %v4639 = vld [vmem:[%s16 + $0x68] sm:$0xff]
  %v4640 = vld [vmem:[%s16 + $0x70] sm:$0xff]
  %v4641 = vld [vmem:[%s16 + $0x78] sm:$0xff]
  %s4642 = scalar_lea.vmem %s17, 24
  %v4643 = vld [vmem:[%s4642] ss:$8 sm:$0x3]
  %v4645 = vlaneseq
  %v4646 = vshrl.u32 %v4645, 7
  %v4647 = vsub.s32 0, %v4646
  %v4648 = vrot.slane %v4643, %v4647
  %v4649 = vlaneseq
  %v4650 = vshrl.u32 %v4649, 7
  %v4651 = vsub.s32 1, %v4650
  %v4652 = vrot.slane %v4643, %v4651
  %v4656 = vsel %vm99, %v4637, 0
  %4658 = vmatprep.subr.mxu0 0.0
  %4659 = vmatpush1.msra.mxu0 0.0
  %4660 = vmatprep.subr.mxu0 0.0
  %4661 = vmatpush1.msra.mxu0 0.0
  %4662 = vmatprep.subr.mxu0 0.0
  %4663 = vmatpush1.msra.mxu0 0.0
  %4664 = vmatprep.subr.mxu0 0.0
  %4665 = vmatpush1.msra.mxu0 0.0
  %4666 = vmatprep.subr.mxu0 0.0
  %4667 = vmatpush1.msra.mxu0 0.0
  %4668 = vmatprep.subr.mxu0 0.0
  %4669 = vmatpush1.msra.mxu0 0.0
  %4670 = vmatprep.subr.mxu0 0.0
  %4671 = vmatpush1.msra.mxu0 0.0
  %4672 = vmatprep.subr.mxu0 0.0
  %4673 = vmatpush1.msra.mxu0 0.0
  %4674 = vmatprep.subr.mxu0 0.0
  %4675 = vmatpush1.msra.mxu0 0.0
  %4676 = vmatprep.subr.mxu0 0.0
  %4677 = vmatpush1.msra.mxu0 0.0
  %4678 = vmatprep.subr.mxu0 0.0
  %4679 = vmatpush1.msra.mxu0 0.0
  %4680 = vmatprep.subr.mxu0 0.0
  %4681 = vmatpush1.msra.mxu0 0.0
  %4682 = vmatprep.subr.mxu0 0.0
  %4683 = vmatpush1.msra.mxu0 0.0
  %4684 = vmatprep.subr.mxu0 0.0
  %4685 = vmatpush1.msra.mxu0 0.0
  %4686 = vmatprep.subr.mxu0 %v4641
  %4687 = vmatpush1.msra.mxu0 %v4640
  %4688 = vmatprep.subr.mxu0 %v4639
  %4689 = vmatpush1.msra.mxu0 %v4638
  %4690 = vmatprep.subr.mxu0 0.0
  %4691 = vmatpush2.msra.mxu0 0.0
  %4692 = vmatprep.subr.mxu0 0.0
  %4693 = vmatpush2.msra.mxu0 0.0
  %4694 = vmatprep.subr.mxu0 0.0
  %4695 = vmatpush2.msra.mxu0 0.0
  %4696 = vmatprep.subr.mxu0 0.0
  %4697 = vmatpush2.msra.mxu0 0.0
  %4698 = vmatprep.subr.mxu0 0.0
  %4699 = vmatpush2.msra.mxu0 0.0
  %4700 = vmatprep.subr.mxu0 0.0
  %4701 = vmatpush2.msra.mxu0 0.0
  %4702 = vmatprep.subr.mxu0 0.0
  %4703 = vmatpush2.msra.mxu0 0.0
  %4704 = vmatprep.subr.mxu0 0.0
  %4705 = vmatpush2.msra.mxu0 0.0
  %4706 = vmatprep.subr.mxu0 0.0
  %4707 = vmatpush2.msra.mxu0 0.0
  %4708 = vmatprep.subr.mxu0 0.0
  %4709 = vmatpush2.msra.mxu0 0.0
  %4710 = vmatprep.subr.mxu0 0.0
  %4711 = vmatpush2.msra.mxu0 0.0
  %4712 = vmatprep.subr.mxu0 0.0
  %4713 = vmatpush2.msra.mxu0 0.0
  %4714 = vmatprep.subr.mxu0 0.0
  %4715 = vmatpush2.msra.mxu0 0.0
  %4716 = vmatprep.subr.mxu0 0.0
  %4717 = vmatpush2.msra.mxu0 0.0
  %4718 = vmatprep.subr.mxu0 0.0
  %4719 = vmatpush2.msra.mxu0 0.0
  %4720 = vmatprep.subr.mxu0 0.0
  %4721 = vmatpush2.msra.mxu0 0.0
  %4722 = vmatprep.mubr.f32.mxu0 0.0
  %4723 = vmatmul.mubr.f32.gmra.mxu0 %v4656
  %v4724 = vpop.f32.mrf.mxu0
  %v4725 = vadd.f32 %v4648, %v4724
  %v4726 = vpop.f32.mrf.mxu0
  %v4727 = vadd.f32 %v4652, %v4726
  %4728 = vdwg.mxu0
  %v4729 = vxor.u32 %v4725, 2147483648
  %v4730 = vxor.u32 %v4727, 2147483648
  %v4731 = vmul.f32 %v4729, 1.442695
  %v4732 = vpow.pop %v4731
  %v4733 = vmul.f32 %v4730, 1.442695
  %v4734 = vpow.pop %v4733
  %v4735 = vadd.f32 %v4732, 1.0
  %v4736 = vadd.f32 %v4734, 1.0
  %v4737 = vrcp.pop %v4735
  %v4738 = vmul.f32 1.0, %v4737
  %v4739 = vrcp.pop %v4736
  %v4740 = vmul.f32 1.0, %v4739
  %v4741 = vlaneseq
  %v4742 = vshrl.u32 %v4741, 7
  %v4743 = vsub.s32 0, %v4742
  %v4744 = vrot.slane %v4738, %v4743
  %v4745 = vlaneseq
  %v4746 = vshrl.u32 %v4745, 7
  %v4747 = vsub.s32 0, %v4746
  %v4748 = vrot.slane %v4740, %v4747
  %v4749 = vmul.f32 %v4417, %v4744
  %v4750 = vmul.f32 %v4418, %v4748
  %v4751 = vmul.f32 %v4419, %v4744
  %v4752 = vmul.f32 %v4420, %v4748
  %v4753 = vlaneseq
  %v4754 = vshrl.u32 %v4753, 7
  %v4755 = vsub.s32 1, %v4754
  %v4756 = vrot.slane %v4738, %v4755
  %v4757 = vlaneseq
  %v4758 = vshrl.u32 %v4757, 7
  %v4759 = vsub.s32 1, %v4758
  %v4760 = vrot.slane %v4740, %v4759
  %v4761 = vmul.f32 %v4421, %v4756
  %v4762 = vmul.f32 %v4422, %v4760
  %v4763 = vmul.f32 %v4423, %v4756
  %v4764 = vmul.f32 %v4424, %v4760
  %v4765 = vld [vmem:[%s18] sm:$0xff]
  %v4766 = vld [vmem:[%s18 + $0x8] sm:$0xff]
  %v4767 = vld [vmem:[%s18 + $0x10] sm:$0xff]
  %v4768 = vld [vmem:[%s18 + $0x18] sm:$0xff]
  %v4769 = vld [vmem:[%s18 + $0x20] sm:$0xff]
  %v4770 = vld [vmem:[%s18 + $0x28] sm:$0xff]
  %v4771 = vld [vmem:[%s18 + $0x30] sm:$0xff]
  %v4772 = vld [vmem:[%s18 + $0x38] sm:$0xff]
  %v4773 = vld [vmem:[%s18 + $0x40] sm:$0xff]
  %v4774 = vld [vmem:[%s18 + $0x48] sm:$0xff]
  %v4775 = vld [vmem:[%s18 + $0x50] sm:$0xff]
  %v4776 = vld [vmem:[%s18 + $0x58] sm:$0xff]
  %v4777 = vld [vmem:[%s18 + $0x60] sm:$0xff]
  %v4778 = vld [vmem:[%s18 + $0x68] sm:$0xff]
  %v4779 = vld [vmem:[%s18 + $0x70] sm:$0xff]
  %v4780 = vld [vmem:[%s18 + $0x78] sm:$0xff]
  %v4781 = vld [vmem:[%s18 + $0x80] sm:$0xff]
  %v4782 = vld [vmem:[%s18 + $0x88] sm:$0xff]
  %v4783 = vld [vmem:[%s18 + $0x90] sm:$0xff]
  %v4784 = vld [vmem:[%s18 + $0x98] sm:$0xff]
  %v4785 = vld [vmem:[%s18 + $0xa0] sm:$0xff]
  %v4786 = vld [vmem:[%s18 + $0xa8] sm:$0xff]
  %v4787 = vld [vmem:[%s18 + $0xb0] sm:$0xff]
  %v4788 = vld [vmem:[%s18 + $0xb8] sm:$0xff]
  %v4790 = vsel %vm2180, %v4750, 0
  %v4793 = vsel %vm2180, %v4752, 0
  %v4796 = vsel %vm2180, %v4762, 0
  %v4799 = vsel %vm2180, %v4764, 0
  %4801 = vmatprep.subr.mxu0 0.0
  %4802 = vmatpush1.msra.mxu0 %v4780
  %4803 = vmatprep.subr.mxu0 0.0
  %4804 = vmatpush1.msra.mxu0 %v4779
  %4805 = vmatprep.subr.mxu0 0.0
  %4806 = vmatpush1.msra.mxu0 %v4778
  %4807 = vmatprep.subr.mxu0 0.0
  %4808 = vmatpush1.msra.mxu0 %v4777
  %4809 = vmatprep.subr.mxu0 0.0
  %4810 = vmatpush1.msra.mxu0 %v4776
  %4811 = vmatprep.subr.mxu0 0.0
  %4812 = vmatpush1.msra.mxu0 %v4775
  %4813 = vmatprep.subr.mxu0 0.0
  %4814 = vmatpush1.msra.mxu0 %v4774
  %4815 = vmatprep.subr.mxu0 0.0
  %4816 = vmatpush1.msra.mxu0 %v4773
  %4817 = vmatprep.subr.mxu0 0.0
  %4818 = vmatpush1.msra.mxu0 %v4772
  %4819 = vmatprep.subr.mxu0 0.0
  %4820 = vmatpush1.msra.mxu0 %v4771
  %4821 = vmatprep.subr.mxu0 0.0
  %4822 = vmatpush1.msra.mxu0 %v4770
  %4823 = vmatprep.subr.mxu0 0.0
  %4824 = vmatpush1.msra.mxu0 %v4769
  %4825 = vmatprep.subr.mxu0 0.0
  %4826 = vmatpush1.msra.mxu0 %v4768
  %4827 = vmatprep.subr.mxu0 0.0
  %4828 = vmatpush1.msra.mxu0 %v4767
  %4829 = vmatprep.subr.mxu0 0.0
  %4830 = vmatpush1.msra.mxu0 %v4766
  %4831 = vmatprep.subr.mxu0 0.0
  %4832 = vmatpush1.msra.mxu0 %v4765
  %4833 = vmatprep.subr.mxu0 0.0
  %4834 = vmatpush2.msra.mxu0 0.0
  %4835 = vmatprep.subr.mxu0 0.0
  %4836 = vmatpush2.msra.mxu0 0.0
  %4837 = vmatprep.subr.mxu0 0.0
  %4838 = vmatpush2.msra.mxu0 0.0
  %4839 = vmatprep.subr.mxu0 0.0
  %4840 = vmatpush2.msra.mxu0 0.0
  %4841 = vmatprep.subr.mxu0 0.0
  %4842 = vmatpush2.msra.mxu0 0.0
  %4843 = vmatprep.subr.mxu0 0.0
  %4844 = vmatpush2.msra.mxu0 0.0
  %4845 = vmatprep.subr.mxu0 0.0
  %4846 = vmatpush2.msra.mxu0 0.0
  %4847 = vmatprep.subr.mxu0 0.0
  %4848 = vmatpush2.msra.mxu0 0.0
  %4849 = vmatprep.subr.mxu0 0.0
  %4850 = vmatpush2.msra.mxu0 %v4788
  %4851 = vmatprep.subr.mxu0 0.0
  %4852 = vmatpush2.msra.mxu0 %v4787
  %4853 = vmatprep.subr.mxu0 0.0
  %4854 = vmatpush2.msra.mxu0 %v4786
  %4855 = vmatprep.subr.mxu0 0.0
  %4856 = vmatpush2.msra.mxu0 %v4785
  %4857 = vmatprep.subr.mxu0 0.0
  %4858 = vmatpush2.msra.mxu0 %v4784
  %4859 = vmatprep.subr.mxu0 0.0
  %4860 = vmatpush2.msra.mxu0 %v4783
  %4861 = vmatprep.subr.mxu0 0.0
  %4862 = vmatpush2.msra.mxu0 %v4782
  %4863 = vmatprep.subr.mxu0 0.0
  %4864 = vmatpush2.msra.mxu0 %v4781
  %4865 = vmatprep.mubr.f32.mxu0 %v4790
  %4866 = vmatmul.mubr.f32.gmra.mxu0 %v4749
  %v4867 = vpop.f32.mrf.mxu0
  %v4868 = vadd.f32 0.0, %v4867
  %v4869 = vpop.f32.mrf.mxu0
  %4870 = vmatprep.mubr.f32.mxu0 %v4793
  %4871 = vmatmul.mubr.f32.gmra.mxu0 %v4751
  %v4872 = vpop.f32.mrf.mxu0
  %v4873 = vadd.f32 0.0, %v4872
  %v4874 = vpop.f32.mrf.mxu0
  %4875 = vmatprep.mubr.f32.mxu0 %v4796
  %4876 = vmatmul.mubr.f32.gmra.mxu0 %v4761
  %v4877 = vpop.f32.mrf.mxu0
  %v4878 = vadd.f32 0.0, %v4877
  %v4879 = vpop.f32.mrf.mxu0
  %4880 = vmatprep.mubr.f32.mxu0 %v4799
  %4881 = vmatmul.mubr.f32.gmra.mxu0 %v4763
  %v4882 = vpop.f32.mrf.mxu0
  %v4883 = vadd.f32 0.0, %v4882
  %v4884 = vpop.f32.mrf.mxu0
  %4885 = vdwg.mxu0
  %v4886 = vld [vmem:[%s17 + $0x4] ss:$0 sm:$0xff]
  %v4887 = vmul.f32 %v4868, %v4886
  %v4888 = vmul.f32 %v4873, %v4886
  %v4889 = vmul.f32 %v4878, %v4886
  %v4890 = vmul.f32 %v4883, %v4886
  %v4891 = vld [vmem:[%s17 + $0x5] ss:$0 sm:$0xff]
  %v4892 = vadd.f32 %v4887, %v4891
  %v4893 = vadd.f32 %v4888, %v4891
  %v4894 = vadd.f32 %v4889, %v4891
  %v4895 = vadd.f32 %v4890, %v4891
  %v4896 = vld [vmem:[%s13 + $0x60] sm:$0xff]
  %v4897 = vld [vmem:[%s13 + $0x68] sm:$0xff]
  %v4898 = vld [vmem:[%s13 + $0x70] sm:$0xff]
  %v4899 = vld [vmem:[%s13 + $0x78] sm:$0xff]
  %v4901 = vsel %vm2180, %v4896, 0
  %v4904 = vsel %vm2180, %v4897, 0
  %v4907 = vsel %vm2180, %v4898, 0
  %v4910 = vsel %vm2180, %v4899, 0
  %4912 = vmatprep.subr.mxu0 0.0
  %4913 = vmatpush1.msra.mxu0 0.0
  %4914 = vmatprep.subr.mxu0 0.0
  %4915 = vmatpush1.msra.mxu0 0.0
  %4916 = vmatprep.subr.mxu0 0.0
  %4917 = vmatpush1.msra.mxu0 0.0
  %4918 = vmatprep.subr.mxu0 0.0
  %4919 = vmatpush1.msra.mxu0 0.0
  %4920 = vmatprep.subr.mxu0 0.0
  %4921 = vmatpush1.msra.mxu0 0.0
  %4922 = vmatprep.subr.mxu0 0.0
  %4923 = vmatpush1.msra.mxu0 0.0
  %4924 = vmatprep.subr.mxu0 0.0
  %4925 = vmatpush1.msra.mxu0 0.0
  %4926 = vmatprep.subr.mxu0 0.0
  %4927 = vmatpush1.msra.mxu0 0.0
  %4928 = vmatprep.subr.mxu0 0.0
  %4929 = vmatpush1.msra.mxu0 %v2958
  %4930 = vmatprep.subr.mxu0 0.0
  %4931 = vmatpush1.msra.mxu0 %v2957
  %4932 = vmatprep.subr.mxu0 0.0
  %4933 = vmatpush1.msra.mxu0 %v2956
  %4934 = vmatprep.subr.mxu0 0.0
  %4935 = vmatpush1.msra.mxu0 %v2955
  %4936 = vmatprep.subr.mxu0 0.0
  %4937 = vmatpush1.msra.mxu0 %v2954
  %4938 = vmatprep.subr.mxu0 0.0
  %4939 = vmatpush1.msra.mxu0 %v2953
  %4940 = vmatprep.subr.mxu0 0.0
  %4941 = vmatpush1.msra.mxu0 %v2952
  %4942 = vmatprep.subr.mxu0 0.0
  %4943 = vmatpush1.msra.mxu0 %v2951
  %4944 = vmatprep.subr.mxu0 0.0
  %4945 = vmatpush2.msra.mxu0 0.0
  %4946 = vmatprep.subr.mxu0 0.0
  %4947 = vmatpush2.msra.mxu0 0.0
  %4948 = vmatprep.subr.mxu0 0.0
  %4949 = vmatpush2.msra.mxu0 0.0
  %4950 = vmatprep.subr.mxu0 0.0
  %4951 = vmatpush2.msra.mxu0 0.0
  %4952 = vmatprep.subr.mxu0 0.0
  %4953 = vmatpush2.msra.mxu0 0.0
  %4954 = vmatprep.subr.mxu0 0.0
  %4955 = vmatpush2.msra.mxu0 0.0
  %4956 = vmatprep.subr.mxu0 0.0
  %4957 = vmatpush2.msra.mxu0 0.0
  %4958 = vmatprep.subr.mxu0 0.0
  %4959 = vmatpush2.msra.mxu0 0.0
  %4960 = vmatprep.subr.mxu0 0.0
  %4961 = vmatpush2.msra.mxu0 0.0
  %4962 = vmatprep.subr.mxu0 0.0
  %4963 = vmatpush2.msra.mxu0 0.0
  %4964 = vmatprep.subr.mxu0 0.0
  %4965 = vmatpush2.msra.mxu0 0.0
  %4966 = vmatprep.subr.mxu0 0.0
  %4967 = vmatpush2.msra.mxu0 0.0
  %4968 = vmatprep.subr.mxu0 0.0
  %4969 = vmatpush2.msra.mxu0 0.0
  %4970 = vmatprep.subr.mxu0 0.0
  %4971 = vmatpush2.msra.mxu0 0.0
  %4972 = vmatprep.subr.mxu0 0.0
  %4973 = vmatpush2.msra.mxu0 0.0
  %4974 = vmatprep.subr.mxu0 0.0
  %4975 = vmatpush2.msra.mxu0 0.0
  %4976 = vmatprep.mubr.f32.mxu0 0.0
  %4977 = vmatmul.mubr.f32.gmra.mxu0 %v4901
  %v4978 = vpop.f32.mrf.mxu0
  %v4979 = vadd.f32 0.0, %v4978
  %v4980 = vpop.f32.mrf.mxu0
  %4981 = vmatprep.mubr.f32.mxu0 0.0
  %4982 = vmatmul.mubr.f32.gmra.mxu0 %v4904
  %v4983 = vpop.f32.mrf.mxu0
  %v4984 = vadd.f32 0.0, %v4983
  %v4985 = vpop.f32.mrf.mxu0
  %4986 = vmatprep.mubr.f32.mxu0 0.0
  %4987 = vmatmul.mubr.f32.gmra.mxu0 %v4907
  %v4988 = vpop.f32.mrf.mxu0
  %v4989 = vadd.f32 0.0, %v4988
  %v4990 = vpop.f32.mrf.mxu0
  %4991 = vmatprep.mubr.f32.mxu0 0.0
  %4992 = vmatmul.mubr.f32.gmra.mxu0 %v4910
  %v4993 = vpop.f32.mrf.mxu0
  %v4994 = vadd.f32 0.0, %v4993
  %v4995 = vpop.f32.mrf.mxu0
  %4996 = vdwg.mxu0
  %v4997 = vld [vmem:[%s19] sm:$0xff]
  %v4998 = vld [vmem:[%s19 + $0x8] sm:$0xff]
  %v4999 = vld [vmem:[%s19 + $0x10] sm:$0xff]
  %v5000 = vld [vmem:[%s19 + $0x18] sm:$0xff]
  %v5001 = vld [vmem:[%s19 + $0x20] sm:$0xff]
  %v5002 = vld [vmem:[%s19 + $0x28] sm:$0xff]
  %v5003 = vld [vmem:[%s19 + $0x30] sm:$0xff]
  %v5004 = vld [vmem:[%s19 + $0x38] sm:$0xff]
  %v5005 = vld [vmem:[%s19 + $0x40] sm:$0xff]
  %v5006 = vld [vmem:[%s19 + $0x48] sm:$0xff]
  %v5007 = vld [vmem:[%s19 + $0x50] sm:$0xff]
  %v5008 = vld [vmem:[%s19 + $0x58] sm:$0xff]
  %v5009 = vld [vmem:[%s19 + $0x60] sm:$0xff]
  %v5010 = vld [vmem:[%s19 + $0x68] sm:$0xff]
  %v5011 = vld [vmem:[%s19 + $0x70] sm:$0xff]
  %v5012 = vld [vmem:[%s19 + $0x78] sm:$0xff]
  %v5013 = vld [vmem:[%s17 + $0x6] ss:$0 sm:$0xff]
  %5014 = vmatprep.subr.mxu0 0.0
  %5015 = vmatpush1.msra.mxu0 %v5012
  %5016 = vmatprep.subr.mxu0 0.0
  %5017 = vmatpush1.msra.mxu0 %v5011
  %5018 = vmatprep.subr.mxu0 0.0
  %5019 = vmatpush1.msra.mxu0 %v5010
  %5020 = vmatprep.subr.mxu0 0.0
  %5021 = vmatpush1.msra.mxu0 %v5009
  %5022 = vmatprep.subr.mxu0 0.0
  %5023 = vmatpush1.msra.mxu0 %v5008
  %5024 = vmatprep.subr.mxu0 0.0
  %5025 = vmatpush1.msra.mxu0 %v5007
  %5026 = vmatprep.subr.mxu0 0.0
  %5027 = vmatpush1.msra.mxu0 %v5006
  %5028 = vmatprep.subr.mxu0 0.0
  %5029 = vmatpush1.msra.mxu0 %v5005
  %5030 = vmatprep.subr.mxu0 0.0
  %5031 = vmatpush1.msra.mxu0 %v5004
  %5032 = vmatprep.subr.mxu0 0.0
  %5033 = vmatpush1.msra.mxu0 %v5003
  %5034 = vmatprep.subr.mxu0 0.0
  %5035 = vmatpush1.msra.mxu0 %v5002
  %5036 = vmatprep.subr.mxu0 0.0
  %5037 = vmatpush1.msra.mxu0 %v5001
  %5038 = vmatprep.subr.mxu0 0.0
  %5039 = vmatpush1.msra.mxu0 %v5000
  %5040 = vmatprep.subr.mxu0 0.0
  %5041 = vmatpush1.msra.mxu0 %v4999
  %5042 = vmatprep.subr.mxu0 0.0
  %5043 = vmatpush1.msra.mxu0 %v4998
  %5044 = vmatprep.subr.mxu0 0.0
  %5045 = vmatpush1.msra.mxu0 %v4997
  %5046 = vmatprep.subr.mxu0 0.0
  %5047 = vmatpush2.msra.mxu0 0.0
  %5048 = vmatprep.subr.mxu0 0.0
  %5049 = vmatpush2.msra.mxu0 0.0
  %5050 = vmatprep.subr.mxu0 0.0
  %5051 = vmatpush2.msra.mxu0 0.0
  %5052 = vmatprep.subr.mxu0 0.0
  %5053 = vmatpush2.msra.mxu0 0.0
  %5054 = vmatprep.subr.mxu0 0.0
  %5055 = vmatpush2.msra.mxu0 0.0
  %5056 = vmatprep.subr.mxu0 0.0
  %5057 = vmatpush2.msra.mxu0 0.0
  %5058 = vmatprep.subr.mxu0 0.0
  %5059 = vmatpush2.msra.mxu0 0.0
  %5060 = vmatprep.subr.mxu0 0.0
  %5061 = vmatpush2.msra.mxu0 0.0
  %5062 = vmatprep.subr.mxu0 0.0
  %5063 = vmatpush2.msra.mxu0 0.0
  %5064 = vmatprep.subr.mxu0 0.0
  %5065 = vmatpush2.msra.mxu0 0.0
  %5066 = vmatprep.subr.mxu0 0.0
  %5067 = vmatpush2.msra.mxu0 0.0
  %5068 = vmatprep.subr.mxu0 0.0
  %5069 = vmatpush2.msra.mxu0 0.0
  %5070 = vmatprep.subr.mxu0 0.0
  %5071 = vmatpush2.msra.mxu0 0.0
  %5072 = vmatprep.subr.mxu0 0.0
  %5073 = vmatpush2.msra.mxu0 0.0
  %5074 = vmatprep.subr.mxu0 0.0
  %5075 = vmatpush2.msra.mxu0 0.0
  %5076 = vmatprep.subr.mxu0 0.0
  %5077 = vmatpush2.msra.mxu0 0.0
  %5078 = vmatprep.mubr.f32.mxu0 0.0
  %5079 = vmatmul.mubr.f32.gmra.mxu0 %v4979
  %v5080 = vpop.f32.mrf.mxu0
  %v5081 = vadd.f32 %v5013, %v5080
  %v5082 = vpop.f32.mrf.mxu0
  %5083 = vmatprep.mubr.f32.mxu0 0.0
  %5084 = vmatmul.mubr.f32.gmra.mxu0 %v4984
  %v5085 = vpop.f32.mrf.mxu0
  %v5086 = vadd.f32 %v5013, %v5085
  %v5087 = vpop.f32.mrf.mxu0
  %5088 = vmatprep.mubr.f32.mxu0 0.0
  %5089 = vmatmul.mubr.f32.gmra.mxu0 %v4989
  %v5090 = vpop.f32.mrf.mxu0
  %v5091 = vadd.f32 %v5013, %v5090
  %v5092 = vpop.f32.mrf.mxu0
  %5093 = vmatprep.mubr.f32.mxu0 0.0
  %5094 = vmatmul.mubr.f32.gmra.mxu0 %v4994
  %v5095 = vpop.f32.mrf.mxu0
  %v5096 = vadd.f32 %v5013, %v5095
  %v5097 = vpop.f32.mrf.mxu0
  %5098 = vdwg.mxu0
  %v5099 = vadd.f32 %v4892, %v5081
  %v5100 = vadd.f32 %v4893, %v5086
  %v5101 = vadd.f32 %v4894, %v5091
  %v5102 = vadd.f32 %v4895, %v5096
  %5103 = vst [vmem:[%s20] sm:$0xff] %v5099
  %5104 = vst [vmem:[%s20 + $0x8] sm:$0xff] %v5100
  %5105 = vst [vmem:[%s20 + $0x10] sm:$0xff] %v5101
  %5106 = vst [vmem:[%s20 + $0x18] sm:$0xff] %v5102
  // Predicated region
  $region82: #{depthwise_core_forward.1} parent=0 // pred_check
    _
  $region83: #{depthwise_core_forward.1} parent=0 // pred_check_branch
    %5108 = sbr.rel (0) target = $region85
  $region84: #{depthwise_core_forward.1} parent=0 // pred_region
    _
  $region85: #{depthwise_core_forward.1} parent=0 // pred_fallthru
    _
  // Predicated region
  $region86: #{depthwise_core_forward.1} parent=0 // pred_check
    _
  $region87: #{depthwise_core_forward.1} parent=0 // pred_check_branch
    %5110 = sbr.rel (0) target = $region89
  $region88: #{depthwise_core_forward.1} parent=0 // pred_region
    _
  $region89: #{depthwise_core_forward.1} parent=0 // pred_fallthru
    _

</llo_original>
